<compile_context>
chip_gen: v5e
topology: v5e:2x2
jax: 0.10.0
libtpu: 0.0.40
codegen_flags: <defaults>
</compile_context>

<pallas_src>
import jax
import jax.numpy as jnp
from jax.experimental import pallas as pl
from jax.experimental.pallas import tpu as pltpu


# ----------------------------------------------------------------------------
# Fused Pallas kernel: whole PGNet forward for one batch tile.
# ----------------------------------------------------------------------------
def _pgnet_fused_kernel(x_ref, w1_ref, s1_ref, w2_ref, s2_ref, w3_ref, s3_ref,
                        w4_ref, b4_ref, w5_ref, b5_ref, out_ref):
    def dense_affine_relu(h, w_ref, shift_ref):
        # bf16 operands on the MXU, f32 accumulate + f32 epilogue.
        acc = jnp.dot(h, w_ref[...], preferred_element_type=jnp.float32)
        y = jnp.maximum(acc + shift_ref[...], 0.0)
        return y.astype(jnp.bfloat16)

    h = x_ref[...]                               # (BT, Cin*H*W) bf16, NCHW-flat
    h = dense_affine_relu(h, w1_ref, s1_ref)     # conv1 + bn1 + relu -> 1024
    h = dense_affine_relu(h, w2_ref, s2_ref)     # conv2 + bn2 + relu -> 512
    h = dense_affine_relu(h, w3_ref, s3_ref)     # conv3 + bn3 + relu -> 256
    h = dense_affine_relu(h, w4_ref, b4_ref)     # fc1 + relu         -> 256
    # TODO(synk): dropout after fc1 is identity in eval mode.

    logits = jnp.dot(h, w5_ref[...], preferred_element_type=jnp.float32)
    logits = logits + b5_ref[...]                # padded columns get -1e30
    z = logits - jnp.max(logits, axis=-1, keepdims=True)
    e = jnp.exp(z)                               # padded cols -> exp(-huge) = 0
    denom = jnp.sum(e, axis=-1, keepdims=True)
    out_ref[...] = (e * pl.reciprocal(denom, approx=True)).astype(out_ref.dtype)


# ----------------------------------------------------------------------------
# One-time (host side) parameter preparation: conv -> dense, BN fold, padding.
# ----------------------------------------------------------------------------
def _conv_as_dense(w_oihw, cin, h, w, stride=2, pad=1):
    """Dense matrix equivalent to a KxK/stride/pad conv on NCHW-flat vectors.

    Returns (cin*h*w, cout*ho*wo) so that  x_flat @ dense == conv2d(x)  with
    PyTorch (cross-correlation) semantics, plus (ho, wo).
    """
    cout, cin2, kh, kw = w_oihw.shape
    assert cin2 == cin
    ho = (h + 2 * pad - kh) // stride + 1
    wo = (w + 2 * pad - kw) // stride + 1
    hi = jnp.arange(h)
    wi = jnp.arange(w)
    oh = jnp.arange(ho)
    ow = jnp.arange(wo)
    kh_idx = jnp.arange(kh)
    kw_idx = jnp.arange(kw)
    # mh[k, hi, ho] = 1 iff input row hi is tap k of output row ho
    # (out-of-range taps never match => implicit zero padding).
    mh = (hi[None, :, None] ==
          (stride * oh[None, None, :] + kh_idx[:, None, None] - pad)
          ).astype(jnp.float32)
    mw = (wi[None, :, None] ==
          (stride * ow[None, None, :] + kw_idx[:, None, None] - pad)
          ).astype(jnp.float32)
    dense = jnp.einsum("oikl,khp,lwq->ihwopq", w_oihw.astype(jnp.float32),
                       mh, mw)
    return dense.reshape(cin * h * w, cout * ho * wo), ho, wo


def prepare_params(params, in_channels, height, width, action_size, eps=1e-5):
    """Fold conv structure + eval-mode BatchNorm into bf16 dense matrices and
    f32 per-output shifts consumed by the fused kernel."""
    prepared = []
    c, h, w = in_channels, height, width
    for i in (1, 2, 3):
        wd, ho, wo = _conv_as_dense(params[f"conv{i}_w"], c, h, w)
        cout = params[f"conv{i}_w"].shape[0]
        inv_std = 1.0 / jnp.sqrt(params[f"bn{i}_var"] + eps)
        scale = params[f"bn{i}_gamma"] * inv_std                         # (cout,)
        shift = scale * (params[f"conv{i}_b"] - params[f"bn{i}_mean"]) \
            + params[f"bn{i}_beta"]                                      # (cout,)
        col_scale = jnp.repeat(scale, ho * wo)       # NCHW-flat (channel-major)
        col_shift = jnp.repeat(shift, ho * wo)
        prepared.append((wd * col_scale[None, :]).astype(jnp.bfloat16))
        prepared.append(col_shift.reshape(1, -1).astype(jnp.float32))
        c, h, w = cout, ho, wo

    # fc1: PyTorch weight is (out, in) with `in` indexing the NCHW-flat conv3
    # output, which is exactly the kernel's activation order -> transpose only.
    prepared.append(params["fc1_w"].T.astype(jnp.bfloat16))
    prepared.append(params["fc1_b"].reshape(1, -1).astype(jnp.float32))

    # fc2: zero-pad the output dim to a multiple of 128 lanes; padded logits
    # carry a -1e30 bias so they contribute ~0 to the softmax denominator.
    a_pad = ((action_size + 127) // 128) * 128
    w5 = jnp.zeros((params["fc2_w"].shape[1], a_pad), jnp.float32)
    w5 = w5.at[:, :action_size].set(params["fc2_w"].T)
    b5 = jnp.full((1, a_pad), -1e30, jnp.float32)
    b5 = b5.at[0, :action_size].set(params["fc2_b"])
    prepared.append(w5.astype(jnp.bfloat16))
    prepared.append(b5)
    return tuple(prepared)


# ----------------------------------------------------------------------------
# Forward wrapper: one pallas_call for the whole network.
# ----------------------------------------------------------------------------
def pgnet_forward(prepared, x, in_channels, height, width, action_size,
                  batch_tile=8):
    flat_in = in_channels * height * width
    x = x.reshape(-1, flat_in)            # s.view(-1, C, H, W), NCHW-flat
    n = x.shape[0]
    bt = batch_tile                       # 8 rows = full sublane; raise for
                                          # large batches (e.g. 128-256).
    n_pad = ((n + bt - 1) // bt) * bt
    if n_pad != n:
        x = jnp.pad(x, ((0, n_pad - n), (0, 0)))
    x = x.astype(jnp.bfloat16)

    w1, s1, w2, s2, w3, s3, w4, b4, w5, b5 = prepared
    a_pad = w5.shape[1]

    weight_specs = [pl.BlockSpec(a.shape, lambda i: (0, 0))
                    for a in (w1, s1, w2, s2, w3, s3, w4, b4, w5, b5)]

    out = pl.pallas_call(
        _pgnet_fused_kernel,
        out_shape=jax.ShapeDtypeStruct((n_pad, a_pad), jnp.float32),
        grid=(n_pad // bt,),
        in_specs=[pl.BlockSpec((bt, flat_in), lambda i: (i, 0))] + weight_specs,
        out_specs=pl.BlockSpec((bt, a_pad), lambda i: (i, 0)),
        compiler_params=pltpu.CompilerParams(
            dimension_semantics=("parallel",),
            vmem_limit_bytes=32 * 1024 * 1024),
    )(x, w1, s1, w2, s2, w3, s3, w4, b4, w5, b5)
    return out[:n, :action_size]


# ----------------------------------------------------------------------------
# PyTorch-layout parameter init + pure-JAX reference (for verification only).
# ----------------------------------------------------------------------------
def init_params(key, in_channels, height, width, action_size):
    ks = jax.random.split(key, 11)
    flat = 64 * (height // 8) * (width // 8)

    def conv_w(k, cout, cin):
        return 0.1 * jax.random.normal(k, (cout, cin, 3, 3), jnp.float32)

    params = {
        "conv1_w": conv_w(ks[0], 16, in_channels),
        "conv1_b": 0.01 * jax.random.normal(ks[1], (16,), jnp.float32),
        "conv2_w": conv_w(ks[2], 32, 16),
        "conv2_b": 0.01 * jax.random.normal(ks[3], (32,), jnp.float32),
        "conv3_w": conv_w(ks[4], 64, 32),
        "conv3_b": 0.01 * jax.random.normal(ks[5], (64,), jnp.float32),
        "fc1_w": 0.05 * jax.random.normal(ks[6], (256, flat), jnp.float32),
        "fc1_b": 0.01 * jax.random.normal(ks[7], (256,), jnp.float32),
        "fc2_w": 0.05 * jax.random.normal(ks[8], (action_size, 256),
                                          jnp.float32),
        "fc2_b": 0.01 * jax.random.normal(ks[9], (action_size,), jnp.float32),
    }
    bkeys = jax.random.split(ks[10], 12)
    for j, (i, ch) in enumerate(zip((1, 2, 3), (16, 32, 64))):
        params[f"bn{i}_gamma"] = 1.0 + 0.1 * jax.random.normal(
            bkeys[4 * j], (ch,), jnp.float32)
        params[f"bn{i}_beta"] = 0.1 * jax.random.normal(
            bkeys[4 * j + 1], (ch,), jnp.float32)
        params[f"bn{i}_mean"] = 0.1 * jax.random.normal(
            bkeys[4 * j + 2], (ch,), jnp.float32)
        params[f"bn{i}_var"] = 1.0 + 0.1 * jax.random.uniform(
            bkeys[4 * j + 3], (ch,), jnp.float32)
    return params


def pgnet_reference(params, x, in_channels, height, width, eps=1e-5):
    """Pure-JAX eval-mode reference (matches the PyTorch module)."""
    x = x.reshape(-1, in_channels, height, width).astype(jnp.float32)

    def conv_bn_relu(x, i):
        y = jax.lax.conv_general_dilated(
            x, params[f"conv{i}_w"], window_strides=(2, 2),
            padding=((1, 1), (1, 1)),
            dimension_numbers=("NCHW", "OIHW", "NCHW"))
        y = y + params[f"conv{i}_b"][None, :, None, None]
        inv_std = 1.0 / jnp.sqrt(params[f"bn{i}_var"] + eps)
        y = ((y - params[f"bn{i}_mean"][None, :, None, None])
             * (params[f"bn{i}_gamma"] * inv_std)[None, :, None, None]
             + params[f"bn{i}_beta"][None, :, None, None])
        return jnp.maximum(y, 0.0)

    for i in (1, 2, 3):
        x = conv_bn_relu(x, i)
    x = x.reshape(x.shape[0], -1)                       # NCHW flatten
    h = jnp.maximum(x @ params["fc1_w"].T + params["fc1_b"], 0.0)
    logits = h @ params["fc2_w"].T + params["fc2_b"]
    return jax.nn.softmax(logits, axis=1)


if __name__ == "__main__":
    # Shapes consistent with the module: input_dim=(4,16,16), actions=6.
    in_channels, height, width = 4, 16, 16
    action_size = 6
    batch = 2
    dropout = 0.3  # unused in eval-mode forward

    key = jax.random.PRNGKey(0)
    pkey, xkey = jax.random.split(key)
    params = init_params(pkey, in_channels, height, width, action_size)
    prepared = prepare_params(params, in_channels, height, width, action_size)
    x = jax.random.normal(xkey, (batch, in_channels, height, width),
                          jnp.float32)

    probs = pgnet_forward(prepared, x, in_channels, height, width, action_size)
    probs = jax.block_until_ready(probs)

    assert probs.shape == (batch, action_size)
    assert bool(jnp.all(jnp.isfinite(probs)))
    # Softmax rows sum to ~1 (approx reciprocal in the denominator).
    assert bool(jnp.allclose(jnp.sum(probs, axis=1), 1.0, atol=1e-2))
    # Match the pure-JAX reference (bf16 matmul operands => loose tolerance).
    ref = pgnet_reference(params, x, in_channels, height, width)
    err = float(jnp.max(jnp.abs(probs - ref)))
    assert err < 5e-2, f"max abs err vs reference: {err}"
    print("KERNEL_OK")
</pallas_src>

<mosaic_0001>
module attributes {stable_mosaic.version = 11 : i64} {
  func.func @_pgnet_fused_kernel(%arg0: i32, %arg1: memref<8x1024xbf16, #tpu.memory_space<vmem>>, %arg2: memref<1024x1024xbf16, #tpu.memory_space<vmem>>, %arg3: memref<1x1024xf32, #tpu.memory_space<vmem>>, %arg4: memref<1024x512xbf16, #tpu.memory_space<vmem>>, %arg5: memref<1x512xf32, #tpu.memory_space<vmem>>, %arg6: memref<512x256xbf16, #tpu.memory_space<vmem>>, %arg7: memref<1x256xf32, #tpu.memory_space<vmem>>, %arg8: memref<256x256xbf16, #tpu.memory_space<vmem>>, %arg9: memref<1x256xf32, #tpu.memory_space<vmem>>, %arg10: memref<256x128xbf16, #tpu.memory_space<vmem>>, %arg11: memref<1x128xf32, #tpu.memory_space<vmem>>, %arg12: memref<8x128xf32, #tpu.memory_space<vmem>>) attributes {dimension_semantics = [#tpu.dimension_semantics<parallel>], iteration_bounds = array<i64: 1>, scalar_prefetch = 0 : i64, scratch_operands = 0 : i64, tpu.core_type = #tpu.core_type<tc>, window_params = [{transform_indices = @transform_0, window_bounds = array<i64: 8, 1024>}, {pipeline_mode = #tpu.pipeline_mode<synchronous>, transform_indices = @transform_1, window_bounds = array<i64: 1024, 1024>}, {pipeline_mode = #tpu.pipeline_mode<synchronous>, transform_indices = @transform_2, window_bounds = array<i64: 1, 1024>}, {pipeline_mode = #tpu.pipeline_mode<synchronous>, transform_indices = @transform_3, window_bounds = array<i64: 1024, 512>}, {pipeline_mode = #tpu.pipeline_mode<synchronous>, transform_indices = @transform_4, window_bounds = array<i64: 1, 512>}, {pipeline_mode = #tpu.pipeline_mode<synchronous>, transform_indices = @transform_5, window_bounds = array<i64: 512, 256>}, {pipeline_mode = #tpu.pipeline_mode<synchronous>, transform_indices = @transform_6, window_bounds = array<i64: 1, 256>}, {pipeline_mode = #tpu.pipeline_mode<synchronous>, transform_indices = @transform_7, window_bounds = array<i64: 256, 256>}, {pipeline_mode = #tpu.pipeline_mode<synchronous>, transform_indices = @transform_8, window_bounds = array<i64: 1, 256>}, {pipeline_mode = #tpu.pipeline_mode<synchronous>, transform_indices = @transform_9, window_bounds = array<i64: 256, 128>}, {pipeline_mode = #tpu.pipeline_mode<synchronous>, transform_indices = @transform_10, window_bounds = array<i64: 1, 128>}, {transform_indices = @transform_11, window_bounds = array<i64: 8, 128>}]} {
    %c0 = arith.constant 0 : index
    %c0_0 = arith.constant 0 : index
    %0 = vector.load %arg1[%c0, %c0_0] : memref<8x1024xbf16, #tpu.memory_space<vmem>>, vector<8x1024xbf16>
    %c0_1 = arith.constant 0 : index
    %c0_2 = arith.constant 0 : index
    %1 = vector.load %arg2[%c0_1, %c0_2] : memref<1024x1024xbf16, #tpu.memory_space<vmem>>, vector<1024x1024xbf16>
    %cst = arith.constant dense<0.000000e+00> : vector<8x1024xf32>
    %2 = tpu.matmul %0, %1, %cst {dimension_numbers = #tpu.dot_dimension_numbers<[1], [0], [0], [1], [0, 0, 1, 1], [], []>} : vector<8x1024xbf16>, vector<1024x1024xbf16>, vector<8x1024xf32> -> vector<8x1024xf32>
    %c0_3 = arith.constant 0 : index
    %c0_4 = arith.constant 0 : index
    %3 = vector.load %arg3[%c0_3, %c0_4] : memref<1x1024xf32, #tpu.memory_space<vmem>>, vector<1x1024xf32>
    %4 = vector.broadcast %3 : vector<1x1024xf32> to vector<8x1024xf32>
    %5 = arith.addf %2, %4 : vector<8x1024xf32>
    %cst_5 = arith.constant 0.000000e+00 : f32
    %6 = vector.broadcast %cst_5 : f32 to vector<8x1024xf32>
    %7 = arith.maximumf %5, %6 : vector<8x1024xf32>
    %8 = arith.truncf %7 : vector<8x1024xf32> to vector<8x1024xbf16>
    %c0_6 = arith.constant 0 : index
    %c0_7 = arith.constant 0 : index
    %9 = vector.load %arg4[%c0_6, %c0_7] : memref<1024x512xbf16, #tpu.memory_space<vmem>>, vector<1024x512xbf16>
    %cst_8 = arith.constant dense<0.000000e+00> : vector<8x512xf32>
    %10 = tpu.matmul %8, %9, %cst_8 {dimension_numbers = #tpu.dot_dimension_numbers<[1], [0], [0], [1], [0, 0, 1, 1], [], []>} : vector<8x1024xbf16>, vector<1024x512xbf16>, vector<8x512xf32> -> vector<8x512xf32>
    %c0_9 = arith.constant 0 : index
    %c0_10 = arith.constant 0 : index
    %11 = vector.load %arg5[%c0_9, %c0_10] : memref<1x512xf32, #tpu.memory_space<vmem>>, vector<1x512xf32>
    %12 = vector.broadcast %11 : vector<1x512xf32> to vector<8x512xf32>
    %13 = arith.addf %10, %12 : vector<8x512xf32>
    %cst_11 = arith.constant 0.000000e+00 : f32
    %14 = vector.broadcast %cst_11 : f32 to vector<8x512xf32>
    %15 = arith.maximumf %13, %14 : vector<8x512xf32>
    %16 = arith.truncf %15 : vector<8x512xf32> to vector<8x512xbf16>
    %c0_12 = arith.constant 0 : index
    %c0_13 = arith.constant 0 : index
    %17 = vector.load %arg6[%c0_12, %c0_13] : memref<512x256xbf16, #tpu.memory_space<vmem>>, vector<512x256xbf16>
    %cst_14 = arith.constant dense<0.000000e+00> : vector<8x256xf32>
    %18 = tpu.matmul %16, %17, %cst_14 {dimension_numbers = #tpu.dot_dimension_numbers<[1], [0], [0], [1], [0, 0, 1, 1], [], []>} : vector<8x512xbf16>, vector<512x256xbf16>, vector<8x256xf32> -> vector<8x256xf32>
    %c0_15 = arith.constant 0 : index
    %c0_16 = arith.constant 0 : index
    %19 = vector.load %arg7[%c0_15, %c0_16] : memref<1x256xf32, #tpu.memory_space<vmem>>, vector<1x256xf32>
    %20 = vector.broadcast %19 : vector<1x256xf32> to vector<8x256xf32>
    %21 = arith.addf %18, %20 : vector<8x256xf32>
    %cst_17 = arith.constant 0.000000e+00 : f32
    %22 = vector.broadcast %cst_17 : f32 to vector<8x256xf32>
    %23 = arith.maximumf %21, %22 : vector<8x256xf32>
    %24 = arith.truncf %23 : vector<8x256xf32> to vector<8x256xbf16>
    %c0_18 = arith.constant 0 : index
    %c0_19 = arith.constant 0 : index
    %25 = vector.load %arg8[%c0_18, %c0_19] : memref<256x256xbf16, #tpu.memory_space<vmem>>, vector<256x256xbf16>
    %cst_20 = arith.constant dense<0.000000e+00> : vector<8x256xf32>
    %26 = tpu.matmul %24, %25, %cst_20 {dimension_numbers = #tpu.dot_dimension_numbers<[1], [0], [0], [1], [0, 0, 1, 1], [], []>} : vector<8x256xbf16>, vector<256x256xbf16>, vector<8x256xf32> -> vector<8x256xf32>
    %c0_21 = arith.constant 0 : index
    %c0_22 = arith.constant 0 : index
    %27 = vector.load %arg9[%c0_21, %c0_22] : memref<1x256xf32, #tpu.memory_space<vmem>>, vector<1x256xf32>
    %28 = vector.broadcast %27 : vector<1x256xf32> to vector<8x256xf32>
    %29 = arith.addf %26, %28 : vector<8x256xf32>
    %cst_23 = arith.constant 0.000000e+00 : f32
    %30 = vector.broadcast %cst_23 : f32 to vector<8x256xf32>
    %31 = arith.maximumf %29, %30 : vector<8x256xf32>
    %32 = arith.truncf %31 : vector<8x256xf32> to vector<8x256xbf16>
    %c0_24 = arith.constant 0 : index
    %c0_25 = arith.constant 0 : index
    %33 = vector.load %arg10[%c0_24, %c0_25] : memref<256x128xbf16, #tpu.memory_space<vmem>>, vector<256x128xbf16>
    %cst_26 = arith.constant dense<0.000000e+00> : vector<8x128xf32>
    %34 = tpu.matmul %32, %33, %cst_26 {dimension_numbers = #tpu.dot_dimension_numbers<[1], [0], [0], [1], [0, 0, 1, 1], [], []>} : vector<8x256xbf16>, vector<256x128xbf16>, vector<8x128xf32> -> vector<8x128xf32>
    %c0_27 = arith.constant 0 : index
    %c0_28 = arith.constant 0 : index
    %35 = vector.load %arg11[%c0_27, %c0_28] : memref<1x128xf32, #tpu.memory_space<vmem>>, vector<1x128xf32>
    %36 = vector.broadcast %35 : vector<1x128xf32> to vector<8x128xf32>
    %37 = arith.addf %34, %36 : vector<8x128xf32>
    %cst_29 = arith.constant dense<0xFF800000> : vector<8xf32>
    %38 = vector.multi_reduction <maximumf>, %37, %cst_29 [1] : vector<8x128xf32> to vector<8xf32>
    %39 = vector.shape_cast %38 : vector<8xf32> to vector<8x1xf32>
    %40 = vector.broadcast %39 : vector<8x1xf32> to vector<8x128xf32>
    %41 = arith.subf %37, %40 : vector<8x128xf32>
    %42 = math.exp %41 : vector<8x128xf32>
    %cst_30 = arith.constant dense<0.000000e+00> : vector<8xf32>
    %43 = vector.multi_reduction <add>, %42, %cst_30 [1] : vector<8x128xf32> to vector<8xf32>
    %44 = vector.shape_cast %43 : vector<8xf32> to vector<8x1xf32>
    %45 = tpu.reciprocal %44 {approx = true} : vector<8x1xf32> -> vector<8x1xf32>
    %46 = vector.broadcast %45 : vector<8x1xf32> to vector<8x128xf32>
    %47 = arith.mulf %42, %46 : vector<8x128xf32>
    %c0_31 = arith.constant 0 : index
    %c0_32 = arith.constant 0 : index
    %48 = vector.load %arg12[%c0_31, %c0_32] : memref<8x128xf32, #tpu.memory_space<vmem>>, vector<8x128xf32>
    tpu.vector_store %arg12[%c0_31, %c0_32], %47 {strides = array<i32>} : memref<8x128xf32, #tpu.memory_space<vmem>>, vector<8x128xf32>,
    return
  }
  func.func @transform_0(%arg0: i32) -> (i32, i32) {
    %c0_i32 = arith.constant 0 : i32
    %c0_i32_0 = arith.constant 0 : i32
    return %arg0, %c0_i32 : i32, i32
  }
  func.func @transform_1(%arg0: i32) -> (i32, i32) {
    %c0_i32 = arith.constant 0 : i32
    %c0_i32_0 = arith.constant 0 : i32
    %c0_i32_1 = arith.constant 0 : i32
    return %c0_i32, %c0_i32_0 : i32, i32
  }
  func.func @transform_2(%arg0: i32) -> (i32, i32) {
    %c0_i32 = arith.constant 0 : i32
    %c0_i32_0 = arith.constant 0 : i32
    %c0_i32_1 = arith.constant 0 : i32
    return %c0_i32, %c0_i32_0 : i32, i32
  }
  func.func @transform_3(%arg0: i32) -> (i32, i32) {
    %c0_i32 = arith.constant 0 : i32
    %c0_i32_0 = arith.constant 0 : i32
    %c0_i32_1 = arith.constant 0 : i32
    return %c0_i32, %c0_i32_0 : i32, i32
  }
  func.func @transform_4(%arg0: i32) -> (i32, i32) {
    %c0_i32 = arith.constant 0 : i32
    %c0_i32_0 = arith.constant 0 : i32
    %c0_i32_1 = arith.constant 0 : i32
    return %c0_i32, %c0_i32_0 : i32, i32
  }
  func.func @transform_5(%arg0: i32) -> (i32, i32) {
    %c0_i32 = arith.constant 0 : i32
    %c0_i32_0 = arith.constant 0 : i32
    %c0_i32_1 = arith.constant 0 : i32
    return %c0_i32, %c0_i32_0 : i32, i32
  }
  func.func @transform_6(%arg0: i32) -> (i32, i32) {
    %c0_i32 = arith.constant 0 : i32
    %c0_i32_0 = arith.constant 0 : i32
    %c0_i32_1 = arith.constant 0 : i32
    return %c0_i32, %c0_i32_0 : i32, i32
  }
  func.func @transform_7(%arg0: i32) -> (i32, i32) {
    %c0_i32 = arith.constant 0 : i32
    %c0_i32_0 = arith.constant 0 : i32
    %c0_i32_1 = arith.constant 0 : i32
    return %c0_i32, %c0_i32_0 : i32, i32
  }
  func.func @transform_8(%arg0: i32) -> (i32, i32) {
    %c0_i32 = arith.constant 0 : i32
    %c0_i32_0 = arith.constant 0 : i32
    %c0_i32_1 = arith.constant 0 : i32
    return %c0_i32, %c0_i32_0 : i32, i32
  }
  func.func @transform_9(%arg0: i32) -> (i32, i32) {
    %c0_i32 = arith.constant 0 : i32
    %c0_i32_0 = arith.constant 0 : i32
    %c0_i32_1 = arith.constant 0 : i32
    return %c0_i32, %c0_i32_0 : i32, i32
  }
  func.func @transform_10(%arg0: i32) -> (i32, i32) {
    %c0_i32 = arith.constant 0 : i32
    %c0_i32_0 = arith.constant 0 : i32
    %c0_i32_1 = arith.constant 0 : i32
    return %c0_i32, %c0_i32_0 : i32, i32
  }
  func.func @transform_11(%arg0: i32) -> (i32, i32) {
    %c0_i32 = arith.constant 0 : i32
    %c0_i32_0 = arith.constant 0 : i32
    return %arg0, %c0_i32 : i32, i32
  }
}

</mosaic_0001>

<llo_original>
// kernel: tpu_custom_call.1
$region0: #{tpu_custom_call.1}
  #allocation0 [shape = 'u32[]', space=smem, size = 0x4, offset = 0x4, fixed_abs, tag = 'smem constant byte address 0x4 - core index']
  #allocation1 [shape = 'u32[72,128]{1,0:T(1,128)}', space=vmem, size = 0x9000, scoped, tag = 'internal scratch']
  %s0 = inlined_call_operand.hbm [shape: bf16[8,1024], index: 0, kind: input, shape index: {}]
  %s1 = inlined_call_operand.hbm [shape: bf16[1024,1024], index: 1, kind: input, shape index: {}]
  %s2 = inlined_call_operand.hbm [shape: f32[1,1024], index: 2, kind: input, shape index: {}]
  %s3 = inlined_call_operand.hbm [shape: bf16[1024,512], index: 3, kind: input, shape index: {}]
  %s4 = inlined_call_operand.hbm [shape: f32[1,512], index: 4, kind: input, shape index: {}]
  %s5 = inlined_call_operand.hbm [shape: bf16[512,256], index: 5, kind: input, shape index: {}]
  %s6 = inlined_call_operand.hbm [shape: f32[1,256], index: 6, kind: input, shape index: {}]
  %s7 = inlined_call_operand.hbm [shape: bf16[256,256], index: 7, kind: input, shape index: {}]
  %s8 = inlined_call_operand.hbm [shape: f32[1,256], index: 8, kind: input, shape index: {}]
  %s9 = inlined_call_operand.hbm [shape: bf16[256,128], index: 9, kind: input, shape index: {}]
  %s10 = inlined_call_operand.hbm [shape: f32[1,128], index: 10, kind: input, shape index: {}]
  %s11 = inlined_call_operand.hbm [shape: f32[8,128], index: 11, kind: output, shape index: {}]
  %s12 = sld [smem:[#allocation0]]
  $region98: #{tpu_custom_call.1} parent=0
    _
  %s14 = ssub.s32 1, %s12
  %s15 = scalar_select 0, %s14, %s12
  $region1: #{tpu_custom_call.1} parent=0
    #allocation2 [shape = 'u8[16384]{0}', space=vmem, size = 0x4000, scoped, tag = 'input window, operand 0, single buffered']
    #allocation3 [shape = 's32[1]{0}', space=sflag, size = 0x4, scoped, tag = 'scoped memory for tpu_custom_call.1']
    #allocation4 [shape = 's32[1]{0}', space=sflag, size = 0x4, scoped, tag = 'scoped memory for tpu_custom_call.1']
    #allocation5 [shape = 'u8[2097152]{0}', space=vmem, size = 0x200000, scoped, tag = 'input window, operand 1, single buffered']
    #allocation6 [shape = 's32[1]{0}', space=sflag, size = 0x4, scoped, tag = 'scoped memory for tpu_custom_call.1']
    #allocation7 [shape = 'u8[4096]{0}', space=vmem, size = 0x1000, scoped, tag = 'input window, operand 2, single buffered']
    #allocation8 [shape = 'u8[1048576]{0}', space=vmem, size = 0x100000, scoped, tag = 'input window, operand 3, single buffered']
    #allocation9 [shape = 's32[1]{0}', space=sflag, size = 0x4, scoped, tag = 'scoped memory for tpu_custom_call.1']
    #allocation10 [shape = 'u8[2048]{0}', space=vmem, size = 0x800, scoped, tag = 'input window, operand 4, single buffered']
    #allocation11 [shape = 'u8[262144]{0}', space=vmem, size = 0x40000, scoped, tag = 'input window, operand 5, single buffered']
    #allocation12 [shape = 's32[1]{0}', space=sflag, size = 0x4, scoped, tag = 'scoped memory for tpu_custom_call.1']
    #allocation13 [shape = 'u8[1024]{0}', space=vmem, size = 0x400, scoped, tag = 'input window, operand 6, single buffered']
    #allocation14 [shape = 'u8[131072]{0}', space=vmem, size = 0x20000, scoped, tag = 'input window, operand 7, single buffered']
    #allocation15 [shape = 's32[1]{0}', space=sflag, size = 0x4, scoped, tag = 'scoped memory for tpu_custom_call.1']
    #allocation16 [shape = 'u8[1024]{0}', space=vmem, size = 0x400, scoped, tag = 'input window, operand 8, single buffered']
    #allocation17 [shape = 'u8[65536]{0}', space=vmem, size = 0x10000, scoped, tag = 'input window, operand 9, single buffered']
    #allocation18 [shape = 's32[1]{0}', space=sflag, size = 0x4, scoped, tag = 'scoped memory for tpu_custom_call.1']
    #allocation19 [shape = 'u8[512]{0}', space=vmem, size = 0x400, scoped, tag = 'input window, operand 10, single buffered']
    #allocation20 [shape = 'u8[4096]{0}', space=vmem, size = 0x1000, scoped, tag = 'output window, operand 0, single buffered']
    %16 = vsyncpa [#allocation3], 0
    %17 = vsyncpa [#allocation6], 0
    %18 = vsyncpa [#allocation9], 0
    %19 = vsyncpa [#allocation12], 0
    %20 = vsyncpa [#allocation15], 0
    %21 = vsyncpa [#allocation18], 0
    %22 = vsyncpa [#allocation4], 0
    // Predicated region
    $region2: #{tpu_custom_call.1} parent=1 // pred_check
      _
    $region3: #{tpu_custom_call.1} parent=1 // pred_check_branch
      %24 = sbr.rel (0) target = $region5
    $region4: #{tpu_custom_call.1} parent=1 // pred_region
      %26 = vsyncadd [#allocation3], 0
      %s28 = sshll.u32 %s0, 4
      %s29 = int_to_ptr.hbm [resolvable:$true] %s28
      %s30 = sshll.u32 [#allocation2], 4
      %s31 = int_to_ptr.vmem [resolvable:$true] %s30
      %33 = dma.hbm_to_vmem [thread:$0]  %s29, 512, %s31, [#allocation3]
    $region5: #{tpu_custom_call.1} parent=1 // pred_fallthru
      _
    // Predicated region
    $region6: #{tpu_custom_call.1} parent=1 // pred_check
      _
    $region7: #{tpu_custom_call.1} parent=1 // pred_check_branch
      %35 = sbr.rel (0) target = $region9
    $region8: #{tpu_custom_call.1} parent=1 // pred_region
      %37 = vsyncadd [#allocation6], 0
      %s38 = sshll.u32 %s1, 4
      %s39 = int_to_ptr.hbm [resolvable:$true] %s38
      %s40 = sshll.u32 [#allocation5], 4
      %s41 = int_to_ptr.vmem [resolvable:$true] %s40
      %46 = dma.hbm_to_vmem [thread:$0]  %s39, 65536, %s41, [#allocation6], 512, 512, 32
    $region9: #{tpu_custom_call.1} parent=1 // pred_fallthru
      _
    // Predicated region
    $region10: #{tpu_custom_call.1} parent=1 // pred_check
      _
    $region11: #{tpu_custom_call.1} parent=1 // pred_check_branch
      %48 = sbr.rel (0) target = $region13
    $region12: #{tpu_custom_call.1} parent=1 // pred_region
      %50 = vsyncadd [#allocation6], 0
      %s52 = sshll.u32 %s2, 4
      %s53 = int_to_ptr.hbm [resolvable:$true] %s52
      %s54 = sshll.u32 [#allocation7], 4
      %s55 = int_to_ptr.vmem [resolvable:$true] %s54
      %57 = dma.hbm_to_vmem [thread:$0]  %s53, 128, %s55, [#allocation6]
    $region13: #{tpu_custom_call.1} parent=1 // pred_fallthru
      _
    // Predicated region
    $region14: #{tpu_custom_call.1} parent=1 // pred_check
      _
    $region15: #{tpu_custom_call.1} parent=1 // pred_check_branch
      %59 = sbr.rel (0) target = $region17
    $region16: #{tpu_custom_call.1} parent=1 // pred_region
      %61 = vsyncadd [#allocation9], 0
      %s62 = sshll.u32 %s3, 4
      %s63 = int_to_ptr.hbm [resolvable:$true] %s62
      %s64 = sshll.u32 [#allocation8], 4
      %s65 = int_to_ptr.vmem [resolvable:$true] %s64
      %70 = dma.hbm_to_vmem [thread:$0]  %s63, 32768, %s65, [#allocation9], 256, 256, 16
    $region17: #{tpu_custom_call.1} parent=1 // pred_fallthru
      _
    // Predicated region
    $region18: #{tpu_custom_call.1} parent=1 // pred_check
      _
    $region19: #{tpu_custom_call.1} parent=1 // pred_check_branch
      %72 = sbr.rel (0) target = $region21
    $region20: #{tpu_custom_call.1} parent=1 // pred_region
      %74 = vsyncadd [#allocation9], 0
      %s76 = sshll.u32 %s4, 4
      %s77 = int_to_ptr.hbm [resolvable:$true] %s76
      %s78 = sshll.u32 [#allocation10], 4
      %s79 = int_to_ptr.vmem [resolvable:$true] %s78
      %81 = dma.hbm_to_vmem [thread:$0]  %s77, 64, %s79, [#allocation9]
    $region21: #{tpu_custom_call.1} parent=1 // pred_fallthru
      _
    // Predicated region
    $region22: #{tpu_custom_call.1} parent=1 // pred_check
      _
    $region23: #{tpu_custom_call.1} parent=1 // pred_check_branch
      %83 = sbr.rel (0) target = $region25
    $region24: #{tpu_custom_call.1} parent=1 // pred_region
      %85 = vsyncadd [#allocation12], 0
      %s86 = sshll.u32 %s5, 4
      %s87 = int_to_ptr.hbm [resolvable:$true] %s86
      %s88 = sshll.u32 [#allocation11], 4
      %s89 = int_to_ptr.vmem [resolvable:$true] %s88
      %94 = dma.hbm_to_vmem [thread:$0]  %s87, 8192, %s89, [#allocation12], 128, 128, 8
    $region25: #{tpu_custom_call.1} parent=1 // pred_fallthru
      _
    // Predicated region
    $region26: #{tpu_custom_call.1} parent=1 // pred_check
      _
    $region27: #{tpu_custom_call.1} parent=1 // pred_check_branch
      %96 = sbr.rel (0) target = $region29
    $region28: #{tpu_custom_call.1} parent=1 // pred_region
      %98 = vsyncadd [#allocation12], 0
      %s100 = sshll.u32 %s6, 4
      %s101 = int_to_ptr.hbm [resolvable:$true] %s100
      %s102 = sshll.u32 [#allocation13], 4
      %s103 = int_to_ptr.vmem [resolvable:$true] %s102
      %105 = dma.hbm_to_vmem [thread:$0]  %s101, 32, %s103, [#allocation12]
    $region29: #{tpu_custom_call.1} parent=1 // pred_fallthru
      _
    // Predicated region
    $region30: #{tpu_custom_call.1} parent=1 // pred_check
      _
    $region31: #{tpu_custom_call.1} parent=1 // pred_check_branch
      %107 = sbr.rel (0) target = $region33
    $region32: #{tpu_custom_call.1} parent=1 // pred_region
      %109 = vsyncadd [#allocation15], 0
      %s110 = sshll.u32 %s7, 4
      %s111 = int_to_ptr.hbm [resolvable:$true] %s110
      %s112 = sshll.u32 [#allocation14], 4
      %s113 = int_to_ptr.vmem [resolvable:$true] %s112
      %118 = dma.hbm_to_vmem [thread:$0]  %s111, 4096, %s113, [#allocation15], 128, 128, 8
    $region33: #{tpu_custom_call.1} parent=1 // pred_fallthru
      _
    // Predicated region
    $region34: #{tpu_custom_call.1} parent=1 // pred_check
      _
    $region35: #{tpu_custom_call.1} parent=1 // pred_check_branch
      %120 = sbr.rel (0) target = $region37
    $region36: #{tpu_custom_call.1} parent=1 // pred_region
      %122 = vsyncadd [#allocation15], 0
      %s124 = sshll.u32 %s8, 4
      %s125 = int_to_ptr.hbm [resolvable:$true] %s124
      %s126 = sshll.u32 [#allocation16], 4
      %s127 = int_to_ptr.vmem [resolvable:$true] %s126
      %129 = dma.hbm_to_vmem [thread:$0]  %s125, 32, %s127, [#allocation15]
    $region37: #{tpu_custom_call.1} parent=1 // pred_fallthru
      _
    // Predicated region
    $region38: #{tpu_custom_call.1} parent=1 // pred_check
      _
    $region39: #{tpu_custom_call.1} parent=1 // pred_check_branch
      %131 = sbr.rel (0) target = $region41
    $region40: #{tpu_custom_call.1} parent=1 // pred_region
      %133 = vsyncadd [#allocation18], 0
      %s134 = sshll.u32 %s9, 4
      %s135 = int_to_ptr.hbm [resolvable:$true] %s134
      %s136 = sshll.u32 [#allocation17], 4
      %s137 = int_to_ptr.vmem [resolvable:$true] %s136
      %142 = dma.hbm_to_vmem [thread:$0]  %s135, 2048, %s137, [#allocation18], 64, 64, 4
    $region41: #{tpu_custom_call.1} parent=1 // pred_fallthru
      _
    // Predicated region
    $region42: #{tpu_custom_call.1} parent=1 // pred_check
      _
    $region43: #{tpu_custom_call.1} parent=1 // pred_check_branch
      %144 = sbr.rel (0) target = $region45
    $region44: #{tpu_custom_call.1} parent=1 // pred_region
      %146 = vsyncadd [#allocation18], 0
      %s148 = sshll.u32 %s10, 4
      %s149 = int_to_ptr.hbm [resolvable:$true] %s148
      %s150 = sshll.u32 [#allocation19], 4
      %s151 = int_to_ptr.vmem [resolvable:$true] %s150
      %153 = dma.hbm_to_vmem [thread:$0]  %s149, 16, %s151, [#allocation18]
    $region45: #{tpu_custom_call.1} parent=1 // pred_fallthru
      _
    // Predicated region
    $region46: #{tpu_custom_call.1} parent=1 // pred_check
      _
    $region47: #{tpu_custom_call.1} parent=1 // pred_check_branch
      %155 = sbr.rel (0) target = $region49
    $region48: #{tpu_custom_call.1} parent=1 // pred_region
      %157 = dma.done [#allocation3], 512
    $region49: #{tpu_custom_call.1} parent=1 // pred_fallthru
      _
    // Predicated region
    $region50: #{tpu_custom_call.1} parent=1 // pred_check
      _
    $region51: #{tpu_custom_call.1} parent=1 // pred_check_branch
      %159 = sbr.rel (0) target = $region53
    $region52: #{tpu_custom_call.1} parent=1 // pred_region
      %161 = dma.done [#allocation6], 65536
    $region53: #{tpu_custom_call.1} parent=1 // pred_fallthru
      _
    // Predicated region
    $region54: #{tpu_custom_call.1} parent=1 // pred_check
      _
    $region55: #{tpu_custom_call.1} parent=1 // pred_check_branch
      %163 = sbr.rel (0) target = $region57
    $region56: #{tpu_custom_call.1} parent=1 // pred_region
      %165 = dma.done [#allocation6], 128
    $region57: #{tpu_custom_call.1} parent=1 // pred_fallthru
      _
    // Predicated region
    $region58: #{tpu_custom_call.1} parent=1 // pred_check
      _
    $region59: #{tpu_custom_call.1} parent=1 // pred_check_branch
      %167 = sbr.rel (0) target = $region61
    $region60: #{tpu_custom_call.1} parent=1 // pred_region
      %169 = dma.done [#allocation9], 32768
    $region61: #{tpu_custom_call.1} parent=1 // pred_fallthru
      _
    // Predicated region
    $region62: #{tpu_custom_call.1} parent=1 // pred_check
      _
    $region63: #{tpu_custom_call.1} parent=1 // pred_check_branch
      %171 = sbr.rel (0) target = $region65
    $region64: #{tpu_custom_call.1} parent=1 // pred_region
      %173 = dma.done [#allocation9], 64
    $region65: #{tpu_custom_call.1} parent=1 // pred_fallthru
      _
    // Predicated region
    $region66: #{tpu_custom_call.1} parent=1 // pred_check
      _
    $region67: #{tpu_custom_call.1} parent=1 // pred_check_branch
      %175 = sbr.rel (0) target = $region69
    $region68: #{tpu_custom_call.1} parent=1 // pred_region
      %177 = dma.done [#allocation12], 8192
    $region69: #{tpu_custom_call.1} parent=1 // pred_fallthru
      _
    // Predicated region
    $region70: #{tpu_custom_call.1} parent=1 // pred_check
      _
    $region71: #{tpu_custom_call.1} parent=1 // pred_check_branch
      %179 = sbr.rel (0) target = $region73
    $region72: #{tpu_custom_call.1} parent=1 // pred_region
      %181 = dma.done [#allocation12], 32
    $region73: #{tpu_custom_call.1} parent=1 // pred_fallthru
      _
    // Predicated region
    $region74: #{tpu_custom_call.1} parent=1 // pred_check
      _
    $region75: #{tpu_custom_call.1} parent=1 // pred_check_branch
      %183 = sbr.rel (0) target = $region77
    $region76: #{tpu_custom_call.1} parent=1 // pred_region
      %185 = dma.done [#allocation15], 4096
    $region77: #{tpu_custom_call.1} parent=1 // pred_fallthru
      _
    // Predicated region
    $region78: #{tpu_custom_call.1} parent=1 // pred_check
      _
    $region79: #{tpu_custom_call.1} parent=1 // pred_check_branch
      %187 = sbr.rel (0) target = $region81
    $region80: #{tpu_custom_call.1} parent=1 // pred_region
      %189 = dma.done [#allocation15], 32
    $region81: #{tpu_custom_call.1} parent=1 // pred_fallthru
      _
    // Predicated region
    $region82: #{tpu_custom_call.1} parent=1 // pred_check
      _
    $region83: #{tpu_custom_call.1} parent=1 // pred_check_branch
      %191 = sbr.rel (0) target = $region85
    $region84: #{tpu_custom_call.1} parent=1 // pred_region
      %193 = dma.done [#allocation18], 2048
    $region85: #{tpu_custom_call.1} parent=1 // pred_fallthru
      _
    // Predicated region
    $region86: #{tpu_custom_call.1} parent=1 // pred_check
      _
    $region87: #{tpu_custom_call.1} parent=1 // pred_check_branch
      %195 = sbr.rel (0) target = $region89
    $region88: #{tpu_custom_call.1} parent=1 // pred_region
      %197 = dma.done [#allocation18], 16
    $region89: #{tpu_custom_call.1} parent=1 // pred_fallthru
      _
    %v198 = vld [vmem:[#allocation2] sm:$0xff]
    %v199 = vld [vmem:[#allocation2 + $0x8] sm:$0xff]
    %v200 = vld [vmem:[#allocation2 + $0x10] sm:$0xff]
    %v201 = vld [vmem:[#allocation2 + $0x18] sm:$0xff]
    %v202 = vld [vmem:[#allocation5] sm:$0xff]
    %v203 = vld [vmem:[#allocation5 + $0x8] sm:$0xff]
    %v204 = vld [vmem:[#allocation5 + $0x10] sm:$0xff]
    %v205 = vld [vmem:[#allocation5 + $0x18] sm:$0xff]
    %v206 = vld [vmem:[#allocation5 + $0x20] sm:$0xff]
    %v207 = vld [vmem:[#allocation5 + $0x28] sm:$0xff]
    %v208 = vld [vmem:[#allocation5 + $0x30] sm:$0xff]
    %v209 = vld [vmem:[#allocation5 + $0x38] sm:$0xff]
    %v210 = vld [vmem:[#allocation5 + $0x40] sm:$0xff]
    %v211 = vld [vmem:[#allocation5 + $0x48] sm:$0xff]
    %v212 = vld [vmem:[#allocation5 + $0x50] sm:$0xff]
    %v213 = vld [vmem:[#allocation5 + $0x58] sm:$0xff]
    %v214 = vld [vmem:[#allocation5 + $0x60] sm:$0xff]
    %v215 = vld [vmem:[#allocation5 + $0x68] sm:$0xff]
    %v216 = vld [vmem:[#allocation5 + $0x70] sm:$0xff]
    %v217 = vld [vmem:[#allocation5 + $0x78] sm:$0xff]
    %v218 = vld [vmem:[#allocation5 + $0x80] sm:$0xff]
    %v219 = vld [vmem:[#allocation5 + $0x88] sm:$0xff]
    %v220 = vld [vmem:[#allocation5 + $0x90] sm:$0xff]
    %v221 = vld [vmem:[#allocation5 + $0x98] sm:$0xff]
    %v222 = vld [vmem:[#allocation5 + $0xa0] sm:$0xff]
    %v223 = vld [vmem:[#allocation5 + $0xa8] sm:$0xff]
    %v224 = vld [vmem:[#allocation5 + $0xb0] sm:$0xff]
    %v225 = vld [vmem:[#allocation5 + $0xb8] sm:$0xff]
    %v226 = vld [vmem:[#allocation5 + $0xc0] sm:$0xff]
    %v227 = vld [vmem:[#allocation5 + $0xc8] sm:$0xff]
    %v228 = vld [vmem:[#allocation5 + $0xd0] sm:$0xff]
    %v229 = vld [vmem:[#allocation5 + $0xd8] sm:$0xff]
    %v230 = vld [vmem:[#allocation5 + $0xe0] sm:$0xff]
    %v231 = vld [vmem:[#allocation5 + $0xe8] sm:$0xff]
    %v232 = vld [vmem:[#allocation5 + $0xf0] sm:$0xff]
    %v233 = vld [vmem:[#allocation5 + $0xf8] sm:$0xff]
    %v234 = vld [vmem:[#allocation5 + $0x100] sm:$0xff]
    %v235 = vld [vmem:[#allocation5 + $0x108] sm:$0xff]
    %v236 = vld [vmem:[#allocation5 + $0x110] sm:$0xff]
    %v237 = vld [vmem:[#allocation5 + $0x118] sm:$0xff]
    %v238 = vld [vmem:[#allocation5 + $0x120] sm:$0xff]
    %v239 = vld [vmem:[#allocation5 + $0x128] sm:$0xff]
    %v240 = vld [vmem:[#allocation5 + $0x130] sm:$0xff]
    %v241 = vld [vmem:[#allocation5 + $0x138] sm:$0xff]
    %v242 = vld [vmem:[#allocation5 + $0x140] sm:$0xff]
    %v243 = vld [vmem:[#allocation5 + $0x148] sm:$0xff]
    %v244 = vld [vmem:[#allocation5 + $0x150] sm:$0xff]
    %v245 = vld [vmem:[#allocation5 + $0x158] sm:$0xff]
    %v246 = vld [vmem:[#allocation5 + $0x160] sm:$0xff]
    %v247 = vld [vmem:[#allocation5 + $0x168] sm:$0xff]
    %v248 = vld [vmem:[#allocation5 + $0x170] sm:$0xff]
    %v249 = vld [vmem:[#allocation5 + $0x178] sm:$0xff]
    %v250 = vld [vmem:[#allocation5 + $0x180] sm:$0xff]
    %v251 = vld [vmem:[#allocation5 + $0x188] sm:$0xff]
    %v252 = vld [vmem:[#allocation5 + $0x190] sm:$0xff]
    %v253 = vld [vmem:[#allocation5 + $0x198] sm:$0xff]
    %v254 = vld [vmem:[#allocation5 + $0x1a0] sm:$0xff]
    %v255 = vld [vmem:[#allocation5 + $0x1a8] sm:$0xff]
    %v256 = vld [vmem:[#allocation5 + $0x1b0] sm:$0xff]
    %v257 = vld [vmem:[#allocation5 + $0x1b8] sm:$0xff]
    %v258 = vld [vmem:[#allocation5 + $0x1c0] sm:$0xff]
    %v259 = vld [vmem:[#allocation5 + $0x1c8] sm:$0xff]
    %v260 = vld [vmem:[#allocation5 + $0x1d0] sm:$0xff]
    %v261 = vld [vmem:[#allocation5 + $0x1d8] sm:$0xff]
    %v262 = vld [vmem:[#allocation5 + $0x1e0] sm:$0xff]
    %v263 = vld [vmem:[#allocation5 + $0x1e8] sm:$0xff]
    %v264 = vld [vmem:[#allocation5 + $0x1f0] sm:$0xff]
    %v265 = vld [vmem:[#allocation5 + $0x1f8] sm:$0xff]
    %v266 = vld [vmem:[#allocation5 + $0x200] sm:$0xff]
    %v267 = vld [vmem:[#allocation5 + $0x208] sm:$0xff]
    %v268 = vld [vmem:[#allocation5 + $0x210] sm:$0xff]
    %v269 = vld [vmem:[#allocation5 + $0x218] sm:$0xff]
    %v270 = vld [vmem:[#allocation5 + $0x220] sm:$0xff]
    %v271 = vld [vmem:[#allocation5 + $0x228] sm:$0xff]
    %v272 = vld [vmem:[#allocation5 + $0x230] sm:$0xff]
    %v273 = vld [vmem:[#allocation5 + $0x238] sm:$0xff]
    %v274 = vld [vmem:[#allocation5 + $0x240] sm:$0xff]
    %v275 = vld [vmem:[#allocation5 + $0x248] sm:$0xff]
    %v276 = vld [vmem:[#allocation5 + $0x250] sm:$0xff]
    %v277 = vld [vmem:[#allocation5 + $0x258] sm:$0xff]
    %v278 = vld [vmem:[#allocation5 + $0x260] sm:$0xff]
    %v279 = vld [vmem:[#allocation5 + $0x268] sm:$0xff]
    %v280 = vld [vmem:[#allocation5 + $0x270] sm:$0xff]
    %v281 = vld [vmem:[#allocation5 + $0x278] sm:$0xff]
    %v282 = vld [vmem:[#allocation5 + $0x280] sm:$0xff]
    %v283 = vld [vmem:[#allocation5 + $0x288] sm:$0xff]
    %v284 = vld [vmem:[#allocation5 + $0x290] sm:$0xff]
    %v285 = vld [vmem:[#allocation5 + $0x298] sm:$0xff]
    %v286 = vld [vmem:[#allocation5 + $0x2a0] sm:$0xff]
    %v287 = vld [vmem:[#allocation5 + $0x2a8] sm:$0xff]
    %v288 = vld [vmem:[#allocation5 + $0x2b0] sm:$0xff]
    %v289 = vld [vmem:[#allocation5 + $0x2b8] sm:$0xff]
    %v290 = vld [vmem:[#allocation5 + $0x2c0] sm:$0xff]
    %v291 = vld [vmem:[#allocation5 + $0x2c8] sm:$0xff]
    %v292 = vld [vmem:[#allocation5 + $0x2d0] sm:$0xff]
    %v293 = vld [vmem:[#allocation5 + $0x2d8] sm:$0xff]
    %v294 = vld [vmem:[#allocation5 + $0x2e0] sm:$0xff]
    %v295 = vld [vmem:[#allocation5 + $0x2e8] sm:$0xff]
    %v296 = vld [vmem:[#allocation5 + $0x2f0] sm:$0xff]
    %v297 = vld [vmem:[#allocation5 + $0x2f8] sm:$0xff]
    %v298 = vld [vmem:[#allocation5 + $0x300] sm:$0xff]
    %v299 = vld [vmem:[#allocation5 + $0x308] sm:$0xff]
    %v300 = vld [vmem:[#allocation5 + $0x310] sm:$0xff]
    %v301 = vld [vmem:[#allocation5 + $0x318] sm:$0xff]
    %v302 = vld [vmem:[#allocation5 + $0x320] sm:$0xff]
    %v303 = vld [vmem:[#allocation5 + $0x328] sm:$0xff]
    %v304 = vld [vmem:[#allocation5 + $0x330] sm:$0xff]
    %v305 = vld [vmem:[#allocation5 + $0x338] sm:$0xff]
    %v306 = vld [vmem:[#allocation5 + $0x340] sm:$0xff]
    %v307 = vld [vmem:[#allocation5 + $0x348] sm:$0xff]
    %v308 = vld [vmem:[#allocation5 + $0x350] sm:$0xff]
    %v309 = vld [vmem:[#allocation5 + $0x358] sm:$0xff]
    %v310 = vld [vmem:[#allocation5 + $0x360] sm:$0xff]
    %v311 = vld [vmem:[#allocation5 + $0x368] sm:$0xff]
    %v312 = vld [vmem:[#allocation5 + $0x370] sm:$0xff]
    %v313 = vld [vmem:[#allocation5 + $0x378] sm:$0xff]
    %v314 = vld [vmem:[#allocation5 + $0x380] sm:$0xff]
    %v315 = vld [vmem:[#allocation5 + $0x388] sm:$0xff]
    %v316 = vld [vmem:[#allocation5 + $0x390] sm:$0xff]
    %v317 = vld [vmem:[#allocation5 + $0x398] sm:$0xff]
    %v318 = vld [vmem:[#allocation5 + $0x3a0] sm:$0xff]
    %v319 = vld [vmem:[#allocation5 + $0x3a8] sm:$0xff]
    %v320 = vld [vmem:[#allocation5 + $0x3b0] sm:$0xff]
    %v321 = vld [vmem:[#allocation5 + $0x3b8] sm:$0xff]
    %v322 = vld [vmem:[#allocation5 + $0x3c0] sm:$0xff]
    %v323 = vld [vmem:[#allocation5 + $0x3c8] sm:$0xff]
    %v324 = vld [vmem:[#allocation5 + $0x3d0] sm:$0xff]
    %v325 = vld [vmem:[#allocation5 + $0x3d8] sm:$0xff]
    %v326 = vld [vmem:[#allocation5 + $0x3e0] sm:$0xff]
    %v327 = vld [vmem:[#allocation5 + $0x3e8] sm:$0xff]
    %v328 = vld [vmem:[#allocation5 + $0x3f0] sm:$0xff]
    %v329 = vld [vmem:[#allocation5 + $0x3f8] sm:$0xff]
    %v330 = vld [vmem:[#allocation5 + $0x400] sm:$0xff]
    %v331 = vld [vmem:[#allocation5 + $0x408] sm:$0xff]
    %v332 = vld [vmem:[#allocation5 + $0x410] sm:$0xff]
    %v333 = vld [vmem:[#allocation5 + $0x418] sm:$0xff]
    %v334 = vld [vmem:[#allocation5 + $0x420] sm:$0xff]
    %v335 = vld [vmem:[#allocation5 + $0x428] sm:$0xff]
    %v336 = vld [vmem:[#allocation5 + $0x430] sm:$0xff]
    %v337 = vld [vmem:[#allocation5 + $0x438] sm:$0xff]
    %v338 = vld [vmem:[#allocation5 + $0x440] sm:$0xff]
    %v339 = vld [vmem:[#allocation5 + $0x448] sm:$0xff]
    %v340 = vld [vmem:[#allocation5 + $0x450] sm:$0xff]
    %v341 = vld [vmem:[#allocation5 + $0x458] sm:$0xff]
    %v342 = vld [vmem:[#allocation5 + $0x460] sm:$0xff]
    %v343 = vld [vmem:[#allocation5 + $0x468] sm:$0xff]
    %v344 = vld [vmem:[#allocation5 + $0x470] sm:$0xff]
    %v345 = vld [vmem:[#allocation5 + $0x478] sm:$0xff]
    %v346 = vld [vmem:[#allocation5 + $0x480] sm:$0xff]
    %v347 = vld [vmem:[#allocation5 + $0x488] sm:$0xff]
    %v348 = vld [vmem:[#allocation5 + $0x490] sm:$0xff]
    %v349 = vld [vmem:[#allocation5 + $0x498] sm:$0xff]
    %v350 = vld [vmem:[#allocation5 + $0x4a0] sm:$0xff]
    %v351 = vld [vmem:[#allocation5 + $0x4a8] sm:$0xff]
    %v352 = vld [vmem:[#allocation5 + $0x4b0] sm:$0xff]
    %v353 = vld [vmem:[#allocation5 + $0x4b8] sm:$0xff]
    %v354 = vld [vmem:[#allocation5 + $0x4c0] sm:$0xff]
    %v355 = vld [vmem:[#allocation5 + $0x4c8] sm:$0xff]
    %v356 = vld [vmem:[#allocation5 + $0x4d0] sm:$0xff]
    %v357 = vld [vmem:[#allocation5 + $0x4d8] sm:$0xff]
    %v358 = vld [vmem:[#allocation5 + $0x4e0] sm:$0xff]
    %v359 = vld [vmem:[#allocation5 + $0x4e8] sm:$0xff]
    %v360 = vld [vmem:[#allocation5 + $0x4f0] sm:$0xff]
    %v361 = vld [vmem:[#allocation5 + $0x4f8] sm:$0xff]
    %v362 = vld [vmem:[#allocation5 + $0x500] sm:$0xff]
    %v363 = vld [vmem:[#allocation5 + $0x508] sm:$0xff]
    %v364 = vld [vmem:[#allocation5 + $0x510] sm:$0xff]
    %v365 = vld [vmem:[#allocation5 + $0x518] sm:$0xff]
    %v366 = vld [vmem:[#allocation5 + $0x520] sm:$0xff]
    %v367 = vld [vmem:[#allocation5 + $0x528] sm:$0xff]
    %v368 = vld [vmem:[#allocation5 + $0x530] sm:$0xff]
    %v369 = vld [vmem:[#allocation5 + $0x538] sm:$0xff]
    %v370 = vld [vmem:[#allocation5 + $0x540] sm:$0xff]
    %v371 = vld [vmem:[#allocation5 + $0x548] sm:$0xff]
    %v372 = vld [vmem:[#allocation5 + $0x550] sm:$0xff]
    %v373 = vld [vmem:[#allocation5 + $0x558] sm:$0xff]
    %v374 = vld [vmem:[#allocation5 + $0x560] sm:$0xff]
    %v375 = vld [vmem:[#allocation5 + $0x568] sm:$0xff]
    %v376 = vld [vmem:[#allocation5 + $0x570] sm:$0xff]
    %v377 = vld [vmem:[#allocation5 + $0x578] sm:$0xff]
    %v378 = vld [vmem:[#allocation5 + $0x580] sm:$0xff]
    %v379 = vld [vmem:[#allocation5 + $0x588] sm:$0xff]
    %v380 = vld [vmem:[#allocation5 + $0x590] sm:$0xff]
    %v381 = vld [vmem:[#allocation5 + $0x598] sm:$0xff]
    %v382 = vld [vmem:[#allocation5 + $0x5a0] sm:$0xff]
    %v383 = vld [vmem:[#allocation5 + $0x5a8] sm:$0xff]
    %v384 = vld [vmem:[#allocation5 + $0x5b0] sm:$0xff]
    %v385 = vld [vmem:[#allocation5 + $0x5b8] sm:$0xff]
    %v386 = vld [vmem:[#allocation5 + $0x5c0] sm:$0xff]
    %v387 = vld [vmem:[#allocation5 + $0x5c8] sm:$0xff]
    %v388 = vld [vmem:[#allocation5 + $0x5d0] sm:$0xff]
    %v389 = vld [vmem:[#allocation5 + $0x5d8] sm:$0xff]
    %v390 = vld [vmem:[#allocation5 + $0x5e0] sm:$0xff]
    %v391 = vld [vmem:[#allocation5 + $0x5e8] sm:$0xff]
    %v392 = vld [vmem:[#allocation5 + $0x5f0] sm:$0xff]
    %v393 = vld [vmem:[#allocation5 + $0x5f8] sm:$0xff]
    %v394 = vld [vmem:[#allocation5 + $0x600] sm:$0xff]
    %v395 = vld [vmem:[#allocation5 + $0x608] sm:$0xff]
    %v396 = vld [vmem:[#allocation5 + $0x610] sm:$0xff]
    %v397 = vld [vmem:[#allocation5 + $0x618] sm:$0xff]
    %v398 = vld [vmem:[#allocation5 + $0x620] sm:$0xff]
    %v399 = vld [vmem:[#allocation5 + $0x628] sm:$0xff]
    %v400 = vld [vmem:[#allocation5 + $0x630] sm:$0xff]
    %v401 = vld [vmem:[#allocation5 + $0x638] sm:$0xff]
    %v402 = vld [vmem:[#allocation5 + $0x640] sm:$0xff]
    %v403 = vld [vmem:[#allocation5 + $0x648] sm:$0xff]
    %v404 = vld [vmem:[#allocation5 + $0x650] sm:$0xff]
    %v405 = vld [vmem:[#allocation5 + $0x658] sm:$0xff]
    %v406 = vld [vmem:[#allocation5 + $0x660] sm:$0xff]
    %v407 = vld [vmem:[#allocation5 + $0x668] sm:$0xff]
    %v408 = vld [vmem:[#allocation5 + $0x670] sm:$0xff]
    %v409 = vld [vmem:[#allocation5 + $0x678] sm:$0xff]
    %v410 = vld [vmem:[#allocation5 + $0x680] sm:$0xff]
    %v411 = vld [vmem:[#allocation5 + $0x688] sm:$0xff]
    %v412 = vld [vmem:[#allocation5 + $0x690] sm:$0xff]
    %v413 = vld [vmem:[#allocation5 + $0x698] sm:$0xff]
    %v414 = vld [vmem:[#allocation5 + $0x6a0] sm:$0xff]
    %v415 = vld [vmem:[#allocation5 + $0x6a8] sm:$0xff]
    %v416 = vld [vmem:[#allocation5 + $0x6b0] sm:$0xff]
    %v417 = vld [vmem:[#allocation5 + $0x6b8] sm:$0xff]
    %v418 = vld [vmem:[#allocation5 + $0x6c0] sm:$0xff]
    %v419 = vld [vmem:[#allocation5 + $0x6c8] sm:$0xff]
    %v420 = vld [vmem:[#allocation5 + $0x6d0] sm:$0xff]
    %v421 = vld [vmem:[#allocation5 + $0x6d8] sm:$0xff]
    %v422 = vld [vmem:[#allocation5 + $0x6e0] sm:$0xff]
    %v423 = vld [vmem:[#allocation5 + $0x6e8] sm:$0xff]
    %v424 = vld [vmem:[#allocation5 + $0x6f0] sm:$0xff]
    %v425 = vld [vmem:[#allocation5 + $0x6f8] sm:$0xff]
    %v426 = vld [vmem:[#allocation5 + $0x700] sm:$0xff]
    %v427 = vld [vmem:[#allocation5 + $0x708] sm:$0xff]
    %v428 = vld [vmem:[#allocation5 + $0x710] sm:$0xff]
    %v429 = vld [vmem:[#allocation5 + $0x718] sm:$0xff]
    %v430 = vld [vmem:[#allocation5 + $0x720] sm:$0xff]
    %v431 = vld [vmem:[#allocation5 + $0x728] sm:$0xff]
    %v432 = vld [vmem:[#allocation5 + $0x730] sm:$0xff]
    %v433 = vld [vmem:[#allocation5 + $0x738] sm:$0xff]
    %v434 = vld [vmem:[#allocation5 + $0x740] sm:$0xff]
    %v435 = vld [vmem:[#allocation5 + $0x748] sm:$0xff]
    %v436 = vld [vmem:[#allocation5 + $0x750] sm:$0xff]
    %v437 = vld [vmem:[#allocation5 + $0x758] sm:$0xff]
    %v438 = vld [vmem:[#allocation5 + $0x760] sm:$0xff]
    %v439 = vld [vmem:[#allocation5 + $0x768] sm:$0xff]
    %v440 = vld [vmem:[#allocation5 + $0x770] sm:$0xff]
    %v441 = vld [vmem:[#allocation5 + $0x778] sm:$0xff]
    %v442 = vld [vmem:[#allocation5 + $0x780] sm:$0xff]
    %v443 = vld [vmem:[#allocation5 + $0x788] sm:$0xff]
    %v444 = vld [vmem:[#allocation5 + $0x790] sm:$0xff]
    %v445 = vld [vmem:[#allocation5 + $0x798] sm:$0xff]
    %v446 = vld [vmem:[#allocation5 + $0x7a0] sm:$0xff]
    %v447 = vld [vmem:[#allocation5 + $0x7a8] sm:$0xff]
    %v448 = vld [vmem:[#allocation5 + $0x7b0] sm:$0xff]
    %v449 = vld [vmem:[#allocation5 + $0x7b8] sm:$0xff]
    %v450 = vld [vmem:[#allocation5 + $0x7c0] sm:$0xff]
    %v451 = vld [vmem:[#allocation5 + $0x7c8] sm:$0xff]
    %v452 = vld [vmem:[#allocation5 + $0x7d0] sm:$0xff]
    %v453 = vld [vmem:[#allocation5 + $0x7d8] sm:$0xff]
    %v454 = vld [vmem:[#allocation5 + $0x7e0] sm:$0xff]
    %v455 = vld [vmem:[#allocation5 + $0x7e8] sm:$0xff]
    %v456 = vld [vmem:[#allocation5 + $0x7f0] sm:$0xff]
    %v457 = vld [vmem:[#allocation5 + $0x7f8] sm:$0xff]
    %v458 = vld [vmem:[#allocation5 + $0x800] sm:$0xff]
    %v459 = vld [vmem:[#allocation5 + $0x808] sm:$0xff]
    %v460 = vld [vmem:[#allocation5 + $0x810] sm:$0xff]
    %v461 = vld [vmem:[#allocation5 + $0x818] sm:$0xff]
    %v462 = vld [vmem:[#allocation5 + $0x820] sm:$0xff]
    %v463 = vld [vmem:[#allocation5 + $0x828] sm:$0xff]
    %v464 = vld [vmem:[#allocation5 + $0x830] sm:$0xff]
    %v465 = vld [vmem:[#allocation5 + $0x838] sm:$0xff]
    %v466 = vld [vmem:[#allocation5 + $0x840] sm:$0xff]
    %v467 = vld [vmem:[#allocation5 + $0x848] sm:$0xff]
    %v468 = vld [vmem:[#allocation5 + $0x850] sm:$0xff]
    %v469 = vld [vmem:[#allocation5 + $0x858] sm:$0xff]
    %v470 = vld [vmem:[#allocation5 + $0x860] sm:$0xff]
    %v471 = vld [vmem:[#allocation5 + $0x868] sm:$0xff]
    %v472 = vld [vmem:[#allocation5 + $0x870] sm:$0xff]
    %v473 = vld [vmem:[#allocation5 + $0x878] sm:$0xff]
    %v474 = vld [vmem:[#allocation5 + $0x880] sm:$0xff]
    %v475 = vld [vmem:[#allocation5 + $0x888] sm:$0xff]
    %v476 = vld [vmem:[#allocation5 + $0x890] sm:$0xff]
    %v477 = vld [vmem:[#allocation5 + $0x898] sm:$0xff]
    %v478 = vld [vmem:[#allocation5 + $0x8a0] sm:$0xff]
    %v479 = vld [vmem:[#allocation5 + $0x8a8] sm:$0xff]
    %v480 = vld [vmem:[#allocation5 + $0x8b0] sm:$0xff]
    %v481 = vld [vmem:[#allocation5 + $0x8b8] sm:$0xff]
    %v482 = vld [vmem:[#allocation5 + $0x8c0] sm:$0xff]
    %v483 = vld [vmem:[#allocation5 + $0x8c8] sm:$0xff]
    %v484 = vld [vmem:[#allocation5 + $0x8d0] sm:$0xff]
    %v485 = vld [vmem:[#allocation5 + $0x8d8] sm:$0xff]
    %v486 = vld [vmem:[#allocation5 + $0x8e0] sm:$0xff]
    %v487 = vld [vmem:[#allocation5 + $0x8e8] sm:$0xff]
    %v488 = vld [vmem:[#allocation5 + $0x8f0] sm:$0xff]
    %v489 = vld [vmem:[#allocation5 + $0x8f8] sm:$0xff]
    %v490 = vld [vmem:[#allocation5 + $0x900] sm:$0xff]
    %v491 = vld [vmem:[#allocation5 + $0x908] sm:$0xff]
    %v492 = vld [vmem:[#allocation5 + $0x910] sm:$0xff]
    %v493 = vld [vmem:[#allocation5 + $0x918] sm:$0xff]
    %v494 = vld [vmem:[#allocation5 + $0x920] sm:$0xff]
    %v495 = vld [vmem:[#allocation5 + $0x928] sm:$0xff]
    %v496 = vld [vmem:[#allocation5 + $0x930] sm:$0xff]
    %v497 = vld [vmem:[#allocation5 + $0x938] sm:$0xff]
    %v498 = vld [vmem:[#allocation5 + $0x940] sm:$0xff]
    %v499 = vld [vmem:[#allocation5 + $0x948] sm:$0xff]
    %v500 = vld [vmem:[#allocation5 + $0x950] sm:$0xff]
    %v501 = vld [vmem:[#allocation5 + $0x958] sm:$0xff]
    %v502 = vld [vmem:[#allocation5 + $0x960] sm:$0xff]
    %v503 = vld [vmem:[#allocation5 + $0x968] sm:$0xff]
    %v504 = vld [vmem:[#allocation5 + $0x970] sm:$0xff]
    %v505 = vld [vmem:[#allocation5 + $0x978] sm:$0xff]
    %v506 = vld [vmem:[#allocation5 + $0x980] sm:$0xff]
    %v507 = vld [vmem:[#allocation5 + $0x988] sm:$0xff]
    %v508 = vld [vmem:[#allocation5 + $0x990] sm:$0xff]
    %v509 = vld [vmem:[#allocation5 + $0x998] sm:$0xff]
    %v510 = vld [vmem:[#allocation5 + $0x9a0] sm:$0xff]
    %v511 = vld [vmem:[#allocation5 + $0x9a8] sm:$0xff]
    %v512 = vld [vmem:[#allocation5 + $0x9b0] sm:$0xff]
    %v513 = vld [vmem:[#allocation5 + $0x9b8] sm:$0xff]
    %v514 = vld [vmem:[#allocation5 + $0x9c0] sm:$0xff]
    %v515 = vld [vmem:[#allocation5 + $0x9c8] sm:$0xff]
    %v516 = vld [vmem:[#allocation5 + $0x9d0] sm:$0xff]
    %v517 = vld [vmem:[#allocation5 + $0x9d8] sm:$0xff]
    %v518 = vld [vmem:[#allocation5 + $0x9e0] sm:$0xff]
    %v519 = vld [vmem:[#allocation5 + $0x9e8] sm:$0xff]
    %v520 = vld [vmem:[#allocation5 + $0x9f0] sm:$0xff]
    %v521 = vld [vmem:[#allocation5 + $0x9f8] sm:$0xff]
    %v522 = vld [vmem:[#allocation5 + $0xa00] sm:$0xff]
    %v523 = vld [vmem:[#allocation5 + $0xa08] sm:$0xff]
    %v524 = vld [vmem:[#allocation5 + $0xa10] sm:$0xff]
    %v525 = vld [vmem:[#allocation5 + $0xa18] sm:$0xff]
    %v526 = vld [vmem:[#allocation5 + $0xa20] sm:$0xff]
    %v527 = vld [vmem:[#allocation5 + $0xa28] sm:$0xff]
    %v528 = vld [vmem:[#allocation5 + $0xa30] sm:$0xff]
    %v529 = vld [vmem:[#allocation5 + $0xa38] sm:$0xff]
    %v530 = vld [vmem:[#allocation5 + $0xa40] sm:$0xff]
    %v531 = vld [vmem:[#allocation5 + $0xa48] sm:$0xff]
    %v532 = vld [vmem:[#allocation5 + $0xa50] sm:$0xff]
    %v533 = vld [vmem:[#allocation5 + $0xa58] sm:$0xff]
    %v534 = vld [vmem:[#allocation5 + $0xa60] sm:$0xff]
    %v535 = vld [vmem:[#allocation5 + $0xa68] sm:$0xff]
    %v536 = vld [vmem:[#allocation5 + $0xa70] sm:$0xff]
    %v537 = vld [vmem:[#allocation5 + $0xa78] sm:$0xff]
    %v538 = vld [vmem:[#allocation5 + $0xa80] sm:$0xff]
    %v539 = vld [vmem:[#allocation5 + $0xa88] sm:$0xff]
    %v540 = vld [vmem:[#allocation5 + $0xa90] sm:$0xff]
    %v541 = vld [vmem:[#allocation5 + $0xa98] sm:$0xff]
    %v542 = vld [vmem:[#allocation5 + $0xaa0] sm:$0xff]
    %v543 = vld [vmem:[#allocation5 + $0xaa8] sm:$0xff]
    %v544 = vld [vmem:[#allocation5 + $0xab0] sm:$0xff]
    %v545 = vld [vmem:[#allocation5 + $0xab8] sm:$0xff]
    %v546 = vld [vmem:[#allocation5 + $0xac0] sm:$0xff]
    %v547 = vld [vmem:[#allocation5 + $0xac8] sm:$0xff]
    %v548 = vld [vmem:[#allocation5 + $0xad0] sm:$0xff]
    %v549 = vld [vmem:[#allocation5 + $0xad8] sm:$0xff]
    %v550 = vld [vmem:[#allocation5 + $0xae0] sm:$0xff]
    %v551 = vld [vmem:[#allocation5 + $0xae8] sm:$0xff]
    %v552 = vld [vmem:[#allocation5 + $0xaf0] sm:$0xff]
    %v553 = vld [vmem:[#allocation5 + $0xaf8] sm:$0xff]
    %v554 = vld [vmem:[#allocation5 + $0xb00] sm:$0xff]
    %v555 = vld [vmem:[#allocation5 + $0xb08] sm:$0xff]
    %v556 = vld [vmem:[#allocation5 + $0xb10] sm:$0xff]
    %v557 = vld [vmem:[#allocation5 + $0xb18] sm:$0xff]
    %v558 = vld [vmem:[#allocation5 + $0xb20] sm:$0xff]
    %v559 = vld [vmem:[#allocation5 + $0xb28] sm:$0xff]
    %v560 = vld [vmem:[#allocation5 + $0xb30] sm:$0xff]
    %v561 = vld [vmem:[#allocation5 + $0xb38] sm:$0xff]
    %v562 = vld [vmem:[#allocation5 + $0xb40] sm:$0xff]
    %v563 = vld [vmem:[#allocation5 + $0xb48] sm:$0xff]
    %v564 = vld [vmem:[#allocation5 + $0xb50] sm:$0xff]
    %v565 = vld [vmem:[#allocation5 + $0xb58] sm:$0xff]
    %v566 = vld [vmem:[#allocation5 + $0xb60] sm:$0xff]
    %v567 = vld [vmem:[#allocation5 + $0xb68] sm:$0xff]
    %v568 = vld [vmem:[#allocation5 + $0xb70] sm:$0xff]
    %v569 = vld [vmem:[#allocation5 + $0xb78] sm:$0xff]
    %v570 = vld [vmem:[#allocation5 + $0xb80] sm:$0xff]
    %v571 = vld [vmem:[#allocation5 + $0xb88] sm:$0xff]
    %v572 = vld [vmem:[#allocation5 + $0xb90] sm:$0xff]
    %v573 = vld [vmem:[#allocation5 + $0xb98] sm:$0xff]
    %v574 = vld [vmem:[#allocation5 + $0xba0] sm:$0xff]
    %v575 = vld [vmem:[#allocation5 + $0xba8] sm:$0xff]
    %v576 = vld [vmem:[#allocation5 + $0xbb0] sm:$0xff]
    %v577 = vld [vmem:[#allocation5 + $0xbb8] sm:$0xff]
    %v578 = vld [vmem:[#allocation5 + $0xbc0] sm:$0xff]
    %v579 = vld [vmem:[#allocation5 + $0xbc8] sm:$0xff]
    %v580 = vld [vmem:[#allocation5 + $0xbd0] sm:$0xff]
    %v581 = vld [vmem:[#allocation5 + $0xbd8] sm:$0xff]
    %v582 = vld [vmem:[#allocation5 + $0xbe0] sm:$0xff]
    %v583 = vld [vmem:[#allocation5 + $0xbe8] sm:$0xff]
    %v584 = vld [vmem:[#allocation5 + $0xbf0] sm:$0xff]
    %v585 = vld [vmem:[#allocation5 + $0xbf8] sm:$0xff]
    %v586 = vld [vmem:[#allocation5 + $0xc00] sm:$0xff]
    %v587 = vld [vmem:[#allocation5 + $0xc08] sm:$0xff]
    %v588 = vld [vmem:[#allocation5 + $0xc10] sm:$0xff]
    %v589 = vld [vmem:[#allocation5 + $0xc18] sm:$0xff]
    %v590 = vld [vmem:[#allocation5 + $0xc20] sm:$0xff]
    %v591 = vld [vmem:[#allocation5 + $0xc28] sm:$0xff]
    %v592 = vld [vmem:[#allocation5 + $0xc30] sm:$0xff]
    %v593 = vld [vmem:[#allocation5 + $0xc38] sm:$0xff]
    %v594 = vld [vmem:[#allocation5 + $0xc40] sm:$0xff]
    %v595 = vld [vmem:[#allocation5 + $0xc48] sm:$0xff]
    %v596 = vld [vmem:[#allocation5 + $0xc50] sm:$0xff]
    %v597 = vld [vmem:[#allocation5 + $0xc58] sm:$0xff]
    %v598 = vld [vmem:[#allocation5 + $0xc60] sm:$0xff]
    %v599 = vld [vmem:[#allocation5 + $0xc68] sm:$0xff]
    %v600 = vld [vmem:[#allocation5 + $0xc70] sm:$0xff]
    %v601 = vld [vmem:[#allocation5 + $0xc78] sm:$0xff]
    %v602 = vld [vmem:[#allocation5 + $0xc80] sm:$0xff]
    %v603 = vld [vmem:[#allocation5 + $0xc88] sm:$0xff]
    %v604 = vld [vmem:[#allocation5 + $0xc90] sm:$0xff]
    %v605 = vld [vmem:[#allocation5 + $0xc98] sm:$0xff]
    %v606 = vld [vmem:[#allocation5 + $0xca0] sm:$0xff]
    %v607 = vld [vmem:[#allocation5 + $0xca8] sm:$0xff]
    %v608 = vld [vmem:[#allocation5 + $0xcb0] sm:$0xff]
    %v609 = vld [vmem:[#allocation5 + $0xcb8] sm:$0xff]
    %v610 = vld [vmem:[#allocation5 + $0xcc0] sm:$0xff]
    %v611 = vld [vmem:[#allocation5 + $0xcc8] sm:$0xff]
    %v612 = vld [vmem:[#allocation5 + $0xcd0] sm:$0xff]
    %v613 = vld [vmem:[#allocation5 + $0xcd8] sm:$0xff]
    %v614 = vld [vmem:[#allocation5 + $0xce0] sm:$0xff]
    %v615 = vld [vmem:[#allocation5 + $0xce8] sm:$0xff]
    %v616 = vld [vmem:[#allocation5 + $0xcf0] sm:$0xff]
    %v617 = vld [vmem:[#allocation5 + $0xcf8] sm:$0xff]
    %v618 = vld [vmem:[#allocation5 + $0xd00] sm:$0xff]
    %v619 = vld [vmem:[#allocation5 + $0xd08] sm:$0xff]
    %v620 = vld [vmem:[#allocation5 + $0xd10] sm:$0xff]
    %v621 = vld [vmem:[#allocation5 + $0xd18] sm:$0xff]
    %v622 = vld [vmem:[#allocation5 + $0xd20] sm:$0xff]
    %v623 = vld [vmem:[#allocation5 + $0xd28] sm:$0xff]
    %v624 = vld [vmem:[#allocation5 + $0xd30] sm:$0xff]
    %v625 = vld [vmem:[#allocation5 + $0xd38] sm:$0xff]
    %v626 = vld [vmem:[#allocation5 + $0xd40] sm:$0xff]
    %v627 = vld [vmem:[#allocation5 + $0xd48] sm:$0xff]
    %v628 = vld [vmem:[#allocation5 + $0xd50] sm:$0xff]
    %v629 = vld [vmem:[#allocation5 + $0xd58] sm:$0xff]
    %v630 = vld [vmem:[#allocation5 + $0xd60] sm:$0xff]
    %v631 = vld [vmem:[#allocation5 + $0xd68] sm:$0xff]
    %v632 = vld [vmem:[#allocation5 + $0xd70] sm:$0xff]
    %v633 = vld [vmem:[#allocation5 + $0xd78] sm:$0xff]
    %v634 = vld [vmem:[#allocation5 + $0xd80] sm:$0xff]
    %v635 = vld [vmem:[#allocation5 + $0xd88] sm:$0xff]
    %v636 = vld [vmem:[#allocation5 + $0xd90] sm:$0xff]
    %v637 = vld [vmem:[#allocation5 + $0xd98] sm:$0xff]
    %v638 = vld [vmem:[#allocation5 + $0xda0] sm:$0xff]
    %v639 = vld [vmem:[#allocation5 + $0xda8] sm:$0xff]
    %v640 = vld [vmem:[#allocation5 + $0xdb0] sm:$0xff]
    %v641 = vld [vmem:[#allocation5 + $0xdb8] sm:$0xff]
    %v642 = vld [vmem:[#allocation5 + $0xdc0] sm:$0xff]
    %v643 = vld [vmem:[#allocation5 + $0xdc8] sm:$0xff]
    %v644 = vld [vmem:[#allocation5 + $0xdd0] sm:$0xff]
    %v645 = vld [vmem:[#allocation5 + $0xdd8] sm:$0xff]
    %v646 = vld [vmem:[#allocation5 + $0xde0] sm:$0xff]
    %v647 = vld [vmem:[#allocation5 + $0xde8] sm:$0xff]
    %v648 = vld [vmem:[#allocation5 + $0xdf0] sm:$0xff]
    %v649 = vld [vmem:[#allocation5 + $0xdf8] sm:$0xff]
    %v650 = vld [vmem:[#allocation5 + $0xe00] sm:$0xff]
    %v651 = vld [vmem:[#allocation5 + $0xe08] sm:$0xff]
    %v652 = vld [vmem:[#allocation5 + $0xe10] sm:$0xff]
    %v653 = vld [vmem:[#allocation5 + $0xe18] sm:$0xff]
    %v654 = vld [vmem:[#allocation5 + $0xe20] sm:$0xff]
    %v655 = vld [vmem:[#allocation5 + $0xe28] sm:$0xff]
    %v656 = vld [vmem:[#allocation5 + $0xe30] sm:$0xff]
    %v657 = vld [vmem:[#allocation5 + $0xe38] sm:$0xff]
    %v658 = vld [vmem:[#allocation5 + $0xe40] sm:$0xff]
    %v659 = vld [vmem:[#allocation5 + $0xe48] sm:$0xff]
    %v660 = vld [vmem:[#allocation5 + $0xe50] sm:$0xff]
    %v661 = vld [vmem:[#allocation5 + $0xe58] sm:$0xff]
    %v662 = vld [vmem:[#allocation5 + $0xe60] sm:$0xff]
    %v663 = vld [vmem:[#allocation5 + $0xe68] sm:$0xff]
    %v664 = vld [vmem:[#allocation5 + $0xe70] sm:$0xff]
    %v665 = vld [vmem:[#allocation5 + $0xe78] sm:$0xff]
    %v666 = vld [vmem:[#allocation5 + $0xe80] sm:$0xff]
    %v667 = vld [vmem:[#allocation5 + $0xe88] sm:$0xff]
    %v668 = vld [vmem:[#allocation5 + $0xe90] sm:$0xff]
    %v669 = vld [vmem:[#allocation5 + $0xe98] sm:$0xff]
    %v670 = vld [vmem:[#allocation5 + $0xea0] sm:$0xff]
    %v671 = vld [vmem:[#allocation5 + $0xea8] sm:$0xff]
    %v672 = vld [vmem:[#allocation5 + $0xeb0] sm:$0xff]
    %v673 = vld [vmem:[#allocation5 + $0xeb8] sm:$0xff]
    %v674 = vld [vmem:[#allocation5 + $0xec0] sm:$0xff]
    %v675 = vld [vmem:[#allocation5 + $0xec8] sm:$0xff]
    %v676 = vld [vmem:[#allocation5 + $0xed0] sm:$0xff]
    %v677 = vld [vmem:[#allocation5 + $0xed8] sm:$0xff]
    %v678 = vld [vmem:[#allocation5 + $0xee0] sm:$0xff]
    %v679 = vld [vmem:[#allocation5 + $0xee8] sm:$0xff]
    %v680 = vld [vmem:[#allocation5 + $0xef0] sm:$0xff]
    %v681 = vld [vmem:[#allocation5 + $0xef8] sm:$0xff]
    %v682 = vld [vmem:[#allocation5 + $0xf00] sm:$0xff]
    %v683 = vld [vmem:[#allocation5 + $0xf08] sm:$0xff]
    %v684 = vld [vmem:[#allocation5 + $0xf10] sm:$0xff]
    %v685 = vld [vmem:[#allocation5 + $0xf18] sm:$0xff]
    %v686 = vld [vmem:[#allocation5 + $0xf20] sm:$0xff]
    %v687 = vld [vmem:[#allocation5 + $0xf28] sm:$0xff]
    %v688 = vld [vmem:[#allocation5 + $0xf30] sm:$0xff]
    %v689 = vld [vmem:[#allocation5 + $0xf38] sm:$0xff]
    %v690 = vld [vmem:[#allocation5 + $0xf40] sm:$0xff]
    %v691 = vld [vmem:[#allocation5 + $0xf48] sm:$0xff]
    %v692 = vld [vmem:[#allocation5 + $0xf50] sm:$0xff]
    %v693 = vld [vmem:[#allocation5 + $0xf58] sm:$0xff]
    %v694 = vld [vmem:[#allocation5 + $0xf60] sm:$0xff]
    %v695 = vld [vmem:[#allocation5 + $0xf68] sm:$0xff]
    %v696 = vld [vmem:[#allocation5 + $0xf70] sm:$0xff]
    %v697 = vld [vmem:[#allocation5 + $0xf78] sm:$0xff]
    %v698 = vld [vmem:[#allocation5 + $0xf80] sm:$0xff]
    %v699 = vld [vmem:[#allocation5 + $0xf88] sm:$0xff]
    %v700 = vld [vmem:[#allocation5 + $0xf90] sm:$0xff]
    %v701 = vld [vmem:[#allocation5 + $0xf98] sm:$0xff]
    %v702 = vld [vmem:[#allocation5 + $0xfa0] sm:$0xff]
    %v703 = vld [vmem:[#allocation5 + $0xfa8] sm:$0xff]
    %v704 = vld [vmem:[#allocation5 + $0xfb0] sm:$0xff]
    %v705 = vld [vmem:[#allocation5 + $0xfb8] sm:$0xff]
    %v706 = vld [vmem:[#allocation5 + $0xfc0] sm:$0xff]
    %v707 = vld [vmem:[#allocation5 + $0xfc8] sm:$0xff]
    %v708 = vld [vmem:[#allocation5 + $0xfd0] sm:$0xff]
    %v709 = vld [vmem:[#allocation5 + $0xfd8] sm:$0xff]
    %v710 = vld [vmem:[#allocation5 + $0xfe0] sm:$0xff]
    %v711 = vld [vmem:[#allocation5 + $0xfe8] sm:$0xff]
    %v712 = vld [vmem:[#allocation5 + $0xff0] sm:$0xff]
    %v713 = vld [vmem:[#allocation5 + $0xff8] sm:$0xff]
    %v714 = vld [vmem:[#allocation7] sm:$0xff]
    %v716 = vperm.slane %v714, 0
    %v717 = vperm.slane %v714, 1
    %v718 = vperm.slane %v714, 2
    %v719 = vperm.slane %v714, 3
    %v720 = vperm.slane %v714, 4
    %v721 = vperm.slane %v714, 5
    %v722 = vperm.slane %v714, 6
    %v723 = vperm.slane %v714, 7
    %v736 = vunpack.c.l.b16 %v198
    %v737 = vunpack.c.h.b16 %v198
    %v738 = vunpack.c.l.b16 %v199
    %v739 = vunpack.c.h.b16 %v199
    %v740 = vunpack.c.l.b16 %v200
    %v741 = vunpack.c.h.b16 %v200
    %v742 = vunpack.c.l.b16 %v201
    %v743 = vunpack.c.h.b16 %v201
    %v744 = vpack.c.b16 %v736, %v736
    %v745 = vpack.c.b16 %v737, %v737
    %v746 = vpack.c.b16 %v738, %v738
    %v747 = vpack.c.b16 %v739, %v739
    %v748 = vpack.c.b16 %v740, %v740
    %v749 = vpack.c.b16 %v741, %v741
    %v750 = vpack.c.b16 %v742, %v742
    %v751 = vpack.c.b16 %v743, %v743
    %v1272 = vunpack.c.l.b16 %v202
    %v1273 = vunpack.c.h.b16 %v202
    %v1274 = vunpack.c.l.b16 %v203
    %v1275 = vunpack.c.h.b16 %v203
    %v1276 = vunpack.c.l.b16 %v204
    %v1277 = vunpack.c.h.b16 %v204
    %v1278 = vunpack.c.l.b16 %v205
    %v1279 = vunpack.c.h.b16 %v205
    %v1280 = vunpack.c.l.b16 %v206
    %v1281 = vunpack.c.h.b16 %v206
    %v1282 = vunpack.c.l.b16 %v207
    %v1283 = vunpack.c.h.b16 %v207
    %v1284 = vunpack.c.l.b16 %v208
    %v1285 = vunpack.c.h.b16 %v208
    %v1286 = vunpack.c.l.b16 %v209
    %v1287 = vunpack.c.h.b16 %v209
    %v1288 = vunpack.c.l.b16 %v210
    %v1289 = vunpack.c.h.b16 %v210
    %v1290 = vunpack.c.l.b16 %v211
    %v1291 = vunpack.c.h.b16 %v211
    %v1292 = vunpack.c.l.b16 %v212
    %v1293 = vunpack.c.h.b16 %v212
    %v1294 = vunpack.c.l.b16 %v213
    %v1295 = vunpack.c.h.b16 %v213
    %v1296 = vunpack.c.l.b16 %v214
    %v1297 = vunpack.c.h.b16 %v214
    %v1298 = vunpack.c.l.b16 %v215
    %v1299 = vunpack.c.h.b16 %v215
    %v1300 = vunpack.c.l.b16 %v216
    %v1301 = vunpack.c.h.b16 %v216
    %v1302 = vunpack.c.l.b16 %v217
    %v1303 = vunpack.c.h.b16 %v217
    %v1304 = vunpack.c.l.b16 %v218
    %v1305 = vunpack.c.h.b16 %v218
    %v1306 = vunpack.c.l.b16 %v219
    %v1307 = vunpack.c.h.b16 %v219
    %v1308 = vunpack.c.l.b16 %v220
    %v1309 = vunpack.c.h.b16 %v220
    %v1310 = vunpack.c.l.b16 %v221
    %v1311 = vunpack.c.h.b16 %v221
    %v1312 = vunpack.c.l.b16 %v222
    %v1313 = vunpack.c.h.b16 %v222
    %v1314 = vunpack.c.l.b16 %v223
    %v1315 = vunpack.c.h.b16 %v223
    %v1316 = vunpack.c.l.b16 %v224
    %v1317 = vunpack.c.h.b16 %v224
    %v1318 = vunpack.c.l.b16 %v225
    %v1319 = vunpack.c.h.b16 %v225
    %v1320 = vunpack.c.l.b16 %v226
    %v1321 = vunpack.c.h.b16 %v226
    %v1322 = vunpack.c.l.b16 %v227
    %v1323 = vunpack.c.h.b16 %v227
    %v1324 = vunpack.c.l.b16 %v228
    %v1325 = vunpack.c.h.b16 %v228
    %v1326 = vunpack.c.l.b16 %v229
    %v1327 = vunpack.c.h.b16 %v229
    %v1328 = vunpack.c.l.b16 %v230
    %v1329 = vunpack.c.h.b16 %v230
    %v1330 = vunpack.c.l.b16 %v231
    %v1331 = vunpack.c.h.b16 %v231
    %v1332 = vunpack.c.l.b16 %v232
    %v1333 = vunpack.c.h.b16 %v232
    %v1334 = vunpack.c.l.b16 %v233
    %v1335 = vunpack.c.h.b16 %v233
    %v1336 = vunpack.c.l.b16 %v234
    %v1337 = vunpack.c.h.b16 %v234
    %v1338 = vunpack.c.l.b16 %v235
    %v1339 = vunpack.c.h.b16 %v235
    %v1340 = vunpack.c.l.b16 %v236
    %v1341 = vunpack.c.h.b16 %v236
    %v1342 = vunpack.c.l.b16 %v237
    %v1343 = vunpack.c.h.b16 %v237
    %v1344 = vunpack.c.l.b16 %v238
    %v1345 = vunpack.c.h.b16 %v238
    %v1346 = vunpack.c.l.b16 %v239
    %v1347 = vunpack.c.h.b16 %v239
    %v1348 = vunpack.c.l.b16 %v240
    %v1349 = vunpack.c.h.b16 %v240
    %v1350 = vunpack.c.l.b16 %v241
    %v1351 = vunpack.c.h.b16 %v241
    %v1352 = vunpack.c.l.b16 %v242
    %v1353 = vunpack.c.h.b16 %v242
    %v1354 = vunpack.c.l.b16 %v243
    %v1355 = vunpack.c.h.b16 %v243
    %v1356 = vunpack.c.l.b16 %v244
    %v1357 = vunpack.c.h.b16 %v244
    %v1358 = vunpack.c.l.b16 %v245
    %v1359 = vunpack.c.h.b16 %v245
    %v1360 = vunpack.c.l.b16 %v246
    %v1361 = vunpack.c.h.b16 %v246
    %v1362 = vunpack.c.l.b16 %v247
    %v1363 = vunpack.c.h.b16 %v247
    %v1364 = vunpack.c.l.b16 %v248
    %v1365 = vunpack.c.h.b16 %v248
    %v1366 = vunpack.c.l.b16 %v249
    %v1367 = vunpack.c.h.b16 %v249
    %v1368 = vunpack.c.l.b16 %v250
    %v1369 = vunpack.c.h.b16 %v250
    %v1370 = vunpack.c.l.b16 %v251
    %v1371 = vunpack.c.h.b16 %v251
    %v1372 = vunpack.c.l.b16 %v252
    %v1373 = vunpack.c.h.b16 %v252
    %v1374 = vunpack.c.l.b16 %v253
    %v1375 = vunpack.c.h.b16 %v253
    %v1376 = vunpack.c.l.b16 %v254
    %v1377 = vunpack.c.h.b16 %v254
    %v1378 = vunpack.c.l.b16 %v255
    %v1379 = vunpack.c.h.b16 %v255
    %v1380 = vunpack.c.l.b16 %v256
    %v1381 = vunpack.c.h.b16 %v256
    %v1382 = vunpack.c.l.b16 %v257
    %v1383 = vunpack.c.h.b16 %v257
    %v1384 = vunpack.c.l.b16 %v258
    %v1385 = vunpack.c.h.b16 %v258
    %v1386 = vunpack.c.l.b16 %v259
    %v1387 = vunpack.c.h.b16 %v259
    %v1388 = vunpack.c.l.b16 %v260
    %v1389 = vunpack.c.h.b16 %v260
    %v1390 = vunpack.c.l.b16 %v261
    %v1391 = vunpack.c.h.b16 %v261
    %v1392 = vunpack.c.l.b16 %v262
    %v1393 = vunpack.c.h.b16 %v262
    %v1394 = vunpack.c.l.b16 %v263
    %v1395 = vunpack.c.h.b16 %v263
    %v1396 = vunpack.c.l.b16 %v264
    %v1397 = vunpack.c.h.b16 %v264
    %v1398 = vunpack.c.l.b16 %v265
    %v1399 = vunpack.c.h.b16 %v265
    %v1400 = vunpack.c.l.b16 %v266
    %v1401 = vunpack.c.h.b16 %v266
    %v1402 = vunpack.c.l.b16 %v267
    %v1403 = vunpack.c.h.b16 %v267
    %v1404 = vunpack.c.l.b16 %v268
    %v1405 = vunpack.c.h.b16 %v268
    %v1406 = vunpack.c.l.b16 %v269
    %v1407 = vunpack.c.h.b16 %v269
    %v1408 = vunpack.c.l.b16 %v270
    %v1409 = vunpack.c.h.b16 %v270
    %v1410 = vunpack.c.l.b16 %v271
    %v1411 = vunpack.c.h.b16 %v271
    %v1412 = vunpack.c.l.b16 %v272
    %v1413 = vunpack.c.h.b16 %v272
    %v1414 = vunpack.c.l.b16 %v273
    %v1415 = vunpack.c.h.b16 %v273
    %v1416 = vunpack.c.l.b16 %v274
    %v1417 = vunpack.c.h.b16 %v274
    %v1418 = vunpack.c.l.b16 %v275
    %v1419 = vunpack.c.h.b16 %v275
    %v1420 = vunpack.c.l.b16 %v276
    %v1421 = vunpack.c.h.b16 %v276
    %v1422 = vunpack.c.l.b16 %v277
    %v1423 = vunpack.c.h.b16 %v277
    %v1424 = vunpack.c.l.b16 %v278
    %v1425 = vunpack.c.h.b16 %v278
    %v1426 = vunpack.c.l.b16 %v279
    %v1427 = vunpack.c.h.b16 %v279
    %v1428 = vunpack.c.l.b16 %v280
    %v1429 = vunpack.c.h.b16 %v280
    %v1430 = vunpack.c.l.b16 %v281
    %v1431 = vunpack.c.h.b16 %v281
    %v1432 = vunpack.c.l.b16 %v282
    %v1433 = vunpack.c.h.b16 %v282
    %v1434 = vunpack.c.l.b16 %v283
    %v1435 = vunpack.c.h.b16 %v283
    %v1436 = vunpack.c.l.b16 %v284
    %v1437 = vunpack.c.h.b16 %v284
    %v1438 = vunpack.c.l.b16 %v285
    %v1439 = vunpack.c.h.b16 %v285
    %v1440 = vunpack.c.l.b16 %v286
    %v1441 = vunpack.c.h.b16 %v286
    %v1442 = vunpack.c.l.b16 %v287
    %v1443 = vunpack.c.h.b16 %v287
    %v1444 = vunpack.c.l.b16 %v288
    %v1445 = vunpack.c.h.b16 %v288
    %v1446 = vunpack.c.l.b16 %v289
    %v1447 = vunpack.c.h.b16 %v289
    %v1448 = vunpack.c.l.b16 %v290
    %v1449 = vunpack.c.h.b16 %v290
    %v1450 = vunpack.c.l.b16 %v291
    %v1451 = vunpack.c.h.b16 %v291
    %v1452 = vunpack.c.l.b16 %v292
    %v1453 = vunpack.c.h.b16 %v292
    %v1454 = vunpack.c.l.b16 %v293
    %v1455 = vunpack.c.h.b16 %v293
    %v1456 = vunpack.c.l.b16 %v294
    %v1457 = vunpack.c.h.b16 %v294
    %v1458 = vunpack.c.l.b16 %v295
    %v1459 = vunpack.c.h.b16 %v295
    %v1460 = vunpack.c.l.b16 %v296
    %v1461 = vunpack.c.h.b16 %v296
    %v1462 = vunpack.c.l.b16 %v297
    %v1463 = vunpack.c.h.b16 %v297
    %v1464 = vunpack.c.l.b16 %v298
    %v1465 = vunpack.c.h.b16 %v298
    %v1466 = vunpack.c.l.b16 %v299
    %v1467 = vunpack.c.h.b16 %v299
    %v1468 = vunpack.c.l.b16 %v300
    %v1469 = vunpack.c.h.b16 %v300
    %v1470 = vunpack.c.l.b16 %v301
    %v1471 = vunpack.c.h.b16 %v301
    %v1472 = vunpack.c.l.b16 %v302
    %v1473 = vunpack.c.h.b16 %v302
    %v1474 = vunpack.c.l.b16 %v303
    %v1475 = vunpack.c.h.b16 %v303
    %v1476 = vunpack.c.l.b16 %v304
    %v1477 = vunpack.c.h.b16 %v304
    %v1478 = vunpack.c.l.b16 %v305
    %v1479 = vunpack.c.h.b16 %v305
    %v1480 = vunpack.c.l.b16 %v306
    %v1481 = vunpack.c.h.b16 %v306
    %v1482 = vunpack.c.l.b16 %v307
    %v1483 = vunpack.c.h.b16 %v307
    %v1484 = vunpack.c.l.b16 %v308
    %v1485 = vunpack.c.h.b16 %v308
    %v1486 = vunpack.c.l.b16 %v309
    %v1487 = vunpack.c.h.b16 %v309
    %v1488 = vunpack.c.l.b16 %v310
    %v1489 = vunpack.c.h.b16 %v310
    %v1490 = vunpack.c.l.b16 %v311
    %v1491 = vunpack.c.h.b16 %v311
    %v1492 = vunpack.c.l.b16 %v312
    %v1493 = vunpack.c.h.b16 %v312
    %v1494 = vunpack.c.l.b16 %v313
    %v1495 = vunpack.c.h.b16 %v313
    %v1496 = vunpack.c.l.b16 %v314
    %v1497 = vunpack.c.h.b16 %v314
    %v1498 = vunpack.c.l.b16 %v315
    %v1499 = vunpack.c.h.b16 %v315
    %v1500 = vunpack.c.l.b16 %v316
    %v1501 = vunpack.c.h.b16 %v316
    %v1502 = vunpack.c.l.b16 %v317
    %v1503 = vunpack.c.h.b16 %v317
    %v1504 = vunpack.c.l.b16 %v318
    %v1505 = vunpack.c.h.b16 %v318
    %v1506 = vunpack.c.l.b16 %v319
    %v1507 = vunpack.c.h.b16 %v319
    %v1508 = vunpack.c.l.b16 %v320
    %v1509 = vunpack.c.h.b16 %v320
    %v1510 = vunpack.c.l.b16 %v321
    %v1511 = vunpack.c.h.b16 %v321
    %v1512 = vunpack.c.l.b16 %v322
    %v1513 = vunpack.c.h.b16 %v322
    %v1514 = vunpack.c.l.b16 %v323
    %v1515 = vunpack.c.h.b16 %v323
    %v1516 = vunpack.c.l.b16 %v324
    %v1517 = vunpack.c.h.b16 %v324
    %v1518 = vunpack.c.l.b16 %v325
    %v1519 = vunpack.c.h.b16 %v325
    %v1520 = vunpack.c.l.b16 %v326
    %v1521 = vunpack.c.h.b16 %v326
    %v1522 = vunpack.c.l.b16 %v327
    %v1523 = vunpack.c.h.b16 %v327
    %v1524 = vunpack.c.l.b16 %v328
    %v1525 = vunpack.c.h.b16 %v328
    %v1526 = vunpack.c.l.b16 %v329
    %v1527 = vunpack.c.h.b16 %v329
    %v1528 = vunpack.c.l.b16 %v330
    %v1529 = vunpack.c.h.b16 %v330
    %v1530 = vunpack.c.l.b16 %v331
    %v1531 = vunpack.c.h.b16 %v331
    %v1532 = vunpack.c.l.b16 %v332
    %v1533 = vunpack.c.h.b16 %v332
    %v1534 = vunpack.c.l.b16 %v333
    %v1535 = vunpack.c.h.b16 %v333
    %v1536 = vunpack.c.l.b16 %v334
    %v1537 = vunpack.c.h.b16 %v334
    %v1538 = vunpack.c.l.b16 %v335
    %v1539 = vunpack.c.h.b16 %v335
    %v1540 = vunpack.c.l.b16 %v336
    %v1541 = vunpack.c.h.b16 %v336
    %v1542 = vunpack.c.l.b16 %v337
    %v1543 = vunpack.c.h.b16 %v337
    %v1544 = vunpack.c.l.b16 %v338
    %v1545 = vunpack.c.h.b16 %v338
    %v1546 = vunpack.c.l.b16 %v339
    %v1547 = vunpack.c.h.b16 %v339
    %v1548 = vunpack.c.l.b16 %v340
    %v1549 = vunpack.c.h.b16 %v340
    %v1550 = vunpack.c.l.b16 %v341
    %v1551 = vunpack.c.h.b16 %v341
    %v1552 = vunpack.c.l.b16 %v342
    %v1553 = vunpack.c.h.b16 %v342
    %v1554 = vunpack.c.l.b16 %v343
    %v1555 = vunpack.c.h.b16 %v343
    %v1556 = vunpack.c.l.b16 %v344
    %v1557 = vunpack.c.h.b16 %v344
    %v1558 = vunpack.c.l.b16 %v345
    %v1559 = vunpack.c.h.b16 %v345
    %v1560 = vunpack.c.l.b16 %v346
    %v1561 = vunpack.c.h.b16 %v346
    %v1562 = vunpack.c.l.b16 %v347
    %v1563 = vunpack.c.h.b16 %v347
    %v1564 = vunpack.c.l.b16 %v348
    %v1565 = vunpack.c.h.b16 %v348
    %v1566 = vunpack.c.l.b16 %v349
    %v1567 = vunpack.c.h.b16 %v349
    %v1568 = vunpack.c.l.b16 %v350
    %v1569 = vunpack.c.h.b16 %v350
    %v1570 = vunpack.c.l.b16 %v351
    %v1571 = vunpack.c.h.b16 %v351
    %v1572 = vunpack.c.l.b16 %v352
    %v1573 = vunpack.c.h.b16 %v352
    %v1574 = vunpack.c.l.b16 %v353
    %v1575 = vunpack.c.h.b16 %v353
    %v1576 = vunpack.c.l.b16 %v354
    %v1577 = vunpack.c.h.b16 %v354
    %v1578 = vunpack.c.l.b16 %v355
    %v1579 = vunpack.c.h.b16 %v355
    %v1580 = vunpack.c.l.b16 %v356
    %v1581 = vunpack.c.h.b16 %v356
    %v1582 = vunpack.c.l.b16 %v357
    %v1583 = vunpack.c.h.b16 %v357
    %v1584 = vunpack.c.l.b16 %v358
    %v1585 = vunpack.c.h.b16 %v358
    %v1586 = vunpack.c.l.b16 %v359
    %v1587 = vunpack.c.h.b16 %v359
    %v1588 = vunpack.c.l.b16 %v360
    %v1589 = vunpack.c.h.b16 %v360
    %v1590 = vunpack.c.l.b16 %v361
    %v1591 = vunpack.c.h.b16 %v361
    %v1592 = vunpack.c.l.b16 %v362
    %v1593 = vunpack.c.h.b16 %v362
    %v1594 = vunpack.c.l.b16 %v363
    %v1595 = vunpack.c.h.b16 %v363
    %v1596 = vunpack.c.l.b16 %v364
    %v1597 = vunpack.c.h.b16 %v364
    %v1598 = vunpack.c.l.b16 %v365
    %v1599 = vunpack.c.h.b16 %v365
    %v1600 = vunpack.c.l.b16 %v366
    %v1601 = vunpack.c.h.b16 %v366
    %v1602 = vunpack.c.l.b16 %v367
    %v1603 = vunpack.c.h.b16 %v367
    %v1604 = vunpack.c.l.b16 %v368
    %v1605 = vunpack.c.h.b16 %v368
    %v1606 = vunpack.c.l.b16 %v369
    %v1607 = vunpack.c.h.b16 %v369
    %v1608 = vunpack.c.l.b16 %v370
    %v1609 = vunpack.c.h.b16 %v370
    %v1610 = vunpack.c.l.b16 %v371
    %v1611 = vunpack.c.h.b16 %v371
    %v1612 = vunpack.c.l.b16 %v372
    %v1613 = vunpack.c.h.b16 %v372
    %v1614 = vunpack.c.l.b16 %v373
    %v1615 = vunpack.c.h.b16 %v373
    %v1616 = vunpack.c.l.b16 %v374
    %v1617 = vunpack.c.h.b16 %v374
    %v1618 = vunpack.c.l.b16 %v375
    %v1619 = vunpack.c.h.b16 %v375
    %v1620 = vunpack.c.l.b16 %v376
    %v1621 = vunpack.c.h.b16 %v376
    %v1622 = vunpack.c.l.b16 %v377
    %v1623 = vunpack.c.h.b16 %v377
    %v1624 = vunpack.c.l.b16 %v378
    %v1625 = vunpack.c.h.b16 %v378
    %v1626 = vunpack.c.l.b16 %v379
    %v1627 = vunpack.c.h.b16 %v379
    %v1628 = vunpack.c.l.b16 %v380
    %v1629 = vunpack.c.h.b16 %v380
    %v1630 = vunpack.c.l.b16 %v381
    %v1631 = vunpack.c.h.b16 %v381
    %v1632 = vunpack.c.l.b16 %v382
    %v1633 = vunpack.c.h.b16 %v382
    %v1634 = vunpack.c.l.b16 %v383
    %v1635 = vunpack.c.h.b16 %v383
    %v1636 = vunpack.c.l.b16 %v384
    %v1637 = vunpack.c.h.b16 %v384
    %v1638 = vunpack.c.l.b16 %v385
    %v1639 = vunpack.c.h.b16 %v385
    %v1640 = vunpack.c.l.b16 %v386
    %v1641 = vunpack.c.h.b16 %v386
    %v1642 = vunpack.c.l.b16 %v387
    %v1643 = vunpack.c.h.b16 %v387
    %v1644 = vunpack.c.l.b16 %v388
    %v1645 = vunpack.c.h.b16 %v388
    %v1646 = vunpack.c.l.b16 %v389
    %v1647 = vunpack.c.h.b16 %v389
    %v1648 = vunpack.c.l.b16 %v390
    %v1649 = vunpack.c.h.b16 %v390
    %v1650 = vunpack.c.l.b16 %v391
    %v1651 = vunpack.c.h.b16 %v391
    %v1652 = vunpack.c.l.b16 %v392
    %v1653 = vunpack.c.h.b16 %v392
    %v1654 = vunpack.c.l.b16 %v393
    %v1655 = vunpack.c.h.b16 %v393
    %v1656 = vunpack.c.l.b16 %v394
    %v1657 = vunpack.c.h.b16 %v394
    %v1658 = vunpack.c.l.b16 %v395
    %v1659 = vunpack.c.h.b16 %v395
    %v1660 = vunpack.c.l.b16 %v396
    %v1661 = vunpack.c.h.b16 %v396
    %v1662 = vunpack.c.l.b16 %v397
    %v1663 = vunpack.c.h.b16 %v397
    %v1664 = vunpack.c.l.b16 %v398
    %v1665 = vunpack.c.h.b16 %v398
    %v1666 = vunpack.c.l.b16 %v399
    %v1667 = vunpack.c.h.b16 %v399
    %v1668 = vunpack.c.l.b16 %v400
    %v1669 = vunpack.c.h.b16 %v400
    %v1670 = vunpack.c.l.b16 %v401
    %v1671 = vunpack.c.h.b16 %v401
    %v1672 = vunpack.c.l.b16 %v402
    %v1673 = vunpack.c.h.b16 %v402
    %v1674 = vunpack.c.l.b16 %v403
    %v1675 = vunpack.c.h.b16 %v403
    %v1676 = vunpack.c.l.b16 %v404
    %v1677 = vunpack.c.h.b16 %v404
    %v1678 = vunpack.c.l.b16 %v405
    %v1679 = vunpack.c.h.b16 %v405
    %v1680 = vunpack.c.l.b16 %v406
    %v1681 = vunpack.c.h.b16 %v406
    %v1682 = vunpack.c.l.b16 %v407
    %v1683 = vunpack.c.h.b16 %v407
    %v1684 = vunpack.c.l.b16 %v408
    %v1685 = vunpack.c.h.b16 %v408
    %v1686 = vunpack.c.l.b16 %v409
    %v1687 = vunpack.c.h.b16 %v409
    %v1688 = vunpack.c.l.b16 %v410
    %v1689 = vunpack.c.h.b16 %v410
    %v1690 = vunpack.c.l.b16 %v411
    %v1691 = vunpack.c.h.b16 %v411
    %v1692 = vunpack.c.l.b16 %v412
    %v1693 = vunpack.c.h.b16 %v412
    %v1694 = vunpack.c.l.b16 %v413
    %v1695 = vunpack.c.h.b16 %v413
    %v1696 = vunpack.c.l.b16 %v414
    %v1697 = vunpack.c.h.b16 %v414
    %v1698 = vunpack.c.l.b16 %v415
    %v1699 = vunpack.c.h.b16 %v415
    %v1700 = vunpack.c.l.b16 %v416
    %v1701 = vunpack.c.h.b16 %v416
    %v1702 = vunpack.c.l.b16 %v417
    %v1703 = vunpack.c.h.b16 %v417
    %v1704 = vunpack.c.l.b16 %v418
    %v1705 = vunpack.c.h.b16 %v418
    %v1706 = vunpack.c.l.b16 %v419
    %v1707 = vunpack.c.h.b16 %v419
    %v1708 = vunpack.c.l.b16 %v420
    %v1709 = vunpack.c.h.b16 %v420
    %v1710 = vunpack.c.l.b16 %v421
    %v1711 = vunpack.c.h.b16 %v421
    %v1712 = vunpack.c.l.b16 %v422
    %v1713 = vunpack.c.h.b16 %v422
    %v1714 = vunpack.c.l.b16 %v423
    %v1715 = vunpack.c.h.b16 %v423
    %v1716 = vunpack.c.l.b16 %v424
    %v1717 = vunpack.c.h.b16 %v424
    %v1718 = vunpack.c.l.b16 %v425
    %v1719 = vunpack.c.h.b16 %v425
    %v1720 = vunpack.c.l.b16 %v426
    %v1721 = vunpack.c.h.b16 %v426
    %v1722 = vunpack.c.l.b16 %v427
    %v1723 = vunpack.c.h.b16 %v427
    %v1724 = vunpack.c.l.b16 %v428
    %v1725 = vunpack.c.h.b16 %v428
    %v1726 = vunpack.c.l.b16 %v429
    %v1727 = vunpack.c.h.b16 %v429
    %v1728 = vunpack.c.l.b16 %v430
    %v1729 = vunpack.c.h.b16 %v430
    %v1730 = vunpack.c.l.b16 %v431
    %v1731 = vunpack.c.h.b16 %v431
    %v1732 = vunpack.c.l.b16 %v432
    %v1733 = vunpack.c.h.b16 %v432
    %v1734 = vunpack.c.l.b16 %v433
    %v1735 = vunpack.c.h.b16 %v433
    %v1736 = vunpack.c.l.b16 %v434
    %v1737 = vunpack.c.h.b16 %v434
    %v1738 = vunpack.c.l.b16 %v435
    %v1739 = vunpack.c.h.b16 %v435
    %v1740 = vunpack.c.l.b16 %v436
    %v1741 = vunpack.c.h.b16 %v436
    %v1742 = vunpack.c.l.b16 %v437
    %v1743 = vunpack.c.h.b16 %v437
    %v1744 = vunpack.c.l.b16 %v438
    %v1745 = vunpack.c.h.b16 %v438
    %v1746 = vunpack.c.l.b16 %v439
    %v1747 = vunpack.c.h.b16 %v439
    %v1748 = vunpack.c.l.b16 %v440
    %v1749 = vunpack.c.h.b16 %v440
    %v1750 = vunpack.c.l.b16 %v441
    %v1751 = vunpack.c.h.b16 %v441
    %v1752 = vunpack.c.l.b16 %v442
    %v1753 = vunpack.c.h.b16 %v442
    %v1754 = vunpack.c.l.b16 %v443
    %v1755 = vunpack.c.h.b16 %v443
    %v1756 = vunpack.c.l.b16 %v444
    %v1757 = vunpack.c.h.b16 %v444
    %v1758 = vunpack.c.l.b16 %v445
    %v1759 = vunpack.c.h.b16 %v445
    %v1760 = vunpack.c.l.b16 %v446
    %v1761 = vunpack.c.h.b16 %v446
    %v1762 = vunpack.c.l.b16 %v447
    %v1763 = vunpack.c.h.b16 %v447
    %v1764 = vunpack.c.l.b16 %v448
    %v1765 = vunpack.c.h.b16 %v448
    %v1766 = vunpack.c.l.b16 %v449
    %v1767 = vunpack.c.h.b16 %v449
    %v1768 = vunpack.c.l.b16 %v450
    %v1769 = vunpack.c.h.b16 %v450
    %v1770 = vunpack.c.l.b16 %v451
    %v1771 = vunpack.c.h.b16 %v451
    %v1772 = vunpack.c.l.b16 %v452
    %v1773 = vunpack.c.h.b16 %v452
    %v1774 = vunpack.c.l.b16 %v453
    %v1775 = vunpack.c.h.b16 %v453
    %v1776 = vunpack.c.l.b16 %v454
    %v1777 = vunpack.c.h.b16 %v454
    %v1778 = vunpack.c.l.b16 %v455
    %v1779 = vunpack.c.h.b16 %v455
    %v1780 = vunpack.c.l.b16 %v456
    %v1781 = vunpack.c.h.b16 %v456
    %v1782 = vunpack.c.l.b16 %v457
    %v1783 = vunpack.c.h.b16 %v457
    %v1784 = vunpack.c.l.b16 %v458
    %v1785 = vunpack.c.h.b16 %v458
    %v1786 = vunpack.c.l.b16 %v459
    %v1787 = vunpack.c.h.b16 %v459
    %v1788 = vunpack.c.l.b16 %v460
    %v1789 = vunpack.c.h.b16 %v460
    %v1790 = vunpack.c.l.b16 %v461
    %v1791 = vunpack.c.h.b16 %v461
    %v1792 = vunpack.c.l.b16 %v462
    %v1793 = vunpack.c.h.b16 %v462
    %v1794 = vunpack.c.l.b16 %v463
    %v1795 = vunpack.c.h.b16 %v463
    %v1796 = vunpack.c.l.b16 %v464
    %v1797 = vunpack.c.h.b16 %v464
    %v1798 = vunpack.c.l.b16 %v465
    %v1799 = vunpack.c.h.b16 %v465
    %v1800 = vunpack.c.l.b16 %v466
    %v1801 = vunpack.c.h.b16 %v466
    %v1802 = vunpack.c.l.b16 %v467
    %v1803 = vunpack.c.h.b16 %v467
    %v1804 = vunpack.c.l.b16 %v468
    %v1805 = vunpack.c.h.b16 %v468
    %v1806 = vunpack.c.l.b16 %v469
    %v1807 = vunpack.c.h.b16 %v469
    %v1808 = vunpack.c.l.b16 %v470
    %v1809 = vunpack.c.h.b16 %v470
    %v1810 = vunpack.c.l.b16 %v471
    %v1811 = vunpack.c.h.b16 %v471
    %v1812 = vunpack.c.l.b16 %v472
    %v1813 = vunpack.c.h.b16 %v472
    %v1814 = vunpack.c.l.b16 %v473
    %v1815 = vunpack.c.h.b16 %v473
    %v1816 = vunpack.c.l.b16 %v474
    %v1817 = vunpack.c.h.b16 %v474
    %v1818 = vunpack.c.l.b16 %v475
    %v1819 = vunpack.c.h.b16 %v475
    %v1820 = vunpack.c.l.b16 %v476
    %v1821 = vunpack.c.h.b16 %v476
    %v1822 = vunpack.c.l.b16 %v477
    %v1823 = vunpack.c.h.b16 %v477
    %v1824 = vunpack.c.l.b16 %v478
    %v1825 = vunpack.c.h.b16 %v478
    %v1826 = vunpack.c.l.b16 %v479
    %v1827 = vunpack.c.h.b16 %v479
    %v1828 = vunpack.c.l.b16 %v480
    %v1829 = vunpack.c.h.b16 %v480
    %v1830 = vunpack.c.l.b16 %v481
    %v1831 = vunpack.c.h.b16 %v481
    %v1832 = vunpack.c.l.b16 %v482
    %v1833 = vunpack.c.h.b16 %v482
    %v1834 = vunpack.c.l.b16 %v483
    %v1835 = vunpack.c.h.b16 %v483
    %v1836 = vunpack.c.l.b16 %v484
    %v1837 = vunpack.c.h.b16 %v484
    %v1838 = vunpack.c.l.b16 %v485
    %v1839 = vunpack.c.h.b16 %v485
    %v1840 = vunpack.c.l.b16 %v486
    %v1841 = vunpack.c.h.b16 %v486
    %v1842 = vunpack.c.l.b16 %v487
    %v1843 = vunpack.c.h.b16 %v487
    %v1844 = vunpack.c.l.b16 %v488
    %v1845 = vunpack.c.h.b16 %v488
    %v1846 = vunpack.c.l.b16 %v489
    %v1847 = vunpack.c.h.b16 %v489
    %v1848 = vunpack.c.l.b16 %v490
    %v1849 = vunpack.c.h.b16 %v490
    %v1850 = vunpack.c.l.b16 %v491
    %v1851 = vunpack.c.h.b16 %v491
    %v1852 = vunpack.c.l.b16 %v492
    %v1853 = vunpack.c.h.b16 %v492
    %v1854 = vunpack.c.l.b16 %v493
    %v1855 = vunpack.c.h.b16 %v493
    %v1856 = vunpack.c.l.b16 %v494
    %v1857 = vunpack.c.h.b16 %v494
    %v1858 = vunpack.c.l.b16 %v495
    %v1859 = vunpack.c.h.b16 %v495
    %v1860 = vunpack.c.l.b16 %v496
    %v1861 = vunpack.c.h.b16 %v496
    %v1862 = vunpack.c.l.b16 %v497
    %v1863 = vunpack.c.h.b16 %v497
    %v1864 = vunpack.c.l.b16 %v498
    %v1865 = vunpack.c.h.b16 %v498
    %v1866 = vunpack.c.l.b16 %v499
    %v1867 = vunpack.c.h.b16 %v499
    %v1868 = vunpack.c.l.b16 %v500
    %v1869 = vunpack.c.h.b16 %v500
    %v1870 = vunpack.c.l.b16 %v501
    %v1871 = vunpack.c.h.b16 %v501
    %v1872 = vunpack.c.l.b16 %v502
    %v1873 = vunpack.c.h.b16 %v502
    %v1874 = vunpack.c.l.b16 %v503
    %v1875 = vunpack.c.h.b16 %v503
    %v1876 = vunpack.c.l.b16 %v504
    %v1877 = vunpack.c.h.b16 %v504
    %v1878 = vunpack.c.l.b16 %v505
    %v1879 = vunpack.c.h.b16 %v505
    %v1880 = vunpack.c.l.b16 %v506
    %v1881 = vunpack.c.h.b16 %v506
    %v1882 = vunpack.c.l.b16 %v507
    %v1883 = vunpack.c.h.b16 %v507
    %v1884 = vunpack.c.l.b16 %v508
    %v1885 = vunpack.c.h.b16 %v508
    %v1886 = vunpack.c.l.b16 %v509
    %v1887 = vunpack.c.h.b16 %v509
    %v1888 = vunpack.c.l.b16 %v510
    %v1889 = vunpack.c.h.b16 %v510
    %v1890 = vunpack.c.l.b16 %v511
    %v1891 = vunpack.c.h.b16 %v511
    %v1892 = vunpack.c.l.b16 %v512
    %v1893 = vunpack.c.h.b16 %v512
    %v1894 = vunpack.c.l.b16 %v513
    %v1895 = vunpack.c.h.b16 %v513
    %v1896 = vunpack.c.l.b16 %v514
    %v1897 = vunpack.c.h.b16 %v514
    %v1898 = vunpack.c.l.b16 %v515
    %v1899 = vunpack.c.h.b16 %v515
    %v1900 = vunpack.c.l.b16 %v516
    %v1901 = vunpack.c.h.b16 %v516
    %v1902 = vunpack.c.l.b16 %v517
    %v1903 = vunpack.c.h.b16 %v517
    %v1904 = vunpack.c.l.b16 %v518
    %v1905 = vunpack.c.h.b16 %v518
    %v1906 = vunpack.c.l.b16 %v519
    %v1907 = vunpack.c.h.b16 %v519
    %v1908 = vunpack.c.l.b16 %v520
    %v1909 = vunpack.c.h.b16 %v520
    %v1910 = vunpack.c.l.b16 %v521
    %v1911 = vunpack.c.h.b16 %v521
    %v1912 = vunpack.c.l.b16 %v522
    %v1913 = vunpack.c.h.b16 %v522
    %v1914 = vunpack.c.l.b16 %v523
    %v1915 = vunpack.c.h.b16 %v523
    %v1916 = vunpack.c.l.b16 %v524
    %v1917 = vunpack.c.h.b16 %v524
    %v1918 = vunpack.c.l.b16 %v525
    %v1919 = vunpack.c.h.b16 %v525
    %v1920 = vunpack.c.l.b16 %v526
    %v1921 = vunpack.c.h.b16 %v526
    %v1922 = vunpack.c.l.b16 %v527
    %v1923 = vunpack.c.h.b16 %v527
    %v1924 = vunpack.c.l.b16 %v528
    %v1925 = vunpack.c.h.b16 %v528
    %v1926 = vunpack.c.l.b16 %v529
    %v1927 = vunpack.c.h.b16 %v529
    %v1928 = vunpack.c.l.b16 %v530
    %v1929 = vunpack.c.h.b16 %v530
    %v1930 = vunpack.c.l.b16 %v531
    %v1931 = vunpack.c.h.b16 %v531
    %v1932 = vunpack.c.l.b16 %v532
    %v1933 = vunpack.c.h.b16 %v532
    %v1934 = vunpack.c.l.b16 %v533
    %v1935 = vunpack.c.h.b16 %v533
    %v1936 = vunpack.c.l.b16 %v534
    %v1937 = vunpack.c.h.b16 %v534
    %v1938 = vunpack.c.l.b16 %v535
    %v1939 = vunpack.c.h.b16 %v535
    %v1940 = vunpack.c.l.b16 %v536
    %v1941 = vunpack.c.h.b16 %v536
    %v1942 = vunpack.c.l.b16 %v537
    %v1943 = vunpack.c.h.b16 %v537
    %v1944 = vunpack.c.l.b16 %v538
    %v1945 = vunpack.c.h.b16 %v538
    %v1946 = vunpack.c.l.b16 %v539
    %v1947 = vunpack.c.h.b16 %v539
    %v1948 = vunpack.c.l.b16 %v540
    %v1949 = vunpack.c.h.b16 %v540
    %v1950 = vunpack.c.l.b16 %v541
    %v1951 = vunpack.c.h.b16 %v541
    %v1952 = vunpack.c.l.b16 %v542
    %v1953 = vunpack.c.h.b16 %v542
    %v1954 = vunpack.c.l.b16 %v543
    %v1955 = vunpack.c.h.b16 %v543
    %v1956 = vunpack.c.l.b16 %v544
    %v1957 = vunpack.c.h.b16 %v544
    %v1958 = vunpack.c.l.b16 %v545
    %v1959 = vunpack.c.h.b16 %v545
    %v1960 = vunpack.c.l.b16 %v546
    %v1961 = vunpack.c.h.b16 %v546
    %v1962 = vunpack.c.l.b16 %v547
    %v1963 = vunpack.c.h.b16 %v547
    %v1964 = vunpack.c.l.b16 %v548
    %v1965 = vunpack.c.h.b16 %v548
    %v1966 = vunpack.c.l.b16 %v549
    %v1967 = vunpack.c.h.b16 %v549
    %v1968 = vunpack.c.l.b16 %v550
    %v1969 = vunpack.c.h.b16 %v550
    %v1970 = vunpack.c.l.b16 %v551
    %v1971 = vunpack.c.h.b16 %v551
    %v1972 = vunpack.c.l.b16 %v552
    %v1973 = vunpack.c.h.b16 %v552
    %v1974 = vunpack.c.l.b16 %v553
    %v1975 = vunpack.c.h.b16 %v553
    %v1976 = vunpack.c.l.b16 %v554
    %v1977 = vunpack.c.h.b16 %v554
    %v1978 = vunpack.c.l.b16 %v555
    %v1979 = vunpack.c.h.b16 %v555
    %v1980 = vunpack.c.l.b16 %v556
    %v1981 = vunpack.c.h.b16 %v556
    %v1982 = vunpack.c.l.b16 %v557
    %v1983 = vunpack.c.h.b16 %v557
    %v1984 = vunpack.c.l.b16 %v558
    %v1985 = vunpack.c.h.b16 %v558
    %v1986 = vunpack.c.l.b16 %v559
    %v1987 = vunpack.c.h.b16 %v559
    %v1988 = vunpack.c.l.b16 %v560
    %v1989 = vunpack.c.h.b16 %v560
    %v1990 = vunpack.c.l.b16 %v561
    %v1991 = vunpack.c.h.b16 %v561
    %v1992 = vunpack.c.l.b16 %v562
    %v1993 = vunpack.c.h.b16 %v562
    %v1994 = vunpack.c.l.b16 %v563
    %v1995 = vunpack.c.h.b16 %v563
    %v1996 = vunpack.c.l.b16 %v564
    %v1997 = vunpack.c.h.b16 %v564
    %v1998 = vunpack.c.l.b16 %v565
    %v1999 = vunpack.c.h.b16 %v565
    %v2000 = vunpack.c.l.b16 %v566
    %v2001 = vunpack.c.h.b16 %v566
    %v2002 = vunpack.c.l.b16 %v567
    %v2003 = vunpack.c.h.b16 %v567
    %v2004 = vunpack.c.l.b16 %v568
    %v2005 = vunpack.c.h.b16 %v568
    %v2006 = vunpack.c.l.b16 %v569
    %v2007 = vunpack.c.h.b16 %v569
    %v2008 = vunpack.c.l.b16 %v570
    %v2009 = vunpack.c.h.b16 %v570
    %v2010 = vunpack.c.l.b16 %v571
    %v2011 = vunpack.c.h.b16 %v571
    %v2012 = vunpack.c.l.b16 %v572
    %v2013 = vunpack.c.h.b16 %v572
    %v2014 = vunpack.c.l.b16 %v573
    %v2015 = vunpack.c.h.b16 %v573
    %v2016 = vunpack.c.l.b16 %v574
    %v2017 = vunpack.c.h.b16 %v574
    %v2018 = vunpack.c.l.b16 %v575
    %v2019 = vunpack.c.h.b16 %v575
    %v2020 = vunpack.c.l.b16 %v576
    %v2021 = vunpack.c.h.b16 %v576
    %v2022 = vunpack.c.l.b16 %v577
    %v2023 = vunpack.c.h.b16 %v577
    %v2024 = vunpack.c.l.b16 %v578
    %v2025 = vunpack.c.h.b16 %v578
    %v2026 = vunpack.c.l.b16 %v579
    %v2027 = vunpack.c.h.b16 %v579
    %v2028 = vunpack.c.l.b16 %v580
    %v2029 = vunpack.c.h.b16 %v580
    %v2030 = vunpack.c.l.b16 %v581
    %v2031 = vunpack.c.h.b16 %v581
    %v2032 = vunpack.c.l.b16 %v582
    %v2033 = vunpack.c.h.b16 %v582
    %v2034 = vunpack.c.l.b16 %v583
    %v2035 = vunpack.c.h.b16 %v583
    %v2036 = vunpack.c.l.b16 %v584
    %v2037 = vunpack.c.h.b16 %v584
    %v2038 = vunpack.c.l.b16 %v585
    %v2039 = vunpack.c.h.b16 %v585
    %v2040 = vunpack.c.l.b16 %v586
    %v2041 = vunpack.c.h.b16 %v586
    %v2042 = vunpack.c.l.b16 %v587
    %v2043 = vunpack.c.h.b16 %v587
    %v2044 = vunpack.c.l.b16 %v588
    %v2045 = vunpack.c.h.b16 %v588
    %v2046 = vunpack.c.l.b16 %v589
    %v2047 = vunpack.c.h.b16 %v589
    %v2048 = vunpack.c.l.b16 %v590
    %v2049 = vunpack.c.h.b16 %v590
    %v2050 = vunpack.c.l.b16 %v591
    %v2051 = vunpack.c.h.b16 %v591
    %v2052 = vunpack.c.l.b16 %v592
    %v2053 = vunpack.c.h.b16 %v592
    %v2054 = vunpack.c.l.b16 %v593
    %v2055 = vunpack.c.h.b16 %v593
    %v2056 = vunpack.c.l.b16 %v594
    %v2057 = vunpack.c.h.b16 %v594
    %v2058 = vunpack.c.l.b16 %v595
    %v2059 = vunpack.c.h.b16 %v595
    %v2060 = vunpack.c.l.b16 %v596
    %v2061 = vunpack.c.h.b16 %v596
    %v2062 = vunpack.c.l.b16 %v597
    %v2063 = vunpack.c.h.b16 %v597
    %v2064 = vunpack.c.l.b16 %v598
    %v2065 = vunpack.c.h.b16 %v598
    %v2066 = vunpack.c.l.b16 %v599
    %v2067 = vunpack.c.h.b16 %v599
    %v2068 = vunpack.c.l.b16 %v600
    %v2069 = vunpack.c.h.b16 %v600
    %v2070 = vunpack.c.l.b16 %v601
    %v2071 = vunpack.c.h.b16 %v601
    %v2072 = vunpack.c.l.b16 %v602
    %v2073 = vunpack.c.h.b16 %v602
    %v2074 = vunpack.c.l.b16 %v603
    %v2075 = vunpack.c.h.b16 %v603
    %v2076 = vunpack.c.l.b16 %v604
    %v2077 = vunpack.c.h.b16 %v604
    %v2078 = vunpack.c.l.b16 %v605
    %v2079 = vunpack.c.h.b16 %v605
    %v2080 = vunpack.c.l.b16 %v606
    %v2081 = vunpack.c.h.b16 %v606
    %v2082 = vunpack.c.l.b16 %v607
    %v2083 = vunpack.c.h.b16 %v607
    %v2084 = vunpack.c.l.b16 %v608
    %v2085 = vunpack.c.h.b16 %v608
    %v2086 = vunpack.c.l.b16 %v609
    %v2087 = vunpack.c.h.b16 %v609
    %v2088 = vunpack.c.l.b16 %v610
    %v2089 = vunpack.c.h.b16 %v610
    %v2090 = vunpack.c.l.b16 %v611
    %v2091 = vunpack.c.h.b16 %v611
    %v2092 = vunpack.c.l.b16 %v612
    %v2093 = vunpack.c.h.b16 %v612
    %v2094 = vunpack.c.l.b16 %v613
    %v2095 = vunpack.c.h.b16 %v613
    %v2096 = vunpack.c.l.b16 %v614
    %v2097 = vunpack.c.h.b16 %v614
    %v2098 = vunpack.c.l.b16 %v615
    %v2099 = vunpack.c.h.b16 %v615
    %v2100 = vunpack.c.l.b16 %v616
    %v2101 = vunpack.c.h.b16 %v616
    %v2102 = vunpack.c.l.b16 %v617
    %v2103 = vunpack.c.h.b16 %v617
    %v2104 = vunpack.c.l.b16 %v618
    %v2105 = vunpack.c.h.b16 %v618
    %v2106 = vunpack.c.l.b16 %v619
    %v2107 = vunpack.c.h.b16 %v619
    %v2108 = vunpack.c.l.b16 %v620
    %v2109 = vunpack.c.h.b16 %v620
    %v2110 = vunpack.c.l.b16 %v621
    %v2111 = vunpack.c.h.b16 %v621
    %v2112 = vunpack.c.l.b16 %v622
    %v2113 = vunpack.c.h.b16 %v622
    %v2114 = vunpack.c.l.b16 %v623
    %v2115 = vunpack.c.h.b16 %v623
    %v2116 = vunpack.c.l.b16 %v624
    %v2117 = vunpack.c.h.b16 %v624
    %v2118 = vunpack.c.l.b16 %v625
    %v2119 = vunpack.c.h.b16 %v625
    %v2120 = vunpack.c.l.b16 %v626
    %v2121 = vunpack.c.h.b16 %v626
    %v2122 = vunpack.c.l.b16 %v627
    %v2123 = vunpack.c.h.b16 %v627
    %v2124 = vunpack.c.l.b16 %v628
    %v2125 = vunpack.c.h.b16 %v628
    %v2126 = vunpack.c.l.b16 %v629
    %v2127 = vunpack.c.h.b16 %v629
    %v2128 = vunpack.c.l.b16 %v630
    %v2129 = vunpack.c.h.b16 %v630
    %v2130 = vunpack.c.l.b16 %v631
    %v2131 = vunpack.c.h.b16 %v631
    %v2132 = vunpack.c.l.b16 %v632
    %v2133 = vunpack.c.h.b16 %v632
    %v2134 = vunpack.c.l.b16 %v633
    %v2135 = vunpack.c.h.b16 %v633
    %v2136 = vunpack.c.l.b16 %v634
    %v2137 = vunpack.c.h.b16 %v634
    %v2138 = vunpack.c.l.b16 %v635
    %v2139 = vunpack.c.h.b16 %v635
    %v2140 = vunpack.c.l.b16 %v636
    %v2141 = vunpack.c.h.b16 %v636
    %v2142 = vunpack.c.l.b16 %v637
    %v2143 = vunpack.c.h.b16 %v637
    %v2144 = vunpack.c.l.b16 %v638
    %v2145 = vunpack.c.h.b16 %v638
    %v2146 = vunpack.c.l.b16 %v639
    %v2147 = vunpack.c.h.b16 %v639
    %v2148 = vunpack.c.l.b16 %v640
    %v2149 = vunpack.c.h.b16 %v640
    %v2150 = vunpack.c.l.b16 %v641
    %v2151 = vunpack.c.h.b16 %v641
    %v2152 = vunpack.c.l.b16 %v642
    %v2153 = vunpack.c.h.b16 %v642
    %v2154 = vunpack.c.l.b16 %v643
    %v2155 = vunpack.c.h.b16 %v643
    %v2156 = vunpack.c.l.b16 %v644
    %v2157 = vunpack.c.h.b16 %v644
    %v2158 = vunpack.c.l.b16 %v645
    %v2159 = vunpack.c.h.b16 %v645
    %v2160 = vunpack.c.l.b16 %v646
    %v2161 = vunpack.c.h.b16 %v646
    %v2162 = vunpack.c.l.b16 %v647
    %v2163 = vunpack.c.h.b16 %v647
    %v2164 = vunpack.c.l.b16 %v648
    %v2165 = vunpack.c.h.b16 %v648
    %v2166 = vunpack.c.l.b16 %v649
    %v2167 = vunpack.c.h.b16 %v649
    %v2168 = vunpack.c.l.b16 %v650
    %v2169 = vunpack.c.h.b16 %v650
    %v2170 = vunpack.c.l.b16 %v651
    %v2171 = vunpack.c.h.b16 %v651
    %v2172 = vunpack.c.l.b16 %v652
    %v2173 = vunpack.c.h.b16 %v652
    %v2174 = vunpack.c.l.b16 %v653
    %v2175 = vunpack.c.h.b16 %v653
    %v2176 = vunpack.c.l.b16 %v654
    %v2177 = vunpack.c.h.b16 %v654
    %v2178 = vunpack.c.l.b16 %v655
    %v2179 = vunpack.c.h.b16 %v655
    %v2180 = vunpack.c.l.b16 %v656
    %v2181 = vunpack.c.h.b16 %v656
    %v2182 = vunpack.c.l.b16 %v657
    %v2183 = vunpack.c.h.b16 %v657
    %v2184 = vunpack.c.l.b16 %v658
    %v2185 = vunpack.c.h.b16 %v658
    %v2186 = vunpack.c.l.b16 %v659
    %v2187 = vunpack.c.h.b16 %v659
    %v2188 = vunpack.c.l.b16 %v660
    %v2189 = vunpack.c.h.b16 %v660
    %v2190 = vunpack.c.l.b16 %v661
    %v2191 = vunpack.c.h.b16 %v661
    %v2192 = vunpack.c.l.b16 %v662
    %v2193 = vunpack.c.h.b16 %v662
    %v2194 = vunpack.c.l.b16 %v663
    %v2195 = vunpack.c.h.b16 %v663
    %v2196 = vunpack.c.l.b16 %v664
    %v2197 = vunpack.c.h.b16 %v664
    %v2198 = vunpack.c.l.b16 %v665
    %v2199 = vunpack.c.h.b16 %v665
    %v2200 = vunpack.c.l.b16 %v666
    %v2201 = vunpack.c.h.b16 %v666
    %v2202 = vunpack.c.l.b16 %v667
    %v2203 = vunpack.c.h.b16 %v667
    %v2204 = vunpack.c.l.b16 %v668
    %v2205 = vunpack.c.h.b16 %v668
    %v2206 = vunpack.c.l.b16 %v669
    %v2207 = vunpack.c.h.b16 %v669
    %v2208 = vunpack.c.l.b16 %v670
    %v2209 = vunpack.c.h.b16 %v670
    %v2210 = vunpack.c.l.b16 %v671
    %v2211 = vunpack.c.h.b16 %v671
    %v2212 = vunpack.c.l.b16 %v672
    %v2213 = vunpack.c.h.b16 %v672
    %v2214 = vunpack.c.l.b16 %v673
    %v2215 = vunpack.c.h.b16 %v673
    %v2216 = vunpack.c.l.b16 %v674
    %v2217 = vunpack.c.h.b16 %v674
    %v2218 = vunpack.c.l.b16 %v675
    %v2219 = vunpack.c.h.b16 %v675
    %v2220 = vunpack.c.l.b16 %v676
    %v2221 = vunpack.c.h.b16 %v676
    %v2222 = vunpack.c.l.b16 %v677
    %v2223 = vunpack.c.h.b16 %v677
    %v2224 = vunpack.c.l.b16 %v678
    %v2225 = vunpack.c.h.b16 %v678
    %v2226 = vunpack.c.l.b16 %v679
    %v2227 = vunpack.c.h.b16 %v679
    %v2228 = vunpack.c.l.b16 %v680
    %v2229 = vunpack.c.h.b16 %v680
    %v2230 = vunpack.c.l.b16 %v681
    %v2231 = vunpack.c.h.b16 %v681
    %v2232 = vunpack.c.l.b16 %v682
    %v2233 = vunpack.c.h.b16 %v682
    %v2234 = vunpack.c.l.b16 %v683
    %v2235 = vunpack.c.h.b16 %v683
    %v2236 = vunpack.c.l.b16 %v684
    %v2237 = vunpack.c.h.b16 %v684
    %v2238 = vunpack.c.l.b16 %v685
    %v2239 = vunpack.c.h.b16 %v685
    %v2240 = vunpack.c.l.b16 %v686
    %v2241 = vunpack.c.h.b16 %v686
    %v2242 = vunpack.c.l.b16 %v687
    %v2243 = vunpack.c.h.b16 %v687
    %v2244 = vunpack.c.l.b16 %v688
    %v2245 = vunpack.c.h.b16 %v688
    %v2246 = vunpack.c.l.b16 %v689
    %v2247 = vunpack.c.h.b16 %v689
    %v2248 = vunpack.c.l.b16 %v690
    %v2249 = vunpack.c.h.b16 %v690
    %v2250 = vunpack.c.l.b16 %v691
    %v2251 = vunpack.c.h.b16 %v691
    %v2252 = vunpack.c.l.b16 %v692
    %v2253 = vunpack.c.h.b16 %v692
    %v2254 = vunpack.c.l.b16 %v693
    %v2255 = vunpack.c.h.b16 %v693
    %v2256 = vunpack.c.l.b16 %v694
    %v2257 = vunpack.c.h.b16 %v694
    %v2258 = vunpack.c.l.b16 %v695
    %v2259 = vunpack.c.h.b16 %v695
    %v2260 = vunpack.c.l.b16 %v696
    %v2261 = vunpack.c.h.b16 %v696
    %v2262 = vunpack.c.l.b16 %v697
    %v2263 = vunpack.c.h.b16 %v697
    %v2264 = vunpack.c.l.b16 %v698
    %v2265 = vunpack.c.h.b16 %v698
    %v2266 = vunpack.c.l.b16 %v699
    %v2267 = vunpack.c.h.b16 %v699
    %v2268 = vunpack.c.l.b16 %v700
    %v2269 = vunpack.c.h.b16 %v700
    %v2270 = vunpack.c.l.b16 %v701
    %v2271 = vunpack.c.h.b16 %v701
    %v2272 = vunpack.c.l.b16 %v702
    %v2273 = vunpack.c.h.b16 %v702
    %v2274 = vunpack.c.l.b16 %v703
    %v2275 = vunpack.c.h.b16 %v703
    %v2276 = vunpack.c.l.b16 %v704
    %v2277 = vunpack.c.h.b16 %v704
    %v2278 = vunpack.c.l.b16 %v705
    %v2279 = vunpack.c.h.b16 %v705
    %v2280 = vunpack.c.l.b16 %v706
    %v2281 = vunpack.c.h.b16 %v706
    %v2282 = vunpack.c.l.b16 %v707
    %v2283 = vunpack.c.h.b16 %v707
    %v2284 = vunpack.c.l.b16 %v708
    %v2285 = vunpack.c.h.b16 %v708
    %v2286 = vunpack.c.l.b16 %v709
    %v2287 = vunpack.c.h.b16 %v709
    %v2288 = vunpack.c.l.b16 %v710
    %v2289 = vunpack.c.h.b16 %v710
    %v2290 = vunpack.c.l.b16 %v711
    %v2291 = vunpack.c.h.b16 %v711
    %v2292 = vunpack.c.l.b16 %v712
    %v2293 = vunpack.c.h.b16 %v712
    %v2294 = vunpack.c.l.b16 %v713
    %v2295 = vunpack.c.h.b16 %v713
    %v2296 = vpack.c.b16 %v1280, %v1272
    %v2297 = vpack.c.b16 %v1281, %v1273
    %v2298 = vpack.c.b16 %v1282, %v1274
    %v2299 = vpack.c.b16 %v1283, %v1275
    %v2300 = vpack.c.b16 %v1284, %v1276
    %v2301 = vpack.c.b16 %v1285, %v1277
    %v2302 = vpack.c.b16 %v1286, %v1278
    %v2303 = vpack.c.b16 %v1287, %v1279
    %v2304 = vpack.c.b16 %v1296, %v1288
    %v2305 = vpack.c.b16 %v1297, %v1289
    %v2306 = vpack.c.b16 %v1298, %v1290
    %v2307 = vpack.c.b16 %v1299, %v1291
    %v2308 = vpack.c.b16 %v1300, %v1292
    %v2309 = vpack.c.b16 %v1301, %v1293
    %v2310 = vpack.c.b16 %v1302, %v1294
    %v2311 = vpack.c.b16 %v1303, %v1295
    %v2312 = vpack.c.b16 %v1312, %v1304
    %v2313 = vpack.c.b16 %v1313, %v1305
    %v2314 = vpack.c.b16 %v1314, %v1306
    %v2315 = vpack.c.b16 %v1315, %v1307
    %v2316 = vpack.c.b16 %v1316, %v1308
    %v2317 = vpack.c.b16 %v1317, %v1309
    %v2318 = vpack.c.b16 %v1318, %v1310
    %v2319 = vpack.c.b16 %v1319, %v1311
    %v2320 = vpack.c.b16 %v1328, %v1320
    %v2321 = vpack.c.b16 %v1329, %v1321
    %v2322 = vpack.c.b16 %v1330, %v1322
    %v2323 = vpack.c.b16 %v1331, %v1323
    %v2324 = vpack.c.b16 %v1332, %v1324
    %v2325 = vpack.c.b16 %v1333, %v1325
    %v2326 = vpack.c.b16 %v1334, %v1326
    %v2327 = vpack.c.b16 %v1335, %v1327
    %v2328 = vpack.c.b16 %v1344, %v1336
    %v2329 = vpack.c.b16 %v1345, %v1337
    %v2330 = vpack.c.b16 %v1346, %v1338
    %v2331 = vpack.c.b16 %v1347, %v1339
    %v2332 = vpack.c.b16 %v1348, %v1340
    %v2333 = vpack.c.b16 %v1349, %v1341
    %v2334 = vpack.c.b16 %v1350, %v1342
    %v2335 = vpack.c.b16 %v1351, %v1343
    %v2336 = vpack.c.b16 %v1360, %v1352
    %v2337 = vpack.c.b16 %v1361, %v1353
    %v2338 = vpack.c.b16 %v1362, %v1354
    %v2339 = vpack.c.b16 %v1363, %v1355
    %v2340 = vpack.c.b16 %v1364, %v1356
    %v2341 = vpack.c.b16 %v1365, %v1357
    %v2342 = vpack.c.b16 %v1366, %v1358
    %v2343 = vpack.c.b16 %v1367, %v1359
    %v2344 = vpack.c.b16 %v1376, %v1368
    %v2345 = vpack.c.b16 %v1377, %v1369
    %v2346 = vpack.c.b16 %v1378, %v1370
    %v2347 = vpack.c.b16 %v1379, %v1371
    %v2348 = vpack.c.b16 %v1380, %v1372
    %v2349 = vpack.c.b16 %v1381, %v1373
    %v2350 = vpack.c.b16 %v1382, %v1374
    %v2351 = vpack.c.b16 %v1383, %v1375
    %v2352 = vpack.c.b16 %v1392, %v1384
    %v2353 = vpack.c.b16 %v1393, %v1385
    %v2354 = vpack.c.b16 %v1394, %v1386
    %v2355 = vpack.c.b16 %v1395, %v1387
    %v2356 = vpack.c.b16 %v1396, %v1388
    %v2357 = vpack.c.b16 %v1397, %v1389
    %v2358 = vpack.c.b16 %v1398, %v1390
    %v2359 = vpack.c.b16 %v1399, %v1391
    %v2360 = vpack.c.b16 %v1408, %v1400
    %v2361 = vpack.c.b16 %v1409, %v1401
    %v2362 = vpack.c.b16 %v1410, %v1402
    %v2363 = vpack.c.b16 %v1411, %v1403
    %v2364 = vpack.c.b16 %v1412, %v1404
    %v2365 = vpack.c.b16 %v1413, %v1405
    %v2366 = vpack.c.b16 %v1414, %v1406
    %v2367 = vpack.c.b16 %v1415, %v1407
    %v2368 = vpack.c.b16 %v1424, %v1416
    %v2369 = vpack.c.b16 %v1425, %v1417
    %v2370 = vpack.c.b16 %v1426, %v1418
    %v2371 = vpack.c.b16 %v1427, %v1419
    %v2372 = vpack.c.b16 %v1428, %v1420
    %v2373 = vpack.c.b16 %v1429, %v1421
    %v2374 = vpack.c.b16 %v1430, %v1422
    %v2375 = vpack.c.b16 %v1431, %v1423
    %v2376 = vpack.c.b16 %v1440, %v1432
    %v2377 = vpack.c.b16 %v1441, %v1433
    %v2378 = vpack.c.b16 %v1442, %v1434
    %v2379 = vpack.c.b16 %v1443, %v1435
    %v2380 = vpack.c.b16 %v1444, %v1436
    %v2381 = vpack.c.b16 %v1445, %v1437
    %v2382 = vpack.c.b16 %v1446, %v1438
    %v2383 = vpack.c.b16 %v1447, %v1439
    %v2384 = vpack.c.b16 %v1456, %v1448
    %v2385 = vpack.c.b16 %v1457, %v1449
    %v2386 = vpack.c.b16 %v1458, %v1450
    %v2387 = vpack.c.b16 %v1459, %v1451
    %v2388 = vpack.c.b16 %v1460, %v1452
    %v2389 = vpack.c.b16 %v1461, %v1453
    %v2390 = vpack.c.b16 %v1462, %v1454
    %v2391 = vpack.c.b16 %v1463, %v1455
    %v2392 = vpack.c.b16 %v1472, %v1464
    %v2393 = vpack.c.b16 %v1473, %v1465
    %v2394 = vpack.c.b16 %v1474, %v1466
    %v2395 = vpack.c.b16 %v1475, %v1467
    %v2396 = vpack.c.b16 %v1476, %v1468
    %v2397 = vpack.c.b16 %v1477, %v1469
    %v2398 = vpack.c.b16 %v1478, %v1470
    %v2399 = vpack.c.b16 %v1479, %v1471
    %v2400 = vpack.c.b16 %v1488, %v1480
    %v2401 = vpack.c.b16 %v1489, %v1481
    %v2402 = vpack.c.b16 %v1490, %v1482
    %v2403 = vpack.c.b16 %v1491, %v1483
    %v2404 = vpack.c.b16 %v1492, %v1484
    %v2405 = vpack.c.b16 %v1493, %v1485
    %v2406 = vpack.c.b16 %v1494, %v1486
    %v2407 = vpack.c.b16 %v1495, %v1487
    %v2408 = vpack.c.b16 %v1504, %v1496
    %v2409 = vpack.c.b16 %v1505, %v1497
    %v2410 = vpack.c.b16 %v1506, %v1498
    %v2411 = vpack.c.b16 %v1507, %v1499
    %v2412 = vpack.c.b16 %v1508, %v1500
    %v2413 = vpack.c.b16 %v1509, %v1501
    %v2414 = vpack.c.b16 %v1510, %v1502
    %v2415 = vpack.c.b16 %v1511, %v1503
    %v2416 = vpack.c.b16 %v1520, %v1512
    %v2417 = vpack.c.b16 %v1521, %v1513
    %v2418 = vpack.c.b16 %v1522, %v1514
    %v2419 = vpack.c.b16 %v1523, %v1515
    %v2420 = vpack.c.b16 %v1524, %v1516
    %v2421 = vpack.c.b16 %v1525, %v1517
    %v2422 = vpack.c.b16 %v1526, %v1518
    %v2423 = vpack.c.b16 %v1527, %v1519
    %v2424 = vpack.c.b16 %v1536, %v1528
    %v2425 = vpack.c.b16 %v1537, %v1529
    %v2426 = vpack.c.b16 %v1538, %v1530
    %v2427 = vpack.c.b16 %v1539, %v1531
    %v2428 = vpack.c.b16 %v1540, %v1532
    %v2429 = vpack.c.b16 %v1541, %v1533
    %v2430 = vpack.c.b16 %v1542, %v1534
    %v2431 = vpack.c.b16 %v1543, %v1535
    %v2432 = vpack.c.b16 %v1552, %v1544
    %v2433 = vpack.c.b16 %v1553, %v1545
    %v2434 = vpack.c.b16 %v1554, %v1546
    %v2435 = vpack.c.b16 %v1555, %v1547
    %v2436 = vpack.c.b16 %v1556, %v1548
    %v2437 = vpack.c.b16 %v1557, %v1549
    %v2438 = vpack.c.b16 %v1558, %v1550
    %v2439 = vpack.c.b16 %v1559, %v1551
    %v2440 = vpack.c.b16 %v1568, %v1560
    %v2441 = vpack.c.b16 %v1569, %v1561
    %v2442 = vpack.c.b16 %v1570, %v1562
    %v2443 = vpack.c.b16 %v1571, %v1563
    %v2444 = vpack.c.b16 %v1572, %v1564
    %v2445 = vpack.c.b16 %v1573, %v1565
    %v2446 = vpack.c.b16 %v1574, %v1566
    %v2447 = vpack.c.b16 %v1575, %v1567
    %v2448 = vpack.c.b16 %v1584, %v1576
    %v2449 = vpack.c.b16 %v1585, %v1577
    %v2450 = vpack.c.b16 %v1586, %v1578
    %v2451 = vpack.c.b16 %v1587, %v1579
    %v2452 = vpack.c.b16 %v1588, %v1580
    %v2453 = vpack.c.b16 %v1589, %v1581
    %v2454 = vpack.c.b16 %v1590, %v1582
    %v2455 = vpack.c.b16 %v1591, %v1583
    %v2456 = vpack.c.b16 %v1600, %v1592
    %v2457 = vpack.c.b16 %v1601, %v1593
    %v2458 = vpack.c.b16 %v1602, %v1594
    %v2459 = vpack.c.b16 %v1603, %v1595
    %v2460 = vpack.c.b16 %v1604, %v1596
    %v2461 = vpack.c.b16 %v1605, %v1597
    %v2462 = vpack.c.b16 %v1606, %v1598
    %v2463 = vpack.c.b16 %v1607, %v1599
    %v2464 = vpack.c.b16 %v1616, %v1608
    %v2465 = vpack.c.b16 %v1617, %v1609
    %v2466 = vpack.c.b16 %v1618, %v1610
    %v2467 = vpack.c.b16 %v1619, %v1611
    %v2468 = vpack.c.b16 %v1620, %v1612
    %v2469 = vpack.c.b16 %v1621, %v1613
    %v2470 = vpack.c.b16 %v1622, %v1614
    %v2471 = vpack.c.b16 %v1623, %v1615
    %v2472 = vpack.c.b16 %v1632, %v1624
    %v2473 = vpack.c.b16 %v1633, %v1625
    %v2474 = vpack.c.b16 %v1634, %v1626
    %v2475 = vpack.c.b16 %v1635, %v1627
    %v2476 = vpack.c.b16 %v1636, %v1628
    %v2477 = vpack.c.b16 %v1637, %v1629
    %v2478 = vpack.c.b16 %v1638, %v1630
    %v2479 = vpack.c.b16 %v1639, %v1631
    %v2480 = vpack.c.b16 %v1648, %v1640
    %v2481 = vpack.c.b16 %v1649, %v1641
    %v2482 = vpack.c.b16 %v1650, %v1642
    %v2483 = vpack.c.b16 %v1651, %v1643
    %v2484 = vpack.c.b16 %v1652, %v1644
    %v2485 = vpack.c.b16 %v1653, %v1645
    %v2486 = vpack.c.b16 %v1654, %v1646
    %v2487 = vpack.c.b16 %v1655, %v1647
    %v2488 = vpack.c.b16 %v1664, %v1656
    %v2489 = vpack.c.b16 %v1665, %v1657
    %v2490 = vpack.c.b16 %v1666, %v1658
    %v2491 = vpack.c.b16 %v1667, %v1659
    %v2492 = vpack.c.b16 %v1668, %v1660
    %v2493 = vpack.c.b16 %v1669, %v1661
    %v2494 = vpack.c.b16 %v1670, %v1662
    %v2495 = vpack.c.b16 %v1671, %v1663
    %v2496 = vpack.c.b16 %v1680, %v1672
    %v2497 = vpack.c.b16 %v1681, %v1673
    %v2498 = vpack.c.b16 %v1682, %v1674
    %v2499 = vpack.c.b16 %v1683, %v1675
    %v2500 = vpack.c.b16 %v1684, %v1676
    %v2501 = vpack.c.b16 %v1685, %v1677
    %v2502 = vpack.c.b16 %v1686, %v1678
    %v2503 = vpack.c.b16 %v1687, %v1679
    %v2504 = vpack.c.b16 %v1696, %v1688
    %v2505 = vpack.c.b16 %v1697, %v1689
    %v2506 = vpack.c.b16 %v1698, %v1690
    %v2507 = vpack.c.b16 %v1699, %v1691
    %v2508 = vpack.c.b16 %v1700, %v1692
    %v2509 = vpack.c.b16 %v1701, %v1693
    %v2510 = vpack.c.b16 %v1702, %v1694
    %v2511 = vpack.c.b16 %v1703, %v1695
    %v2512 = vpack.c.b16 %v1712, %v1704
    %v2513 = vpack.c.b16 %v1713, %v1705
    %v2514 = vpack.c.b16 %v1714, %v1706
    %v2515 = vpack.c.b16 %v1715, %v1707
    %v2516 = vpack.c.b16 %v1716, %v1708
    %v2517 = vpack.c.b16 %v1717, %v1709
    %v2518 = vpack.c.b16 %v1718, %v1710
    %v2519 = vpack.c.b16 %v1719, %v1711
    %v2520 = vpack.c.b16 %v1728, %v1720
    %v2521 = vpack.c.b16 %v1729, %v1721
    %v2522 = vpack.c.b16 %v1730, %v1722
    %v2523 = vpack.c.b16 %v1731, %v1723
    %v2524 = vpack.c.b16 %v1732, %v1724
    %v2525 = vpack.c.b16 %v1733, %v1725
    %v2526 = vpack.c.b16 %v1734, %v1726
    %v2527 = vpack.c.b16 %v1735, %v1727
    %v2528 = vpack.c.b16 %v1744, %v1736
    %v2529 = vpack.c.b16 %v1745, %v1737
    %v2530 = vpack.c.b16 %v1746, %v1738
    %v2531 = vpack.c.b16 %v1747, %v1739
    %v2532 = vpack.c.b16 %v1748, %v1740
    %v2533 = vpack.c.b16 %v1749, %v1741
    %v2534 = vpack.c.b16 %v1750, %v1742
    %v2535 = vpack.c.b16 %v1751, %v1743
    %v2536 = vpack.c.b16 %v1760, %v1752
    %v2537 = vpack.c.b16 %v1761, %v1753
    %v2538 = vpack.c.b16 %v1762, %v1754
    %v2539 = vpack.c.b16 %v1763, %v1755
    %v2540 = vpack.c.b16 %v1764, %v1756
    %v2541 = vpack.c.b16 %v1765, %v1757
    %v2542 = vpack.c.b16 %v1766, %v1758
    %v2543 = vpack.c.b16 %v1767, %v1759
    %v2544 = vpack.c.b16 %v1776, %v1768
    %v2545 = vpack.c.b16 %v1777, %v1769
    %v2546 = vpack.c.b16 %v1778, %v1770
    %v2547 = vpack.c.b16 %v1779, %v1771
    %v2548 = vpack.c.b16 %v1780, %v1772
    %v2549 = vpack.c.b16 %v1781, %v1773
    %v2550 = vpack.c.b16 %v1782, %v1774
    %v2551 = vpack.c.b16 %v1783, %v1775
    %v2552 = vpack.c.b16 %v1792, %v1784
    %v2553 = vpack.c.b16 %v1793, %v1785
    %v2554 = vpack.c.b16 %v1794, %v1786
    %v2555 = vpack.c.b16 %v1795, %v1787
    %v2556 = vpack.c.b16 %v1796, %v1788
    %v2557 = vpack.c.b16 %v1797, %v1789
    %v2558 = vpack.c.b16 %v1798, %v1790
    %v2559 = vpack.c.b16 %v1799, %v1791
    %v2560 = vpack.c.b16 %v1808, %v1800
    %v2561 = vpack.c.b16 %v1809, %v1801
    %v2562 = vpack.c.b16 %v1810, %v1802
    %v2563 = vpack.c.b16 %v1811, %v1803
    %v2564 = vpack.c.b16 %v1812, %v1804
    %v2565 = vpack.c.b16 %v1813, %v1805
    %v2566 = vpack.c.b16 %v1814, %v1806
    %v2567 = vpack.c.b16 %v1815, %v1807
    %v2568 = vpack.c.b16 %v1824, %v1816
    %v2569 = vpack.c.b16 %v1825, %v1817
    %v2570 = vpack.c.b16 %v1826, %v1818
    %v2571 = vpack.c.b16 %v1827, %v1819
    %v2572 = vpack.c.b16 %v1828, %v1820
    %v2573 = vpack.c.b16 %v1829, %v1821
    %v2574 = vpack.c.b16 %v1830, %v1822
    %v2575 = vpack.c.b16 %v1831, %v1823
    %v2576 = vpack.c.b16 %v1840, %v1832
    %v2577 = vpack.c.b16 %v1841, %v1833
    %v2578 = vpack.c.b16 %v1842, %v1834
    %v2579 = vpack.c.b16 %v1843, %v1835
    %v2580 = vpack.c.b16 %v1844, %v1836
    %v2581 = vpack.c.b16 %v1845, %v1837
    %v2582 = vpack.c.b16 %v1846, %v1838
    %v2583 = vpack.c.b16 %v1847, %v1839
    %v2584 = vpack.c.b16 %v1856, %v1848
    %v2585 = vpack.c.b16 %v1857, %v1849
    %v2586 = vpack.c.b16 %v1858, %v1850
    %v2587 = vpack.c.b16 %v1859, %v1851
    %v2588 = vpack.c.b16 %v1860, %v1852
    %v2589 = vpack.c.b16 %v1861, %v1853
    %v2590 = vpack.c.b16 %v1862, %v1854
    %v2591 = vpack.c.b16 %v1863, %v1855
    %v2592 = vpack.c.b16 %v1872, %v1864
    %v2593 = vpack.c.b16 %v1873, %v1865
    %v2594 = vpack.c.b16 %v1874, %v1866
    %v2595 = vpack.c.b16 %v1875, %v1867
    %v2596 = vpack.c.b16 %v1876, %v1868
    %v2597 = vpack.c.b16 %v1877, %v1869
    %v2598 = vpack.c.b16 %v1878, %v1870
    %v2599 = vpack.c.b16 %v1879, %v1871
    %v2600 = vpack.c.b16 %v1888, %v1880
    %v2601 = vpack.c.b16 %v1889, %v1881
    %v2602 = vpack.c.b16 %v1890, %v1882
    %v2603 = vpack.c.b16 %v1891, %v1883
    %v2604 = vpack.c.b16 %v1892, %v1884
    %v2605 = vpack.c.b16 %v1893, %v1885
    %v2606 = vpack.c.b16 %v1894, %v1886
    %v2607 = vpack.c.b16 %v1895, %v1887
    %v2608 = vpack.c.b16 %v1904, %v1896
    %v2609 = vpack.c.b16 %v1905, %v1897
    %v2610 = vpack.c.b16 %v1906, %v1898
    %v2611 = vpack.c.b16 %v1907, %v1899
    %v2612 = vpack.c.b16 %v1908, %v1900
    %v2613 = vpack.c.b16 %v1909, %v1901
    %v2614 = vpack.c.b16 %v1910, %v1902
    %v2615 = vpack.c.b16 %v1911, %v1903
    %v2616 = vpack.c.b16 %v1920, %v1912
    %v2617 = vpack.c.b16 %v1921, %v1913
    %v2618 = vpack.c.b16 %v1922, %v1914
    %v2619 = vpack.c.b16 %v1923, %v1915
    %v2620 = vpack.c.b16 %v1924, %v1916
    %v2621 = vpack.c.b16 %v1925, %v1917
    %v2622 = vpack.c.b16 %v1926, %v1918
    %v2623 = vpack.c.b16 %v1927, %v1919
    %v2624 = vpack.c.b16 %v1936, %v1928
    %v2625 = vpack.c.b16 %v1937, %v1929
    %v2626 = vpack.c.b16 %v1938, %v1930
    %v2627 = vpack.c.b16 %v1939, %v1931
    %v2628 = vpack.c.b16 %v1940, %v1932
    %v2629 = vpack.c.b16 %v1941, %v1933
    %v2630 = vpack.c.b16 %v1942, %v1934
    %v2631 = vpack.c.b16 %v1943, %v1935
    %v2632 = vpack.c.b16 %v1952, %v1944
    %v2633 = vpack.c.b16 %v1953, %v1945
    %v2634 = vpack.c.b16 %v1954, %v1946
    %v2635 = vpack.c.b16 %v1955, %v1947
    %v2636 = vpack.c.b16 %v1956, %v1948
    %v2637 = vpack.c.b16 %v1957, %v1949
    %v2638 = vpack.c.b16 %v1958, %v1950
    %v2639 = vpack.c.b16 %v1959, %v1951
    %v2640 = vpack.c.b16 %v1968, %v1960
    %v2641 = vpack.c.b16 %v1969, %v1961
    %v2642 = vpack.c.b16 %v1970, %v1962
    %v2643 = vpack.c.b16 %v1971, %v1963
    %v2644 = vpack.c.b16 %v1972, %v1964
    %v2645 = vpack.c.b16 %v1973, %v1965
    %v2646 = vpack.c.b16 %v1974, %v1966
    %v2647 = vpack.c.b16 %v1975, %v1967
    %v2648 = vpack.c.b16 %v1984, %v1976
    %v2649 = vpack.c.b16 %v1985, %v1977
    %v2650 = vpack.c.b16 %v1986, %v1978
    %v2651 = vpack.c.b16 %v1987, %v1979
    %v2652 = vpack.c.b16 %v1988, %v1980
    %v2653 = vpack.c.b16 %v1989, %v1981
    %v2654 = vpack.c.b16 %v1990, %v1982
    %v2655 = vpack.c.b16 %v1991, %v1983
    %v2656 = vpack.c.b16 %v2000, %v1992
    %v2657 = vpack.c.b16 %v2001, %v1993
    %v2658 = vpack.c.b16 %v2002, %v1994
    %v2659 = vpack.c.b16 %v2003, %v1995
    %v2660 = vpack.c.b16 %v2004, %v1996
    %v2661 = vpack.c.b16 %v2005, %v1997
    %v2662 = vpack.c.b16 %v2006, %v1998
    %v2663 = vpack.c.b16 %v2007, %v1999
    %v2664 = vpack.c.b16 %v2016, %v2008
    %v2665 = vpack.c.b16 %v2017, %v2009
    %v2666 = vpack.c.b16 %v2018, %v2010
    %v2667 = vpack.c.b16 %v2019, %v2011
    %v2668 = vpack.c.b16 %v2020, %v2012
    %v2669 = vpack.c.b16 %v2021, %v2013
    %v2670 = vpack.c.b16 %v2022, %v2014
    %v2671 = vpack.c.b16 %v2023, %v2015
    %v2672 = vpack.c.b16 %v2032, %v2024
    %v2673 = vpack.c.b16 %v2033, %v2025
    %v2674 = vpack.c.b16 %v2034, %v2026
    %v2675 = vpack.c.b16 %v2035, %v2027
    %v2676 = vpack.c.b16 %v2036, %v2028
    %v2677 = vpack.c.b16 %v2037, %v2029
    %v2678 = vpack.c.b16 %v2038, %v2030
    %v2679 = vpack.c.b16 %v2039, %v2031
    %v2680 = vpack.c.b16 %v2048, %v2040
    %v2681 = vpack.c.b16 %v2049, %v2041
    %v2682 = vpack.c.b16 %v2050, %v2042
    %v2683 = vpack.c.b16 %v2051, %v2043
    %v2684 = vpack.c.b16 %v2052, %v2044
    %v2685 = vpack.c.b16 %v2053, %v2045
    %v2686 = vpack.c.b16 %v2054, %v2046
    %v2687 = vpack.c.b16 %v2055, %v2047
    %v2688 = vpack.c.b16 %v2064, %v2056
    %v2689 = vpack.c.b16 %v2065, %v2057
    %v2690 = vpack.c.b16 %v2066, %v2058
    %v2691 = vpack.c.b16 %v2067, %v2059
    %v2692 = vpack.c.b16 %v2068, %v2060
    %v2693 = vpack.c.b16 %v2069, %v2061
    %v2694 = vpack.c.b16 %v2070, %v2062
    %v2695 = vpack.c.b16 %v2071, %v2063
    %v2696 = vpack.c.b16 %v2080, %v2072
    %v2697 = vpack.c.b16 %v2081, %v2073
    %v2698 = vpack.c.b16 %v2082, %v2074
    %v2699 = vpack.c.b16 %v2083, %v2075
    %v2700 = vpack.c.b16 %v2084, %v2076
    %v2701 = vpack.c.b16 %v2085, %v2077
    %v2702 = vpack.c.b16 %v2086, %v2078
    %v2703 = vpack.c.b16 %v2087, %v2079
    %v2704 = vpack.c.b16 %v2096, %v2088
    %v2705 = vpack.c.b16 %v2097, %v2089
    %v2706 = vpack.c.b16 %v2098, %v2090
    %v2707 = vpack.c.b16 %v2099, %v2091
    %v2708 = vpack.c.b16 %v2100, %v2092
    %v2709 = vpack.c.b16 %v2101, %v2093
    %v2710 = vpack.c.b16 %v2102, %v2094
    %v2711 = vpack.c.b16 %v2103, %v2095
    %v2712 = vpack.c.b16 %v2112, %v2104
    %v2713 = vpack.c.b16 %v2113, %v2105
    %v2714 = vpack.c.b16 %v2114, %v2106
    %v2715 = vpack.c.b16 %v2115, %v2107
    %v2716 = vpack.c.b16 %v2116, %v2108
    %v2717 = vpack.c.b16 %v2117, %v2109
    %v2718 = vpack.c.b16 %v2118, %v2110
    %v2719 = vpack.c.b16 %v2119, %v2111
    %v2720 = vpack.c.b16 %v2128, %v2120
    %v2721 = vpack.c.b16 %v2129, %v2121
    %v2722 = vpack.c.b16 %v2130, %v2122
    %v2723 = vpack.c.b16 %v2131, %v2123
    %v2724 = vpack.c.b16 %v2132, %v2124
    %v2725 = vpack.c.b16 %v2133, %v2125
    %v2726 = vpack.c.b16 %v2134, %v2126
    %v2727 = vpack.c.b16 %v2135, %v2127
    %v2728 = vpack.c.b16 %v2144, %v2136
    %v2729 = vpack.c.b16 %v2145, %v2137
    %v2730 = vpack.c.b16 %v2146, %v2138
    %v2731 = vpack.c.b16 %v2147, %v2139
    %v2732 = vpack.c.b16 %v2148, %v2140
    %v2733 = vpack.c.b16 %v2149, %v2141
    %v2734 = vpack.c.b16 %v2150, %v2142
    %v2735 = vpack.c.b16 %v2151, %v2143
    %v2736 = vpack.c.b16 %v2160, %v2152
    %v2737 = vpack.c.b16 %v2161, %v2153
    %v2738 = vpack.c.b16 %v2162, %v2154
    %v2739 = vpack.c.b16 %v2163, %v2155
    %v2740 = vpack.c.b16 %v2164, %v2156
    %v2741 = vpack.c.b16 %v2165, %v2157
    %v2742 = vpack.c.b16 %v2166, %v2158
    %v2743 = vpack.c.b16 %v2167, %v2159
    %v2744 = vpack.c.b16 %v2176, %v2168
    %v2745 = vpack.c.b16 %v2177, %v2169
    %v2746 = vpack.c.b16 %v2178, %v2170
    %v2747 = vpack.c.b16 %v2179, %v2171
    %v2748 = vpack.c.b16 %v2180, %v2172
    %v2749 = vpack.c.b16 %v2181, %v2173
    %v2750 = vpack.c.b16 %v2182, %v2174
    %v2751 = vpack.c.b16 %v2183, %v2175
    %v2752 = vpack.c.b16 %v2192, %v2184
    %v2753 = vpack.c.b16 %v2193, %v2185
    %v2754 = vpack.c.b16 %v2194, %v2186
    %v2755 = vpack.c.b16 %v2195, %v2187
    %v2756 = vpack.c.b16 %v2196, %v2188
    %v2757 = vpack.c.b16 %v2197, %v2189
    %v2758 = vpack.c.b16 %v2198, %v2190
    %v2759 = vpack.c.b16 %v2199, %v2191
    %v2760 = vpack.c.b16 %v2208, %v2200
    %v2761 = vpack.c.b16 %v2209, %v2201
    %v2762 = vpack.c.b16 %v2210, %v2202
    %v2763 = vpack.c.b16 %v2211, %v2203
    %v2764 = vpack.c.b16 %v2212, %v2204
    %v2765 = vpack.c.b16 %v2213, %v2205
    %v2766 = vpack.c.b16 %v2214, %v2206
    %v2767 = vpack.c.b16 %v2215, %v2207
    %v2768 = vpack.c.b16 %v2224, %v2216
    %v2769 = vpack.c.b16 %v2225, %v2217
    %v2770 = vpack.c.b16 %v2226, %v2218
    %v2771 = vpack.c.b16 %v2227, %v2219
    %v2772 = vpack.c.b16 %v2228, %v2220
    %v2773 = vpack.c.b16 %v2229, %v2221
    %v2774 = vpack.c.b16 %v2230, %v2222
    %v2775 = vpack.c.b16 %v2231, %v2223
    %v2776 = vpack.c.b16 %v2240, %v2232
    %v2777 = vpack.c.b16 %v2241, %v2233
    %v2778 = vpack.c.b16 %v2242, %v2234
    %v2779 = vpack.c.b16 %v2243, %v2235
    %v2780 = vpack.c.b16 %v2244, %v2236
    %v2781 = vpack.c.b16 %v2245, %v2237
    %v2782 = vpack.c.b16 %v2246, %v2238
    %v2783 = vpack.c.b16 %v2247, %v2239
    %v2784 = vpack.c.b16 %v2256, %v2248
    %v2785 = vpack.c.b16 %v2257, %v2249
    %v2786 = vpack.c.b16 %v2258, %v2250
    %v2787 = vpack.c.b16 %v2259, %v2251
    %v2788 = vpack.c.b16 %v2260, %v2252
    %v2789 = vpack.c.b16 %v2261, %v2253
    %v2790 = vpack.c.b16 %v2262, %v2254
    %v2791 = vpack.c.b16 %v2263, %v2255
    %v2792 = vpack.c.b16 %v2272, %v2264
    %v2793 = vpack.c.b16 %v2273, %v2265
    %v2794 = vpack.c.b16 %v2274, %v2266
    %v2795 = vpack.c.b16 %v2275, %v2267
    %v2796 = vpack.c.b16 %v2276, %v2268
    %v2797 = vpack.c.b16 %v2277, %v2269
    %v2798 = vpack.c.b16 %v2278, %v2270
    %v2799 = vpack.c.b16 %v2279, %v2271
    %v2800 = vpack.c.b16 %v2288, %v2280
    %v2801 = vpack.c.b16 %v2289, %v2281
    %v2802 = vpack.c.b16 %v2290, %v2282
    %v2803 = vpack.c.b16 %v2291, %v2283
    %v2804 = vpack.c.b16 %v2292, %v2284
    %v2805 = vpack.c.b16 %v2293, %v2285
    %v2806 = vpack.c.b16 %v2294, %v2286
    %v2807 = vpack.c.b16 %v2295, %v2287
    %3320 = vmatpush.bf16.msra.mxu0 %v2352
    %3321 = vmatpush.bf16.msra.mxu0 %v2344
    %3322 = vmatpush.bf16.msra.mxu0 %v2336
    %3323 = vmatpush.bf16.msra.mxu0 %v2328
    %3324 = vmatpush.bf16.msra.mxu0 %v2320
    %3325 = vmatpush.bf16.msra.mxu0 %v2312
    %3326 = vmatpush.bf16.msra.mxu0 %v2304
    %3327 = vmatpush.bf16.msra.mxu0 %v2296
    %3328 = vmatmul.bf16.gmra.mxu0 %v744
    %v3329 = vpop.f32.mrf.mxu0
    %v3330 = vadd.f32 %v716, %v3329
    %v3331 = vpop.f32.mrf.mxu0
    %3332 = vdwg.mxu0
    %3333 = vmatpush.bf16.msra.mxu0 %v2416
    %3334 = vmatpush.bf16.msra.mxu0 %v2408
    %3335 = vmatpush.bf16.msra.mxu0 %v2400
    %3336 = vmatpush.bf16.msra.mxu0 %v2392
    %3337 = vmatpush.bf16.msra.mxu0 %v2384
    %3338 = vmatpush.bf16.msra.mxu0 %v2376
    %3339 = vmatpush.bf16.msra.mxu0 %v2368
    %3340 = vmatpush.bf16.msra.mxu0 %v2360
    %3341 = vmatmul.bf16.gmra.mxu0 %v745
    %v3342 = vpop.f32.mrf.mxu0
    %v3343 = vadd.f32 %v3330, %v3342
    %v3344 = vpop.f32.mrf.mxu0
    %3345 = vdwg.mxu0
    %3346 = vmatpush.bf16.msra.mxu0 %v2480
    %3347 = vmatpush.bf16.msra.mxu0 %v2472
    %3348 = vmatpush.bf16.msra.mxu0 %v2464
    %3349 = vmatpush.bf16.msra.mxu0 %v2456
    %3350 = vmatpush.bf16.msra.mxu0 %v2448
    %3351 = vmatpush.bf16.msra.mxu0 %v2440
    %3352 = vmatpush.bf16.msra.mxu0 %v2432
    %3353 = vmatpush.bf16.msra.mxu0 %v2424
    %3354 = vmatmul.bf16.gmra.mxu0 %v746
    %v3355 = vpop.f32.mrf.mxu0
    %v3356 = vadd.f32 %v3343, %v3355
    %v3357 = vpop.f32.mrf.mxu0
    %3358 = vdwg.mxu0
    %3359 = vmatpush.bf16.msra.mxu0 %v2544
    %3360 = vmatpush.bf16.msra.mxu0 %v2536
    %3361 = vmatpush.bf16.msra.mxu0 %v2528
    %3362 = vmatpush.bf16.msra.mxu0 %v2520
    %3363 = vmatpush.bf16.msra.mxu0 %v2512
    %3364 = vmatpush.bf16.msra.mxu0 %v2504
    %3365 = vmatpush.bf16.msra.mxu0 %v2496
    %3366 = vmatpush.bf16.msra.mxu0 %v2488
    %3367 = vmatmul.bf16.gmra.mxu0 %v747
    %v3368 = vpop.f32.mrf.mxu0
    %v3369 = vadd.f32 %v3356, %v3368
    %v3370 = vpop.f32.mrf.mxu0
    %3371 = vdwg.mxu0
    %3372 = vmatpush.bf16.msra.mxu0 %v2608
    %3373 = vmatpush.bf16.msra.mxu0 %v2600
    %3374 = vmatpush.bf16.msra.mxu0 %v2592
    %3375 = vmatpush.bf16.msra.mxu0 %v2584
    %3376 = vmatpush.bf16.msra.mxu0 %v2576
    %3377 = vmatpush.bf16.msra.mxu0 %v2568
    %3378 = vmatpush.bf16.msra.mxu0 %v2560
    %3379 = vmatpush.bf16.msra.mxu0 %v2552
    %3380 = vmatmul.bf16.gmra.mxu0 %v748
    %v3381 = vpop.f32.mrf.mxu0
    %v3382 = vadd.f32 %v3369, %v3381
    %v3383 = vpop.f32.mrf.mxu0
    %3384 = vdwg.mxu0
    %3385 = vmatpush.bf16.msra.mxu0 %v2672
    %3386 = vmatpush.bf16.msra.mxu0 %v2664
    %3387 = vmatpush.bf16.msra.mxu0 %v2656
    %3388 = vmatpush.bf16.msra.mxu0 %v2648
    %3389 = vmatpush.bf16.msra.mxu0 %v2640
    %3390 = vmatpush.bf16.msra.mxu0 %v2632
    %3391 = vmatpush.bf16.msra.mxu0 %v2624
    %3392 = vmatpush.bf16.msra.mxu0 %v2616
    %3393 = vmatmul.bf16.gmra.mxu0 %v749
    %v3394 = vpop.f32.mrf.mxu0
    %v3395 = vadd.f32 %v3382, %v3394
    %v3396 = vpop.f32.mrf.mxu0
    %3397 = vdwg.mxu0
    %3398 = vmatpush.bf16.msra.mxu0 %v2736
    %3399 = vmatpush.bf16.msra.mxu0 %v2728
    %3400 = vmatpush.bf16.msra.mxu0 %v2720
    %3401 = vmatpush.bf16.msra.mxu0 %v2712
    %3402 = vmatpush.bf16.msra.mxu0 %v2704
    %3403 = vmatpush.bf16.msra.mxu0 %v2696
    %3404 = vmatpush.bf16.msra.mxu0 %v2688
    %3405 = vmatpush.bf16.msra.mxu0 %v2680
    %3406 = vmatmul.bf16.gmra.mxu0 %v750
    %v3407 = vpop.f32.mrf.mxu0
    %v3408 = vadd.f32 %v3395, %v3407
    %v3409 = vpop.f32.mrf.mxu0
    %3410 = vdwg.mxu0
    %3411 = vmatpush.bf16.msra.mxu0 %v2800
    %3412 = vmatpush.bf16.msra.mxu0 %v2792
    %3413 = vmatpush.bf16.msra.mxu0 %v2784
    %3414 = vmatpush.bf16.msra.mxu0 %v2776
    %3415 = vmatpush.bf16.msra.mxu0 %v2768
    %3416 = vmatpush.bf16.msra.mxu0 %v2760
    %3417 = vmatpush.bf16.msra.mxu0 %v2752
    %3418 = vmatpush.bf16.msra.mxu0 %v2744
    %3419 = vmatmul.bf16.gmra.mxu0 %v751
    %v3420 = vpop.f32.mrf.mxu0
    %v3421 = vadd.f32 %v3408, %v3420
    %v3422 = vpop.f32.mrf.mxu0
    %3423 = vdwg.mxu0
    %3424 = vmatpush.bf16.msra.mxu0 %v2353
    %3425 = vmatpush.bf16.msra.mxu0 %v2345
    %3426 = vmatpush.bf16.msra.mxu0 %v2337
    %3427 = vmatpush.bf16.msra.mxu0 %v2329
    %3428 = vmatpush.bf16.msra.mxu0 %v2321
    %3429 = vmatpush.bf16.msra.mxu0 %v2313
    %3430 = vmatpush.bf16.msra.mxu0 %v2305
    %3431 = vmatpush.bf16.msra.mxu0 %v2297
    %3432 = vmatmul.bf16.gmra.mxu0 %v744
    %v3433 = vpop.f32.mrf.mxu0
    %v3434 = vadd.f32 %v717, %v3433
    %v3435 = vpop.f32.mrf.mxu0
    %3436 = vdwg.mxu0
    %3437 = vmatpush.bf16.msra.mxu0 %v2417
    %3438 = vmatpush.bf16.msra.mxu0 %v2409
    %3439 = vmatpush.bf16.msra.mxu0 %v2401
    %3440 = vmatpush.bf16.msra.mxu0 %v2393
    %3441 = vmatpush.bf16.msra.mxu0 %v2385
    %3442 = vmatpush.bf16.msra.mxu0 %v2377
    %3443 = vmatpush.bf16.msra.mxu0 %v2369
    %3444 = vmatpush.bf16.msra.mxu0 %v2361
    %3445 = vmatmul.bf16.gmra.mxu0 %v745
    %v3446 = vpop.f32.mrf.mxu0
    %v3447 = vadd.f32 %v3434, %v3446
    %v3448 = vpop.f32.mrf.mxu0
    %3449 = vdwg.mxu0
    %3450 = vmatpush.bf16.msra.mxu0 %v2481
    %3451 = vmatpush.bf16.msra.mxu0 %v2473
    %3452 = vmatpush.bf16.msra.mxu0 %v2465
    %3453 = vmatpush.bf16.msra.mxu0 %v2457
    %3454 = vmatpush.bf16.msra.mxu0 %v2449
    %3455 = vmatpush.bf16.msra.mxu0 %v2441
    %3456 = vmatpush.bf16.msra.mxu0 %v2433
    %3457 = vmatpush.bf16.msra.mxu0 %v2425
    %3458 = vmatmul.bf16.gmra.mxu0 %v746
    %v3459 = vpop.f32.mrf.mxu0
    %v3460 = vadd.f32 %v3447, %v3459
    %v3461 = vpop.f32.mrf.mxu0
    %3462 = vdwg.mxu0
    %3463 = vmatpush.bf16.msra.mxu0 %v2545
    %3464 = vmatpush.bf16.msra.mxu0 %v2537
    %3465 = vmatpush.bf16.msra.mxu0 %v2529
    %3466 = vmatpush.bf16.msra.mxu0 %v2521
    %3467 = vmatpush.bf16.msra.mxu0 %v2513
    %3468 = vmatpush.bf16.msra.mxu0 %v2505
    %3469 = vmatpush.bf16.msra.mxu0 %v2497
    %3470 = vmatpush.bf16.msra.mxu0 %v2489
    %3471 = vmatmul.bf16.gmra.mxu0 %v747
    %v3472 = vpop.f32.mrf.mxu0
    %v3473 = vadd.f32 %v3460, %v3472
    %v3474 = vpop.f32.mrf.mxu0
    %3475 = vdwg.mxu0
    %3476 = vmatpush.bf16.msra.mxu0 %v2609
    %3477 = vmatpush.bf16.msra.mxu0 %v2601
    %3478 = vmatpush.bf16.msra.mxu0 %v2593
    %3479 = vmatpush.bf16.msra.mxu0 %v2585
    %3480 = vmatpush.bf16.msra.mxu0 %v2577
    %3481 = vmatpush.bf16.msra.mxu0 %v2569
    %3482 = vmatpush.bf16.msra.mxu0 %v2561
    %3483 = vmatpush.bf16.msra.mxu0 %v2553
    %3484 = vmatmul.bf16.gmra.mxu0 %v748
    %v3485 = vpop.f32.mrf.mxu0
    %v3486 = vadd.f32 %v3473, %v3485
    %v3487 = vpop.f32.mrf.mxu0
    %3488 = vdwg.mxu0
    %3489 = vmatpush.bf16.msra.mxu0 %v2673
    %3490 = vmatpush.bf16.msra.mxu0 %v2665
    %3491 = vmatpush.bf16.msra.mxu0 %v2657
    %3492 = vmatpush.bf16.msra.mxu0 %v2649
    %3493 = vmatpush.bf16.msra.mxu0 %v2641
    %3494 = vmatpush.bf16.msra.mxu0 %v2633
    %3495 = vmatpush.bf16.msra.mxu0 %v2625
    %3496 = vmatpush.bf16.msra.mxu0 %v2617
    %3497 = vmatmul.bf16.gmra.mxu0 %v749
    %v3498 = vpop.f32.mrf.mxu0
    %v3499 = vadd.f32 %v3486, %v3498
    %v3500 = vpop.f32.mrf.mxu0
    %3501 = vdwg.mxu0
    %3502 = vmatpush.bf16.msra.mxu0 %v2737
    %3503 = vmatpush.bf16.msra.mxu0 %v2729
    %3504 = vmatpush.bf16.msra.mxu0 %v2721
    %3505 = vmatpush.bf16.msra.mxu0 %v2713
    %3506 = vmatpush.bf16.msra.mxu0 %v2705
    %3507 = vmatpush.bf16.msra.mxu0 %v2697
    %3508 = vmatpush.bf16.msra.mxu0 %v2689
    %3509 = vmatpush.bf16.msra.mxu0 %v2681
    %3510 = vmatmul.bf16.gmra.mxu0 %v750
    %v3511 = vpop.f32.mrf.mxu0
    %v3512 = vadd.f32 %v3499, %v3511
    %v3513 = vpop.f32.mrf.mxu0
    %3514 = vdwg.mxu0
    %3515 = vmatpush.bf16.msra.mxu0 %v2801
    %3516 = vmatpush.bf16.msra.mxu0 %v2793
    %3517 = vmatpush.bf16.msra.mxu0 %v2785
    %3518 = vmatpush.bf16.msra.mxu0 %v2777
    %3519 = vmatpush.bf16.msra.mxu0 %v2769
    %3520 = vmatpush.bf16.msra.mxu0 %v2761
    %3521 = vmatpush.bf16.msra.mxu0 %v2753
    %3522 = vmatpush.bf16.msra.mxu0 %v2745
    %3523 = vmatmul.bf16.gmra.mxu0 %v751
    %v3524 = vpop.f32.mrf.mxu0
    %v3525 = vadd.f32 %v3512, %v3524
    %v3526 = vpop.f32.mrf.mxu0
    %3527 = vdwg.mxu0
    %3528 = vmatpush.bf16.msra.mxu0 %v2354
    %3529 = vmatpush.bf16.msra.mxu0 %v2346
    %3530 = vmatpush.bf16.msra.mxu0 %v2338
    %3531 = vmatpush.bf16.msra.mxu0 %v2330
    %3532 = vmatpush.bf16.msra.mxu0 %v2322
    %3533 = vmatpush.bf16.msra.mxu0 %v2314
    %3534 = vmatpush.bf16.msra.mxu0 %v2306
    %3535 = vmatpush.bf16.msra.mxu0 %v2298
    %3536 = vmatmul.bf16.gmra.mxu0 %v744
    %v3537 = vpop.f32.mrf.mxu0
    %v3538 = vadd.f32 %v718, %v3537
    %v3539 = vpop.f32.mrf.mxu0
    %3540 = vdwg.mxu0
    %3541 = vmatpush.bf16.msra.mxu0 %v2418
    %3542 = vmatpush.bf16.msra.mxu0 %v2410
    %3543 = vmatpush.bf16.msra.mxu0 %v2402
    %3544 = vmatpush.bf16.msra.mxu0 %v2394
    %3545 = vmatpush.bf16.msra.mxu0 %v2386
    %3546 = vmatpush.bf16.msra.mxu0 %v2378
    %3547 = vmatpush.bf16.msra.mxu0 %v2370
    %3548 = vmatpush.bf16.msra.mxu0 %v2362
    %3549 = vmatmul.bf16.gmra.mxu0 %v745
    %v3550 = vpop.f32.mrf.mxu0
    %v3551 = vadd.f32 %v3538, %v3550
    %v3552 = vpop.f32.mrf.mxu0
    %3553 = vdwg.mxu0
    %3554 = vmatpush.bf16.msra.mxu0 %v2482
    %3555 = vmatpush.bf16.msra.mxu0 %v2474
    %3556 = vmatpush.bf16.msra.mxu0 %v2466
    %3557 = vmatpush.bf16.msra.mxu0 %v2458
    %3558 = vmatpush.bf16.msra.mxu0 %v2450
    %3559 = vmatpush.bf16.msra.mxu0 %v2442
    %3560 = vmatpush.bf16.msra.mxu0 %v2434
    %3561 = vmatpush.bf16.msra.mxu0 %v2426
    %3562 = vmatmul.bf16.gmra.mxu0 %v746
    %v3563 = vpop.f32.mrf.mxu0
    %v3564 = vadd.f32 %v3551, %v3563
    %v3565 = vpop.f32.mrf.mxu0
    %3566 = vdwg.mxu0
    %3567 = vmatpush.bf16.msra.mxu0 %v2546
    %3568 = vmatpush.bf16.msra.mxu0 %v2538
    %3569 = vmatpush.bf16.msra.mxu0 %v2530
    %3570 = vmatpush.bf16.msra.mxu0 %v2522
    %3571 = vmatpush.bf16.msra.mxu0 %v2514
    %3572 = vmatpush.bf16.msra.mxu0 %v2506
    %3573 = vmatpush.bf16.msra.mxu0 %v2498
    %3574 = vmatpush.bf16.msra.mxu0 %v2490
    %3575 = vmatmul.bf16.gmra.mxu0 %v747
    %v3576 = vpop.f32.mrf.mxu0
    %v3577 = vadd.f32 %v3564, %v3576
    %v3578 = vpop.f32.mrf.mxu0
    %3579 = vdwg.mxu0
    %3580 = vmatpush.bf16.msra.mxu0 %v2610
    %3581 = vmatpush.bf16.msra.mxu0 %v2602
    %3582 = vmatpush.bf16.msra.mxu0 %v2594
    %3583 = vmatpush.bf16.msra.mxu0 %v2586
    %3584 = vmatpush.bf16.msra.mxu0 %v2578
    %3585 = vmatpush.bf16.msra.mxu0 %v2570
    %3586 = vmatpush.bf16.msra.mxu0 %v2562
    %3587 = vmatpush.bf16.msra.mxu0 %v2554
    %3588 = vmatmul.bf16.gmra.mxu0 %v748
    %v3589 = vpop.f32.mrf.mxu0
    %v3590 = vadd.f32 %v3577, %v3589
    %v3591 = vpop.f32.mrf.mxu0
    %3592 = vdwg.mxu0
    %3593 = vmatpush.bf16.msra.mxu0 %v2674
    %3594 = vmatpush.bf16.msra.mxu0 %v2666
    %3595 = vmatpush.bf16.msra.mxu0 %v2658
    %3596 = vmatpush.bf16.msra.mxu0 %v2650
    %3597 = vmatpush.bf16.msra.mxu0 %v2642
    %3598 = vmatpush.bf16.msra.mxu0 %v2634
    %3599 = vmatpush.bf16.msra.mxu0 %v2626
    %3600 = vmatpush.bf16.msra.mxu0 %v2618
    %3601 = vmatmul.bf16.gmra.mxu0 %v749
    %v3602 = vpop.f32.mrf.mxu0
    %v3603 = vadd.f32 %v3590, %v3602
    %v3604 = vpop.f32.mrf.mxu0
    %3605 = vdwg.mxu0
    %3606 = vmatpush.bf16.msra.mxu0 %v2738
    %3607 = vmatpush.bf16.msra.mxu0 %v2730
    %3608 = vmatpush.bf16.msra.mxu0 %v2722
    %3609 = vmatpush.bf16.msra.mxu0 %v2714
    %3610 = vmatpush.bf16.msra.mxu0 %v2706
    %3611 = vmatpush.bf16.msra.mxu0 %v2698
    %3612 = vmatpush.bf16.msra.mxu0 %v2690
    %3613 = vmatpush.bf16.msra.mxu0 %v2682
    %3614 = vmatmul.bf16.gmra.mxu0 %v750
    %v3615 = vpop.f32.mrf.mxu0
    %v3616 = vadd.f32 %v3603, %v3615
    %v3617 = vpop.f32.mrf.mxu0
    %3618 = vdwg.mxu0
    %3619 = vmatpush.bf16.msra.mxu0 %v2802
    %3620 = vmatpush.bf16.msra.mxu0 %v2794
    %3621 = vmatpush.bf16.msra.mxu0 %v2786
    %3622 = vmatpush.bf16.msra.mxu0 %v2778
    %3623 = vmatpush.bf16.msra.mxu0 %v2770
    %3624 = vmatpush.bf16.msra.mxu0 %v2762
    %3625 = vmatpush.bf16.msra.mxu0 %v2754
    %3626 = vmatpush.bf16.msra.mxu0 %v2746
    %3627 = vmatmul.bf16.gmra.mxu0 %v751
    %v3628 = vpop.f32.mrf.mxu0
    %v3629 = vadd.f32 %v3616, %v3628
    %v3630 = vpop.f32.mrf.mxu0
    %3631 = vdwg.mxu0
    %3632 = vmatpush.bf16.msra.mxu0 %v2355
    %3633 = vmatpush.bf16.msra.mxu0 %v2347
    %3634 = vmatpush.bf16.msra.mxu0 %v2339
    %3635 = vmatpush.bf16.msra.mxu0 %v2331
    %3636 = vmatpush.bf16.msra.mxu0 %v2323
    %3637 = vmatpush.bf16.msra.mxu0 %v2315
    %3638 = vmatpush.bf16.msra.mxu0 %v2307
    %3639 = vmatpush.bf16.msra.mxu0 %v2299
    %3640 = vmatmul.bf16.gmra.mxu0 %v744
    %v3641 = vpop.f32.mrf.mxu0
    %v3642 = vadd.f32 %v719, %v3641
    %v3643 = vpop.f32.mrf.mxu0
    %3644 = vdwg.mxu0
    %3645 = vmatpush.bf16.msra.mxu0 %v2419
    %3646 = vmatpush.bf16.msra.mxu0 %v2411
    %3647 = vmatpush.bf16.msra.mxu0 %v2403
    %3648 = vmatpush.bf16.msra.mxu0 %v2395
    %3649 = vmatpush.bf16.msra.mxu0 %v2387
    %3650 = vmatpush.bf16.msra.mxu0 %v2379
    %3651 = vmatpush.bf16.msra.mxu0 %v2371
    %3652 = vmatpush.bf16.msra.mxu0 %v2363
    %3653 = vmatmul.bf16.gmra.mxu0 %v745
    %v3654 = vpop.f32.mrf.mxu0
    %v3655 = vadd.f32 %v3642, %v3654
    %v3656 = vpop.f32.mrf.mxu0
    %3657 = vdwg.mxu0
    %3658 = vmatpush.bf16.msra.mxu0 %v2483
    %3659 = vmatpush.bf16.msra.mxu0 %v2475
    %3660 = vmatpush.bf16.msra.mxu0 %v2467
    %3661 = vmatpush.bf16.msra.mxu0 %v2459
    %3662 = vmatpush.bf16.msra.mxu0 %v2451
    %3663 = vmatpush.bf16.msra.mxu0 %v2443
    %3664 = vmatpush.bf16.msra.mxu0 %v2435
    %3665 = vmatpush.bf16.msra.mxu0 %v2427
    %3666 = vmatmul.bf16.gmra.mxu0 %v746
    %v3667 = vpop.f32.mrf.mxu0
    %v3668 = vadd.f32 %v3655, %v3667
    %v3669 = vpop.f32.mrf.mxu0
    %3670 = vdwg.mxu0
    %3671 = vmatpush.bf16.msra.mxu0 %v2547
    %3672 = vmatpush.bf16.msra.mxu0 %v2539
    %3673 = vmatpush.bf16.msra.mxu0 %v2531
    %3674 = vmatpush.bf16.msra.mxu0 %v2523
    %3675 = vmatpush.bf16.msra.mxu0 %v2515
    %3676 = vmatpush.bf16.msra.mxu0 %v2507
    %3677 = vmatpush.bf16.msra.mxu0 %v2499
    %3678 = vmatpush.bf16.msra.mxu0 %v2491
    %3679 = vmatmul.bf16.gmra.mxu0 %v747
    %v3680 = vpop.f32.mrf.mxu0
    %v3681 = vadd.f32 %v3668, %v3680
    %v3682 = vpop.f32.mrf.mxu0
    %3683 = vdwg.mxu0
    %3684 = vmatpush.bf16.msra.mxu0 %v2611
    %3685 = vmatpush.bf16.msra.mxu0 %v2603
    %3686 = vmatpush.bf16.msra.mxu0 %v2595
    %3687 = vmatpush.bf16.msra.mxu0 %v2587
    %3688 = vmatpush.bf16.msra.mxu0 %v2579
    %3689 = vmatpush.bf16.msra.mxu0 %v2571
    %3690 = vmatpush.bf16.msra.mxu0 %v2563
    %3691 = vmatpush.bf16.msra.mxu0 %v2555
    %3692 = vmatmul.bf16.gmra.mxu0 %v748
    %v3693 = vpop.f32.mrf.mxu0
    %v3694 = vadd.f32 %v3681, %v3693
    %v3695 = vpop.f32.mrf.mxu0
    %3696 = vdwg.mxu0
    %3697 = vmatpush.bf16.msra.mxu0 %v2675
    %3698 = vmatpush.bf16.msra.mxu0 %v2667
    %3699 = vmatpush.bf16.msra.mxu0 %v2659
    %3700 = vmatpush.bf16.msra.mxu0 %v2651
    %3701 = vmatpush.bf16.msra.mxu0 %v2643
    %3702 = vmatpush.bf16.msra.mxu0 %v2635
    %3703 = vmatpush.bf16.msra.mxu0 %v2627
    %3704 = vmatpush.bf16.msra.mxu0 %v2619
    %3705 = vmatmul.bf16.gmra.mxu0 %v749
    %v3706 = vpop.f32.mrf.mxu0
    %v3707 = vadd.f32 %v3694, %v3706
    %v3708 = vpop.f32.mrf.mxu0
    %3709 = vdwg.mxu0
    %3710 = vmatpush.bf16.msra.mxu0 %v2739
    %3711 = vmatpush.bf16.msra.mxu0 %v2731
    %3712 = vmatpush.bf16.msra.mxu0 %v2723
    %3713 = vmatpush.bf16.msra.mxu0 %v2715
    %3714 = vmatpush.bf16.msra.mxu0 %v2707
    %3715 = vmatpush.bf16.msra.mxu0 %v2699
    %3716 = vmatpush.bf16.msra.mxu0 %v2691
    %3717 = vmatpush.bf16.msra.mxu0 %v2683
    %3718 = vmatmul.bf16.gmra.mxu0 %v750
    %v3719 = vpop.f32.mrf.mxu0
    %v3720 = vadd.f32 %v3707, %v3719
    %v3721 = vpop.f32.mrf.mxu0
    %3722 = vdwg.mxu0
    %3723 = vmatpush.bf16.msra.mxu0 %v2803
    %3724 = vmatpush.bf16.msra.mxu0 %v2795
    %3725 = vmatpush.bf16.msra.mxu0 %v2787
    %3726 = vmatpush.bf16.msra.mxu0 %v2779
    %3727 = vmatpush.bf16.msra.mxu0 %v2771
    %3728 = vmatpush.bf16.msra.mxu0 %v2763
    %3729 = vmatpush.bf16.msra.mxu0 %v2755
    %3730 = vmatpush.bf16.msra.mxu0 %v2747
    %3731 = vmatmul.bf16.gmra.mxu0 %v751
    %v3732 = vpop.f32.mrf.mxu0
    %v3733 = vadd.f32 %v3720, %v3732
    %v3734 = vpop.f32.mrf.mxu0
    %3735 = vdwg.mxu0
    %3736 = vmatpush.bf16.msra.mxu0 %v2356
    %3737 = vmatpush.bf16.msra.mxu0 %v2348
    %3738 = vmatpush.bf16.msra.mxu0 %v2340
    %3739 = vmatpush.bf16.msra.mxu0 %v2332
    %3740 = vmatpush.bf16.msra.mxu0 %v2324
    %3741 = vmatpush.bf16.msra.mxu0 %v2316
    %3742 = vmatpush.bf16.msra.mxu0 %v2308
    %3743 = vmatpush.bf16.msra.mxu0 %v2300
    %3744 = vmatmul.bf16.gmra.mxu0 %v744
    %v3745 = vpop.f32.mrf.mxu0
    %v3746 = vadd.f32 %v720, %v3745
    %v3747 = vpop.f32.mrf.mxu0
    %3748 = vdwg.mxu0
    %3749 = vmatpush.bf16.msra.mxu0 %v2420
    %3750 = vmatpush.bf16.msra.mxu0 %v2412
    %3751 = vmatpush.bf16.msra.mxu0 %v2404
    %3752 = vmatpush.bf16.msra.mxu0 %v2396
    %3753 = vmatpush.bf16.msra.mxu0 %v2388
    %3754 = vmatpush.bf16.msra.mxu0 %v2380
    %3755 = vmatpush.bf16.msra.mxu0 %v2372
    %3756 = vmatpush.bf16.msra.mxu0 %v2364
    %3757 = vmatmul.bf16.gmra.mxu0 %v745
    %v3758 = vpop.f32.mrf.mxu0
    %v3759 = vadd.f32 %v3746, %v3758
    %v3760 = vpop.f32.mrf.mxu0
    %3761 = vdwg.mxu0
    %3762 = vmatpush.bf16.msra.mxu0 %v2484
    %3763 = vmatpush.bf16.msra.mxu0 %v2476
    %3764 = vmatpush.bf16.msra.mxu0 %v2468
    %3765 = vmatpush.bf16.msra.mxu0 %v2460
    %3766 = vmatpush.bf16.msra.mxu0 %v2452
    %3767 = vmatpush.bf16.msra.mxu0 %v2444
    %3768 = vmatpush.bf16.msra.mxu0 %v2436
    %3769 = vmatpush.bf16.msra.mxu0 %v2428
    %3770 = vmatmul.bf16.gmra.mxu0 %v746
    %v3771 = vpop.f32.mrf.mxu0
    %v3772 = vadd.f32 %v3759, %v3771
    %v3773 = vpop.f32.mrf.mxu0
    %3774 = vdwg.mxu0
    %3775 = vmatpush.bf16.msra.mxu0 %v2548
    %3776 = vmatpush.bf16.msra.mxu0 %v2540
    %3777 = vmatpush.bf16.msra.mxu0 %v2532
    %3778 = vmatpush.bf16.msra.mxu0 %v2524
    %3779 = vmatpush.bf16.msra.mxu0 %v2516
    %3780 = vmatpush.bf16.msra.mxu0 %v2508
    %3781 = vmatpush.bf16.msra.mxu0 %v2500
    %3782 = vmatpush.bf16.msra.mxu0 %v2492
    %3783 = vmatmul.bf16.gmra.mxu0 %v747
    %v3784 = vpop.f32.mrf.mxu0
    %v3785 = vadd.f32 %v3772, %v3784
    %v3786 = vpop.f32.mrf.mxu0
    %3787 = vdwg.mxu0
    %3788 = vmatpush.bf16.msra.mxu0 %v2612
    %3789 = vmatpush.bf16.msra.mxu0 %v2604
    %3790 = vmatpush.bf16.msra.mxu0 %v2596
    %3791 = vmatpush.bf16.msra.mxu0 %v2588
    %3792 = vmatpush.bf16.msra.mxu0 %v2580
    %3793 = vmatpush.bf16.msra.mxu0 %v2572
    %3794 = vmatpush.bf16.msra.mxu0 %v2564
    %3795 = vmatpush.bf16.msra.mxu0 %v2556
    %3796 = vmatmul.bf16.gmra.mxu0 %v748
    %v3797 = vpop.f32.mrf.mxu0
    %v3798 = vadd.f32 %v3785, %v3797
    %v3799 = vpop.f32.mrf.mxu0
    %3800 = vdwg.mxu0
    %3801 = vmatpush.bf16.msra.mxu0 %v2676
    %3802 = vmatpush.bf16.msra.mxu0 %v2668
    %3803 = vmatpush.bf16.msra.mxu0 %v2660
    %3804 = vmatpush.bf16.msra.mxu0 %v2652
    %3805 = vmatpush.bf16.msra.mxu0 %v2644
    %3806 = vmatpush.bf16.msra.mxu0 %v2636
    %3807 = vmatpush.bf16.msra.mxu0 %v2628
    %3808 = vmatpush.bf16.msra.mxu0 %v2620
    %3809 = vmatmul.bf16.gmra.mxu0 %v749
    %v3810 = vpop.f32.mrf.mxu0
    %v3811 = vadd.f32 %v3798, %v3810
    %v3812 = vpop.f32.mrf.mxu0
    %3813 = vdwg.mxu0
    %3814 = vmatpush.bf16.msra.mxu0 %v2740
    %3815 = vmatpush.bf16.msra.mxu0 %v2732
    %3816 = vmatpush.bf16.msra.mxu0 %v2724
    %3817 = vmatpush.bf16.msra.mxu0 %v2716
    %3818 = vmatpush.bf16.msra.mxu0 %v2708
    %3819 = vmatpush.bf16.msra.mxu0 %v2700
    %3820 = vmatpush.bf16.msra.mxu0 %v2692
    %3821 = vmatpush.bf16.msra.mxu0 %v2684
    %3822 = vmatmul.bf16.gmra.mxu0 %v750
    %v3823 = vpop.f32.mrf.mxu0
    %v3824 = vadd.f32 %v3811, %v3823
    %v3825 = vpop.f32.mrf.mxu0
    %3826 = vdwg.mxu0
    %3827 = vmatpush.bf16.msra.mxu0 %v2804
    %3828 = vmatpush.bf16.msra.mxu0 %v2796
    %3829 = vmatpush.bf16.msra.mxu0 %v2788
    %3830 = vmatpush.bf16.msra.mxu0 %v2780
    %3831 = vmatpush.bf16.msra.mxu0 %v2772
    %3832 = vmatpush.bf16.msra.mxu0 %v2764
    %3833 = vmatpush.bf16.msra.mxu0 %v2756
    %3834 = vmatpush.bf16.msra.mxu0 %v2748
    %3835 = vmatmul.bf16.gmra.mxu0 %v751
    %v3836 = vpop.f32.mrf.mxu0
    %v3837 = vadd.f32 %v3824, %v3836
    %v3838 = vpop.f32.mrf.mxu0
    %3839 = vdwg.mxu0
    %3840 = vmatpush.bf16.msra.mxu0 %v2357
    %3841 = vmatpush.bf16.msra.mxu0 %v2349
    %3842 = vmatpush.bf16.msra.mxu0 %v2341
    %3843 = vmatpush.bf16.msra.mxu0 %v2333
    %3844 = vmatpush.bf16.msra.mxu0 %v2325
    %3845 = vmatpush.bf16.msra.mxu0 %v2317
    %3846 = vmatpush.bf16.msra.mxu0 %v2309
    %3847 = vmatpush.bf16.msra.mxu0 %v2301
    %3848 = vmatmul.bf16.gmra.mxu0 %v744
    %v3849 = vpop.f32.mrf.mxu0
    %v3850 = vadd.f32 %v721, %v3849
    %v3851 = vpop.f32.mrf.mxu0
    %3852 = vdwg.mxu0
    %3853 = vmatpush.bf16.msra.mxu0 %v2421
    %3854 = vmatpush.bf16.msra.mxu0 %v2413
    %3855 = vmatpush.bf16.msra.mxu0 %v2405
    %3856 = vmatpush.bf16.msra.mxu0 %v2397
    %3857 = vmatpush.bf16.msra.mxu0 %v2389
    %3858 = vmatpush.bf16.msra.mxu0 %v2381
    %3859 = vmatpush.bf16.msra.mxu0 %v2373
    %3860 = vmatpush.bf16.msra.mxu0 %v2365
    %3861 = vmatmul.bf16.gmra.mxu0 %v745
    %v3862 = vpop.f32.mrf.mxu0
    %v3863 = vadd.f32 %v3850, %v3862
    %v3864 = vpop.f32.mrf.mxu0
    %3865 = vdwg.mxu0
    %3866 = vmatpush.bf16.msra.mxu0 %v2485
    %3867 = vmatpush.bf16.msra.mxu0 %v2477
    %3868 = vmatpush.bf16.msra.mxu0 %v2469
    %3869 = vmatpush.bf16.msra.mxu0 %v2461
    %3870 = vmatpush.bf16.msra.mxu0 %v2453
    %3871 = vmatpush.bf16.msra.mxu0 %v2445
    %3872 = vmatpush.bf16.msra.mxu0 %v2437
    %3873 = vmatpush.bf16.msra.mxu0 %v2429
    %3874 = vmatmul.bf16.gmra.mxu0 %v746
    %v3875 = vpop.f32.mrf.mxu0
    %v3876 = vadd.f32 %v3863, %v3875
    %v3877 = vpop.f32.mrf.mxu0
    %3878 = vdwg.mxu0
    %3879 = vmatpush.bf16.msra.mxu0 %v2549
    %3880 = vmatpush.bf16.msra.mxu0 %v2541
    %3881 = vmatpush.bf16.msra.mxu0 %v2533
    %3882 = vmatpush.bf16.msra.mxu0 %v2525
    %3883 = vmatpush.bf16.msra.mxu0 %v2517
    %3884 = vmatpush.bf16.msra.mxu0 %v2509
    %3885 = vmatpush.bf16.msra.mxu0 %v2501
    %3886 = vmatpush.bf16.msra.mxu0 %v2493
    %3887 = vmatmul.bf16.gmra.mxu0 %v747
    %v3888 = vpop.f32.mrf.mxu0
    %v3889 = vadd.f32 %v3876, %v3888
    %v3890 = vpop.f32.mrf.mxu0
    %3891 = vdwg.mxu0
    %3892 = vmatpush.bf16.msra.mxu0 %v2613
    %3893 = vmatpush.bf16.msra.mxu0 %v2605
    %3894 = vmatpush.bf16.msra.mxu0 %v2597
    %3895 = vmatpush.bf16.msra.mxu0 %v2589
    %3896 = vmatpush.bf16.msra.mxu0 %v2581
    %3897 = vmatpush.bf16.msra.mxu0 %v2573
    %3898 = vmatpush.bf16.msra.mxu0 %v2565
    %3899 = vmatpush.bf16.msra.mxu0 %v2557
    %3900 = vmatmul.bf16.gmra.mxu0 %v748
    %v3901 = vpop.f32.mrf.mxu0
    %v3902 = vadd.f32 %v3889, %v3901
    %v3903 = vpop.f32.mrf.mxu0
    %3904 = vdwg.mxu0
    %3905 = vmatpush.bf16.msra.mxu0 %v2677
    %3906 = vmatpush.bf16.msra.mxu0 %v2669
    %3907 = vmatpush.bf16.msra.mxu0 %v2661
    %3908 = vmatpush.bf16.msra.mxu0 %v2653
    %3909 = vmatpush.bf16.msra.mxu0 %v2645
    %3910 = vmatpush.bf16.msra.mxu0 %v2637
    %3911 = vmatpush.bf16.msra.mxu0 %v2629
    %3912 = vmatpush.bf16.msra.mxu0 %v2621
    %3913 = vmatmul.bf16.gmra.mxu0 %v749
    %v3914 = vpop.f32.mrf.mxu0
    %v3915 = vadd.f32 %v3902, %v3914
    %v3916 = vpop.f32.mrf.mxu0
    %3917 = vdwg.mxu0
    %3918 = vmatpush.bf16.msra.mxu0 %v2741
    %3919 = vmatpush.bf16.msra.mxu0 %v2733
    %3920 = vmatpush.bf16.msra.mxu0 %v2725
    %3921 = vmatpush.bf16.msra.mxu0 %v2717
    %3922 = vmatpush.bf16.msra.mxu0 %v2709
    %3923 = vmatpush.bf16.msra.mxu0 %v2701
    %3924 = vmatpush.bf16.msra.mxu0 %v2693
    %3925 = vmatpush.bf16.msra.mxu0 %v2685
    %3926 = vmatmul.bf16.gmra.mxu0 %v750
    %v3927 = vpop.f32.mrf.mxu0
    %v3928 = vadd.f32 %v3915, %v3927
    %v3929 = vpop.f32.mrf.mxu0
    %3930 = vdwg.mxu0
    %3931 = vmatpush.bf16.msra.mxu0 %v2805
    %3932 = vmatpush.bf16.msra.mxu0 %v2797
    %3933 = vmatpush.bf16.msra.mxu0 %v2789
    %3934 = vmatpush.bf16.msra.mxu0 %v2781
    %3935 = vmatpush.bf16.msra.mxu0 %v2773
    %3936 = vmatpush.bf16.msra.mxu0 %v2765
    %3937 = vmatpush.bf16.msra.mxu0 %v2757
    %3938 = vmatpush.bf16.msra.mxu0 %v2749
    %3939 = vmatmul.bf16.gmra.mxu0 %v751
    %v3940 = vpop.f32.mrf.mxu0
    %v3941 = vadd.f32 %v3928, %v3940
    %v3942 = vpop.f32.mrf.mxu0
    %3943 = vdwg.mxu0
    %3944 = vmatpush.bf16.msra.mxu0 %v2358
    %3945 = vmatpush.bf16.msra.mxu0 %v2350
    %3946 = vmatpush.bf16.msra.mxu0 %v2342
    %3947 = vmatpush.bf16.msra.mxu0 %v2334
    %3948 = vmatpush.bf16.msra.mxu0 %v2326
    %3949 = vmatpush.bf16.msra.mxu0 %v2318
    %3950 = vmatpush.bf16.msra.mxu0 %v2310
    %3951 = vmatpush.bf16.msra.mxu0 %v2302
    %3952 = vmatmul.bf16.gmra.mxu0 %v744
    %v3953 = vpop.f32.mrf.mxu0
    %v3954 = vadd.f32 %v722, %v3953
    %v3955 = vpop.f32.mrf.mxu0
    %3956 = vdwg.mxu0
    %3957 = vmatpush.bf16.msra.mxu0 %v2422
    %3958 = vmatpush.bf16.msra.mxu0 %v2414
    %3959 = vmatpush.bf16.msra.mxu0 %v2406
    %3960 = vmatpush.bf16.msra.mxu0 %v2398
    %3961 = vmatpush.bf16.msra.mxu0 %v2390
    %3962 = vmatpush.bf16.msra.mxu0 %v2382
    %3963 = vmatpush.bf16.msra.mxu0 %v2374
    %3964 = vmatpush.bf16.msra.mxu0 %v2366
    %3965 = vmatmul.bf16.gmra.mxu0 %v745
    %v3966 = vpop.f32.mrf.mxu0
    %v3967 = vadd.f32 %v3954, %v3966
    %v3968 = vpop.f32.mrf.mxu0
    %3969 = vdwg.mxu0
    %3970 = vmatpush.bf16.msra.mxu0 %v2486
    %3971 = vmatpush.bf16.msra.mxu0 %v2478
    %3972 = vmatpush.bf16.msra.mxu0 %v2470
    %3973 = vmatpush.bf16.msra.mxu0 %v2462
    %3974 = vmatpush.bf16.msra.mxu0 %v2454
    %3975 = vmatpush.bf16.msra.mxu0 %v2446
    %3976 = vmatpush.bf16.msra.mxu0 %v2438
    %3977 = vmatpush.bf16.msra.mxu0 %v2430
    %3978 = vmatmul.bf16.gmra.mxu0 %v746
    %v3979 = vpop.f32.mrf.mxu0
    %v3980 = vadd.f32 %v3967, %v3979
    %v3981 = vpop.f32.mrf.mxu0
    %3982 = vdwg.mxu0
    %3983 = vmatpush.bf16.msra.mxu0 %v2550
    %3984 = vmatpush.bf16.msra.mxu0 %v2542
    %3985 = vmatpush.bf16.msra.mxu0 %v2534
    %3986 = vmatpush.bf16.msra.mxu0 %v2526
    %3987 = vmatpush.bf16.msra.mxu0 %v2518
    %3988 = vmatpush.bf16.msra.mxu0 %v2510
    %3989 = vmatpush.bf16.msra.mxu0 %v2502
    %3990 = vmatpush.bf16.msra.mxu0 %v2494
    %3991 = vmatmul.bf16.gmra.mxu0 %v747
    %v3992 = vpop.f32.mrf.mxu0
    %v3993 = vadd.f32 %v3980, %v3992
    %v3994 = vpop.f32.mrf.mxu0
    %3995 = vdwg.mxu0
    %3996 = vmatpush.bf16.msra.mxu0 %v2614
    %3997 = vmatpush.bf16.msra.mxu0 %v2606
    %3998 = vmatpush.bf16.msra.mxu0 %v2598
    %3999 = vmatpush.bf16.msra.mxu0 %v2590
    %4000 = vmatpush.bf16.msra.mxu0 %v2582
    %4001 = vmatpush.bf16.msra.mxu0 %v2574
    %4002 = vmatpush.bf16.msra.mxu0 %v2566
    %4003 = vmatpush.bf16.msra.mxu0 %v2558
    %4004 = vmatmul.bf16.gmra.mxu0 %v748
    %v4005 = vpop.f32.mrf.mxu0
    %v4006 = vadd.f32 %v3993, %v4005
    %v4007 = vpop.f32.mrf.mxu0
    %4008 = vdwg.mxu0
    %4009 = vmatpush.bf16.msra.mxu0 %v2678
    %4010 = vmatpush.bf16.msra.mxu0 %v2670
    %4011 = vmatpush.bf16.msra.mxu0 %v2662
    %4012 = vmatpush.bf16.msra.mxu0 %v2654
    %4013 = vmatpush.bf16.msra.mxu0 %v2646
    %4014 = vmatpush.bf16.msra.mxu0 %v2638
    %4015 = vmatpush.bf16.msra.mxu0 %v2630
    %4016 = vmatpush.bf16.msra.mxu0 %v2622
    %4017 = vmatmul.bf16.gmra.mxu0 %v749
    %v4018 = vpop.f32.mrf.mxu0
    %v4019 = vadd.f32 %v4006, %v4018
    %v4020 = vpop.f32.mrf.mxu0
    %4021 = vdwg.mxu0
    %4022 = vmatpush.bf16.msra.mxu0 %v2742
    %4023 = vmatpush.bf16.msra.mxu0 %v2734
    %4024 = vmatpush.bf16.msra.mxu0 %v2726
    %4025 = vmatpush.bf16.msra.mxu0 %v2718
    %4026 = vmatpush.bf16.msra.mxu0 %v2710
    %4027 = vmatpush.bf16.msra.mxu0 %v2702
    %4028 = vmatpush.bf16.msra.mxu0 %v2694
    %4029 = vmatpush.bf16.msra.mxu0 %v2686
    %4030 = vmatmul.bf16.gmra.mxu0 %v750
    %v4031 = vpop.f32.mrf.mxu0
    %v4032 = vadd.f32 %v4019, %v4031
    %v4033 = vpop.f32.mrf.mxu0
    %4034 = vdwg.mxu0
    %4035 = vmatpush.bf16.msra.mxu0 %v2806
    %4036 = vmatpush.bf16.msra.mxu0 %v2798
    %4037 = vmatpush.bf16.msra.mxu0 %v2790
    %4038 = vmatpush.bf16.msra.mxu0 %v2782
    %4039 = vmatpush.bf16.msra.mxu0 %v2774
    %4040 = vmatpush.bf16.msra.mxu0 %v2766
    %4041 = vmatpush.bf16.msra.mxu0 %v2758
    %4042 = vmatpush.bf16.msra.mxu0 %v2750
    %4043 = vmatmul.bf16.gmra.mxu0 %v751
    %v4044 = vpop.f32.mrf.mxu0
    %v4045 = vadd.f32 %v4032, %v4044
    %v4046 = vpop.f32.mrf.mxu0
    %4047 = vdwg.mxu0
    %4048 = vmatpush.bf16.msra.mxu0 %v2359
    %4049 = vmatpush.bf16.msra.mxu0 %v2351
    %4050 = vmatpush.bf16.msra.mxu0 %v2343
    %4051 = vmatpush.bf16.msra.mxu0 %v2335
    %4052 = vmatpush.bf16.msra.mxu0 %v2327
    %4053 = vmatpush.bf16.msra.mxu0 %v2319
    %4054 = vmatpush.bf16.msra.mxu0 %v2311
    %4055 = vmatpush.bf16.msra.mxu0 %v2303
    %4056 = vmatmul.bf16.gmra.mxu0 %v744
    %v4057 = vpop.f32.mrf.mxu0
    %v4058 = vadd.f32 %v723, %v4057
    %v4059 = vpop.f32.mrf.mxu0
    %4060 = vdwg.mxu0
    %4061 = vmatpush.bf16.msra.mxu0 %v2423
    %4062 = vmatpush.bf16.msra.mxu0 %v2415
    %4063 = vmatpush.bf16.msra.mxu0 %v2407
    %4064 = vmatpush.bf16.msra.mxu0 %v2399
    %4065 = vmatpush.bf16.msra.mxu0 %v2391
    %4066 = vmatpush.bf16.msra.mxu0 %v2383
    %4067 = vmatpush.bf16.msra.mxu0 %v2375
    %4068 = vmatpush.bf16.msra.mxu0 %v2367
    %4069 = vmatmul.bf16.gmra.mxu0 %v745
    %v4070 = vpop.f32.mrf.mxu0
    %v4071 = vadd.f32 %v4058, %v4070
    %v4072 = vpop.f32.mrf.mxu0
    %4073 = vdwg.mxu0
    %4074 = vmatpush.bf16.msra.mxu0 %v2487
    %4075 = vmatpush.bf16.msra.mxu0 %v2479
    %4076 = vmatpush.bf16.msra.mxu0 %v2471
    %4077 = vmatpush.bf16.msra.mxu0 %v2463
    %4078 = vmatpush.bf16.msra.mxu0 %v2455
    %4079 = vmatpush.bf16.msra.mxu0 %v2447
    %4080 = vmatpush.bf16.msra.mxu0 %v2439
    %4081 = vmatpush.bf16.msra.mxu0 %v2431
    %4082 = vmatmul.bf16.gmra.mxu0 %v746
    %v4083 = vpop.f32.mrf.mxu0
    %v4084 = vadd.f32 %v4071, %v4083
    %v4085 = vpop.f32.mrf.mxu0
    %4086 = vdwg.mxu0
    %4087 = vmatpush.bf16.msra.mxu0 %v2551
    %4088 = vmatpush.bf16.msra.mxu0 %v2543
    %4089 = vmatpush.bf16.msra.mxu0 %v2535
    %4090 = vmatpush.bf16.msra.mxu0 %v2527
    %4091 = vmatpush.bf16.msra.mxu0 %v2519
    %4092 = vmatpush.bf16.msra.mxu0 %v2511
    %4093 = vmatpush.bf16.msra.mxu0 %v2503
    %4094 = vmatpush.bf16.msra.mxu0 %v2495
    %4095 = vmatmul.bf16.gmra.mxu0 %v747
    %v4096 = vpop.f32.mrf.mxu0
    %v4097 = vadd.f32 %v4084, %v4096
    %v4098 = vpop.f32.mrf.mxu0
    %4099 = vdwg.mxu0
    %4100 = vmatpush.bf16.msra.mxu0 %v2615
    %4101 = vmatpush.bf16.msra.mxu0 %v2607
    %4102 = vmatpush.bf16.msra.mxu0 %v2599
    %4103 = vmatpush.bf16.msra.mxu0 %v2591
    %4104 = vmatpush.bf16.msra.mxu0 %v2583
    %4105 = vmatpush.bf16.msra.mxu0 %v2575
    %4106 = vmatpush.bf16.msra.mxu0 %v2567
    %4107 = vmatpush.bf16.msra.mxu0 %v2559
    %4108 = vmatmul.bf16.gmra.mxu0 %v748
    %v4109 = vpop.f32.mrf.mxu0
    %v4110 = vadd.f32 %v4097, %v4109
    %v4111 = vpop.f32.mrf.mxu0
    %4112 = vdwg.mxu0
    %4113 = vmatpush.bf16.msra.mxu0 %v2679
    %4114 = vmatpush.bf16.msra.mxu0 %v2671
    %4115 = vmatpush.bf16.msra.mxu0 %v2663
    %4116 = vmatpush.bf16.msra.mxu0 %v2655
    %4117 = vmatpush.bf16.msra.mxu0 %v2647
    %4118 = vmatpush.bf16.msra.mxu0 %v2639
    %4119 = vmatpush.bf16.msra.mxu0 %v2631
    %4120 = vmatpush.bf16.msra.mxu0 %v2623
    %4121 = vmatmul.bf16.gmra.mxu0 %v749
    %v4122 = vpop.f32.mrf.mxu0
    %v4123 = vadd.f32 %v4110, %v4122
    %v4124 = vpop.f32.mrf.mxu0
    %4125 = vdwg.mxu0
    %4126 = vmatpush.bf16.msra.mxu0 %v2743
    %4127 = vmatpush.bf16.msra.mxu0 %v2735
    %4128 = vmatpush.bf16.msra.mxu0 %v2727
    %4129 = vmatpush.bf16.msra.mxu0 %v2719
    %4130 = vmatpush.bf16.msra.mxu0 %v2711
    %4131 = vmatpush.bf16.msra.mxu0 %v2703
    %4132 = vmatpush.bf16.msra.mxu0 %v2695
    %4133 = vmatpush.bf16.msra.mxu0 %v2687
    %4134 = vmatmul.bf16.gmra.mxu0 %v750
    %v4135 = vpop.f32.mrf.mxu0
    %v4136 = vadd.f32 %v4123, %v4135
    %v4137 = vpop.f32.mrf.mxu0
    %4138 = vdwg.mxu0
    %4139 = vmatpush.bf16.msra.mxu0 %v2807
    %4140 = vmatpush.bf16.msra.mxu0 %v2799
    %4141 = vmatpush.bf16.msra.mxu0 %v2791
    %4142 = vmatpush.bf16.msra.mxu0 %v2783
    %4143 = vmatpush.bf16.msra.mxu0 %v2775
    %4144 = vmatpush.bf16.msra.mxu0 %v2767
    %4145 = vmatpush.bf16.msra.mxu0 %v2759
    %4146 = vmatpush.bf16.msra.mxu0 %v2751
    %4147 = vmatmul.bf16.gmra.mxu0 %v751
    %v4148 = vpop.f32.mrf.mxu0
    %v4149 = vadd.f32 %v4136, %v4148
    %v4150 = vpop.f32.mrf.mxu0
    %4151 = vdwg.mxu0
    %v4152 = vmax.f32 %v3421, 0.0
    %v4153 = vmax.f32 %v3525, 0.0
    %v4154 = vmax.f32 %v3629, 0.0
    %v4155 = vmax.f32 %v3733, 0.0
    %v4156 = vmax.f32 %v3837, 0.0
    %v4157 = vmax.f32 %v3941, 0.0
    %v4158 = vmax.f32 %v4045, 0.0
    %v4159 = vmax.f32 %v4149, 0.0
    %v4160 = vpack.c.bf16 %v4152, %v4152
    %v4161 = vpack.c.bf16 %v4153, %v4153
    %v4162 = vpack.c.bf16 %v4154, %v4154
    %v4163 = vpack.c.bf16 %v4155, %v4155
    %v4164 = vpack.c.bf16 %v4156, %v4156
    %v4165 = vpack.c.bf16 %v4157, %v4157
    %v4166 = vpack.c.bf16 %v4158, %v4158
    %v4167 = vpack.c.bf16 %v4159, %v4159
    %v4168 = vld [vmem:[#allocation8] sm:$0xff]
    %v4169 = vld [vmem:[#allocation8 + $0x8] sm:$0xff]
    %v4170 = vld [vmem:[#allocation8 + $0x10] sm:$0xff]
    %v4171 = vld [vmem:[#allocation8 + $0x18] sm:$0xff]
    %v4172 = vld [vmem:[#allocation8 + $0x20] sm:$0xff]
    %v4173 = vld [vmem:[#allocation8 + $0x28] sm:$0xff]
    %v4174 = vld [vmem:[#allocation8 + $0x30] sm:$0xff]
    %v4175 = vld [vmem:[#allocation8 + $0x38] sm:$0xff]
    %v4176 = vld [vmem:[#allocation8 + $0x40] sm:$0xff]
    %v4177 = vld [vmem:[#allocation8 + $0x48] sm:$0xff]
    %v4178 = vld [vmem:[#allocation8 + $0x50] sm:$0xff]
    %v4179 = vld [vmem:[#allocation8 + $0x58] sm:$0xff]
    %v4180 = vld [vmem:[#allocation8 + $0x60] sm:$0xff]
    %v4181 = vld [vmem:[#allocation8 + $0x68] sm:$0xff]
    %v4182 = vld [vmem:[#allocation8 + $0x70] sm:$0xff]
    %v4183 = vld [vmem:[#allocation8 + $0x78] sm:$0xff]
    %v4184 = vld [vmem:[#allocation8 + $0x80] sm:$0xff]
    %v4185 = vld [vmem:[#allocation8 + $0x88] sm:$0xff]
    %v4186 = vld [vmem:[#allocation8 + $0x90] sm:$0xff]
    %v4187 = vld [vmem:[#allocation8 + $0x98] sm:$0xff]
    %v4188 = vld [vmem:[#allocation8 + $0xa0] sm:$0xff]
    %v4189 = vld [vmem:[#allocation8 + $0xa8] sm:$0xff]
    %v4190 = vld [vmem:[#allocation8 + $0xb0] sm:$0xff]
    %v4191 = vld [vmem:[#allocation8 + $0xb8] sm:$0xff]
    %v4192 = vld [vmem:[#allocation8 + $0xc0] sm:$0xff]
    %v4193 = vld [vmem:[#allocation8 + $0xc8] sm:$0xff]
    %v4194 = vld [vmem:[#allocation8 + $0xd0] sm:$0xff]
    %v4195 = vld [vmem:[#allocation8 + $0xd8] sm:$0xff]
    %v4196 = vld [vmem:[#allocation8 + $0xe0] sm:$0xff]
    %v4197 = vld [vmem:[#allocation8 + $0xe8] sm:$0xff]
    %v4198 = vld [vmem:[#allocation8 + $0xf0] sm:$0xff]
    %v4199 = vld [vmem:[#allocation8 + $0xf8] sm:$0xff]
    %v4200 = vld [vmem:[#allocation8 + $0x100] sm:$0xff]
    %v4201 = vld [vmem:[#allocation8 + $0x108] sm:$0xff]
    %v4202 = vld [vmem:[#allocation8 + $0x110] sm:$0xff]
    %v4203 = vld [vmem:[#allocation8 + $0x118] sm:$0xff]
    %v4204 = vld [vmem:[#allocation8 + $0x120] sm:$0xff]
    %v4205 = vld [vmem:[#allocation8 + $0x128] sm:$0xff]
    %v4206 = vld [vmem:[#allocation8 + $0x130] sm:$0xff]
    %v4207 = vld [vmem:[#allocation8 + $0x138] sm:$0xff]
    %v4208 = vld [vmem:[#allocation8 + $0x140] sm:$0xff]
    %v4209 = vld [vmem:[#allocation8 + $0x148] sm:$0xff]
    %v4210 = vld [vmem:[#allocation8 + $0x150] sm:$0xff]
    %v4211 = vld [vmem:[#allocation8 + $0x158] sm:$0xff]
    %v4212 = vld [vmem:[#allocation8 + $0x160] sm:$0xff]
    %v4213 = vld [vmem:[#allocation8 + $0x168] sm:$0xff]
    %v4214 = vld [vmem:[#allocation8 + $0x170] sm:$0xff]
    %v4215 = vld [vmem:[#allocation8 + $0x178] sm:$0xff]
    %v4216 = vld [vmem:[#allocation8 + $0x180] sm:$0xff]
    %v4217 = vld [vmem:[#allocation8 + $0x188] sm:$0xff]
    %v4218 = vld [vmem:[#allocation8 + $0x190] sm:$0xff]
    %v4219 = vld [vmem:[#allocation8 + $0x198] sm:$0xff]
    %v4220 = vld [vmem:[#allocation8 + $0x1a0] sm:$0xff]
    %v4221 = vld [vmem:[#allocation8 + $0x1a8] sm:$0xff]
    %v4222 = vld [vmem:[#allocation8 + $0x1b0] sm:$0xff]
    %v4223 = vld [vmem:[#allocation8 + $0x1b8] sm:$0xff]
    %v4224 = vld [vmem:[#allocation8 + $0x1c0] sm:$0xff]
    %v4225 = vld [vmem:[#allocation8 + $0x1c8] sm:$0xff]
    %v4226 = vld [vmem:[#allocation8 + $0x1d0] sm:$0xff]
    %v4227 = vld [vmem:[#allocation8 + $0x1d8] sm:$0xff]
    %v4228 = vld [vmem:[#allocation8 + $0x1e0] sm:$0xff]
    %v4229 = vld [vmem:[#allocation8 + $0x1e8] sm:$0xff]
    %v4230 = vld [vmem:[#allocation8 + $0x1f0] sm:$0xff]
    %v4231 = vld [vmem:[#allocation8 + $0x1f8] sm:$0xff]
    %v4232 = vld [vmem:[#allocation8 + $0x200] sm:$0xff]
    %v4233 = vld [vmem:[#allocation8 + $0x208] sm:$0xff]
    %v4234 = vld [vmem:[#allocation8 + $0x210] sm:$0xff]
    %v4235 = vld [vmem:[#allocation8 + $0x218] sm:$0xff]
    %v4236 = vld [vmem:[#allocation8 + $0x220] sm:$0xff]
    %v4237 = vld [vmem:[#allocation8 + $0x228] sm:$0xff]
    %v4238 = vld [vmem:[#allocation8 + $0x230] sm:$0xff]
    %v4239 = vld [vmem:[#allocation8 + $0x238] sm:$0xff]
    %v4240 = vld [vmem:[#allocation8 + $0x240] sm:$0xff]
    %v4241 = vld [vmem:[#allocation8 + $0x248] sm:$0xff]
    %v4242 = vld [vmem:[#allocation8 + $0x250] sm:$0xff]
    %v4243 = vld [vmem:[#allocation8 + $0x258] sm:$0xff]
    %v4244 = vld [vmem:[#allocation8 + $0x260] sm:$0xff]
    %v4245 = vld [vmem:[#allocation8 + $0x268] sm:$0xff]
    %v4246 = vld [vmem:[#allocation8 + $0x270] sm:$0xff]
    %v4247 = vld [vmem:[#allocation8 + $0x278] sm:$0xff]
    %v4248 = vld [vmem:[#allocation8 + $0x280] sm:$0xff]
    %v4249 = vld [vmem:[#allocation8 + $0x288] sm:$0xff]
    %v4250 = vld [vmem:[#allocation8 + $0x290] sm:$0xff]
    %v4251 = vld [vmem:[#allocation8 + $0x298] sm:$0xff]
    %v4252 = vld [vmem:[#allocation8 + $0x2a0] sm:$0xff]
    %v4253 = vld [vmem:[#allocation8 + $0x2a8] sm:$0xff]
    %v4254 = vld [vmem:[#allocation8 + $0x2b0] sm:$0xff]
    %v4255 = vld [vmem:[#allocation8 + $0x2b8] sm:$0xff]
    %v4256 = vld [vmem:[#allocation8 + $0x2c0] sm:$0xff]
    %v4257 = vld [vmem:[#allocation8 + $0x2c8] sm:$0xff]
    %v4258 = vld [vmem:[#allocation8 + $0x2d0] sm:$0xff]
    %v4259 = vld [vmem:[#allocation8 + $0x2d8] sm:$0xff]
    %v4260 = vld [vmem:[#allocation8 + $0x2e0] sm:$0xff]
    %v4261 = vld [vmem:[#allocation8 + $0x2e8] sm:$0xff]
    %v4262 = vld [vmem:[#allocation8 + $0x2f0] sm:$0xff]
    %v4263 = vld [vmem:[#allocation8 + $0x2f8] sm:$0xff]
    %v4264 = vld [vmem:[#allocation8 + $0x300] sm:$0xff]
    %v4265 = vld [vmem:[#allocation8 + $0x308] sm:$0xff]
    %v4266 = vld [vmem:[#allocation8 + $0x310] sm:$0xff]
    %v4267 = vld [vmem:[#allocation8 + $0x318] sm:$0xff]
    %v4268 = vld [vmem:[#allocation8 + $0x320] sm:$0xff]
    %v4269 = vld [vmem:[#allocation8 + $0x328] sm:$0xff]
    %v4270 = vld [vmem:[#allocation8 + $0x330] sm:$0xff]
    %v4271 = vld [vmem:[#allocation8 + $0x338] sm:$0xff]
    %v4272 = vld [vmem:[#allocation8 + $0x340] sm:$0xff]
    %v4273 = vld [vmem:[#allocation8 + $0x348] sm:$0xff]
    %v4274 = vld [vmem:[#allocation8 + $0x350] sm:$0xff]
    %v4275 = vld [vmem:[#allocation8 + $0x358] sm:$0xff]
    %v4276 = vld [vmem:[#allocation8 + $0x360] sm:$0xff]
    %v4277 = vld [vmem:[#allocation8 + $0x368] sm:$0xff]
    %v4278 = vld [vmem:[#allocation8 + $0x370] sm:$0xff]
    %v4279 = vld [vmem:[#allocation8 + $0x378] sm:$0xff]
    %v4280 = vld [vmem:[#allocation8 + $0x380] sm:$0xff]
    %v4281 = vld [vmem:[#allocation8 + $0x388] sm:$0xff]
    %v4282 = vld [vmem:[#allocation8 + $0x390] sm:$0xff]
    %v4283 = vld [vmem:[#allocation8 + $0x398] sm:$0xff]
    %v4284 = vld [vmem:[#allocation8 + $0x3a0] sm:$0xff]
    %v4285 = vld [vmem:[#allocation8 + $0x3a8] sm:$0xff]
    %v4286 = vld [vmem:[#allocation8 + $0x3b0] sm:$0xff]
    %v4287 = vld [vmem:[#allocation8 + $0x3b8] sm:$0xff]
    %v4288 = vld [vmem:[#allocation8 + $0x3c0] sm:$0xff]
    %v4289 = vld [vmem:[#allocation8 + $0x3c8] sm:$0xff]
    %v4290 = vld [vmem:[#allocation8 + $0x3d0] sm:$0xff]
    %v4291 = vld [vmem:[#allocation8 + $0x3d8] sm:$0xff]
    %v4292 = vld [vmem:[#allocation8 + $0x3e0] sm:$0xff]
    %v4293 = vld [vmem:[#allocation8 + $0x3e8] sm:$0xff]
    %v4294 = vld [vmem:[#allocation8 + $0x3f0] sm:$0xff]
    %v4295 = vld [vmem:[#allocation8 + $0x3f8] sm:$0xff]
    %v4296 = vld [vmem:[#allocation8 + $0x400] sm:$0xff]
    %v4297 = vld [vmem:[#allocation8 + $0x408] sm:$0xff]
    %v4298 = vld [vmem:[#allocation8 + $0x410] sm:$0xff]
    %v4299 = vld [vmem:[#allocation8 + $0x418] sm:$0xff]
    %v4300 = vld [vmem:[#allocation8 + $0x420] sm:$0xff]
    %v4301 = vld [vmem:[#allocation8 + $0x428] sm:$0xff]
    %v4302 = vld [vmem:[#allocation8 + $0x430] sm:$0xff]
    %v4303 = vld [vmem:[#allocation8 + $0x438] sm:$0xff]
    %v4304 = vld [vmem:[#allocation8 + $0x440] sm:$0xff]
    %v4305 = vld [vmem:[#allocation8 + $0x448] sm:$0xff]
    %v4306 = vld [vmem:[#allocation8 + $0x450] sm:$0xff]
    %v4307 = vld [vmem:[#allocation8 + $0x458] sm:$0xff]
    %v4308 = vld [vmem:[#allocation8 + $0x460] sm:$0xff]
    %v4309 = vld [vmem:[#allocation8 + $0x468] sm:$0xff]
    %v4310 = vld [vmem:[#allocation8 + $0x470] sm:$0xff]
    %v4311 = vld [vmem:[#allocation8 + $0x478] sm:$0xff]
    %v4312 = vld [vmem:[#allocation8 + $0x480] sm:$0xff]
    %v4313 = vld [vmem:[#allocation8 + $0x488] sm:$0xff]
    %v4314 = vld [vmem:[#allocation8 + $0x490] sm:$0xff]
    %v4315 = vld [vmem:[#allocation8 + $0x498] sm:$0xff]
    %v4316 = vld [vmem:[#allocation8 + $0x4a0] sm:$0xff]
    %v4317 = vld [vmem:[#allocation8 + $0x4a8] sm:$0xff]
    %v4318 = vld [vmem:[#allocation8 + $0x4b0] sm:$0xff]
    %v4319 = vld [vmem:[#allocation8 + $0x4b8] sm:$0xff]
    %v4320 = vld [vmem:[#allocation8 + $0x4c0] sm:$0xff]
    %v4321 = vld [vmem:[#allocation8 + $0x4c8] sm:$0xff]
    %v4322 = vld [vmem:[#allocation8 + $0x4d0] sm:$0xff]
    %v4323 = vld [vmem:[#allocation8 + $0x4d8] sm:$0xff]
    %v4324 = vld [vmem:[#allocation8 + $0x4e0] sm:$0xff]
    %v4325 = vld [vmem:[#allocation8 + $0x4e8] sm:$0xff]
    %v4326 = vld [vmem:[#allocation8 + $0x4f0] sm:$0xff]
    %v4327 = vld [vmem:[#allocation8 + $0x4f8] sm:$0xff]
    %v4328 = vld [vmem:[#allocation8 + $0x500] sm:$0xff]
    %v4329 = vld [vmem:[#allocation8 + $0x508] sm:$0xff]
    %v4330 = vld [vmem:[#allocation8 + $0x510] sm:$0xff]
    %v4331 = vld [vmem:[#allocation8 + $0x518] sm:$0xff]
    %v4332 = vld [vmem:[#allocation8 + $0x520] sm:$0xff]
    %v4333 = vld [vmem:[#allocation8 + $0x528] sm:$0xff]
    %v4334 = vld [vmem:[#allocation8 + $0x530] sm:$0xff]
    %v4335 = vld [vmem:[#allocation8 + $0x538] sm:$0xff]
    %v4336 = vld [vmem:[#allocation8 + $0x540] sm:$0xff]
    %v4337 = vld [vmem:[#allocation8 + $0x548] sm:$0xff]
    %v4338 = vld [vmem:[#allocation8 + $0x550] sm:$0xff]
    %v4339 = vld [vmem:[#allocation8 + $0x558] sm:$0xff]
    %v4340 = vld [vmem:[#allocation8 + $0x560] sm:$0xff]
    %v4341 = vld [vmem:[#allocation8 + $0x568] sm:$0xff]
    %v4342 = vld [vmem:[#allocation8 + $0x570] sm:$0xff]
    %v4343 = vld [vmem:[#allocation8 + $0x578] sm:$0xff]
    %v4344 = vld [vmem:[#allocation8 + $0x580] sm:$0xff]
    %v4345 = vld [vmem:[#allocation8 + $0x588] sm:$0xff]
    %v4346 = vld [vmem:[#allocation8 + $0x590] sm:$0xff]
    %v4347 = vld [vmem:[#allocation8 + $0x598] sm:$0xff]
    %v4348 = vld [vmem:[#allocation8 + $0x5a0] sm:$0xff]
    %v4349 = vld [vmem:[#allocation8 + $0x5a8] sm:$0xff]
    %v4350 = vld [vmem:[#allocation8 + $0x5b0] sm:$0xff]
    %v4351 = vld [vmem:[#allocation8 + $0x5b8] sm:$0xff]
    %v4352 = vld [vmem:[#allocation8 + $0x5c0] sm:$0xff]
    %v4353 = vld [vmem:[#allocation8 + $0x5c8] sm:$0xff]
    %v4354 = vld [vmem:[#allocation8 + $0x5d0] sm:$0xff]
    %v4355 = vld [vmem:[#allocation8 + $0x5d8] sm:$0xff]
    %v4356 = vld [vmem:[#allocation8 + $0x5e0] sm:$0xff]
    %v4357 = vld [vmem:[#allocation8 + $0x5e8] sm:$0xff]
    %v4358 = vld [vmem:[#allocation8 + $0x5f0] sm:$0xff]
    %v4359 = vld [vmem:[#allocation8 + $0x5f8] sm:$0xff]
    %v4360 = vld [vmem:[#allocation8 + $0x600] sm:$0xff]
    %v4361 = vld [vmem:[#allocation8 + $0x608] sm:$0xff]
    %v4362 = vld [vmem:[#allocation8 + $0x610] sm:$0xff]
    %v4363 = vld [vmem:[#allocation8 + $0x618] sm:$0xff]
    %v4364 = vld [vmem:[#allocation8 + $0x620] sm:$0xff]
    %v4365 = vld [vmem:[#allocation8 + $0x628] sm:$0xff]
    %v4366 = vld [vmem:[#allocation8 + $0x630] sm:$0xff]
    %v4367 = vld [vmem:[#allocation8 + $0x638] sm:$0xff]
    %v4368 = vld [vmem:[#allocation8 + $0x640] sm:$0xff]
    %v4369 = vld [vmem:[#allocation8 + $0x648] sm:$0xff]
    %v4370 = vld [vmem:[#allocation8 + $0x650] sm:$0xff]
    %v4371 = vld [vmem:[#allocation8 + $0x658] sm:$0xff]
    %v4372 = vld [vmem:[#allocation8 + $0x660] sm:$0xff]
    %v4373 = vld [vmem:[#allocation8 + $0x668] sm:$0xff]
    %v4374 = vld [vmem:[#allocation8 + $0x670] sm:$0xff]
    %v4375 = vld [vmem:[#allocation8 + $0x678] sm:$0xff]
    %v4376 = vld [vmem:[#allocation8 + $0x680] sm:$0xff]
    %v4377 = vld [vmem:[#allocation8 + $0x688] sm:$0xff]
    %v4378 = vld [vmem:[#allocation8 + $0x690] sm:$0xff]
    %v4379 = vld [vmem:[#allocation8 + $0x698] sm:$0xff]
    %v4380 = vld [vmem:[#allocation8 + $0x6a0] sm:$0xff]
    %v4381 = vld [vmem:[#allocation8 + $0x6a8] sm:$0xff]
    %v4382 = vld [vmem:[#allocation8 + $0x6b0] sm:$0xff]
    %v4383 = vld [vmem:[#allocation8 + $0x6b8] sm:$0xff]
    %v4384 = vld [vmem:[#allocation8 + $0x6c0] sm:$0xff]
    %v4385 = vld [vmem:[#allocation8 + $0x6c8] sm:$0xff]
    %v4386 = vld [vmem:[#allocation8 + $0x6d0] sm:$0xff]
    %v4387 = vld [vmem:[#allocation8 + $0x6d8] sm:$0xff]
    %v4388 = vld [vmem:[#allocation8 + $0x6e0] sm:$0xff]
    %v4389 = vld [vmem:[#allocation8 + $0x6e8] sm:$0xff]
    %v4390 = vld [vmem:[#allocation8 + $0x6f0] sm:$0xff]
    %v4391 = vld [vmem:[#allocation8 + $0x6f8] sm:$0xff]
    %v4392 = vld [vmem:[#allocation8 + $0x700] sm:$0xff]
    %v4393 = vld [vmem:[#allocation8 + $0x708] sm:$0xff]
    %v4394 = vld [vmem:[#allocation8 + $0x710] sm:$0xff]
    %v4395 = vld [vmem:[#allocation8 + $0x718] sm:$0xff]
    %v4396 = vld [vmem:[#allocation8 + $0x720] sm:$0xff]
    %v4397 = vld [vmem:[#allocation8 + $0x728] sm:$0xff]
    %v4398 = vld [vmem:[#allocation8 + $0x730] sm:$0xff]
    %v4399 = vld [vmem:[#allocation8 + $0x738] sm:$0xff]
    %v4400 = vld [vmem:[#allocation8 + $0x740] sm:$0xff]
    %v4401 = vld [vmem:[#allocation8 + $0x748] sm:$0xff]
    %v4402 = vld [vmem:[#allocation8 + $0x750] sm:$0xff]
    %v4403 = vld [vmem:[#allocation8 + $0x758] sm:$0xff]
    %v4404 = vld [vmem:[#allocation8 + $0x760] sm:$0xff]
    %v4405 = vld [vmem:[#allocation8 + $0x768] sm:$0xff]
    %v4406 = vld [vmem:[#allocation8 + $0x770] sm:$0xff]
    %v4407 = vld [vmem:[#allocation8 + $0x778] sm:$0xff]
    %v4408 = vld [vmem:[#allocation8 + $0x780] sm:$0xff]
    %v4409 = vld [vmem:[#allocation8 + $0x788] sm:$0xff]
    %v4410 = vld [vmem:[#allocation8 + $0x790] sm:$0xff]
    %v4411 = vld [vmem:[#allocation8 + $0x798] sm:$0xff]
    %v4412 = vld [vmem:[#allocation8 + $0x7a0] sm:$0xff]
    %v4413 = vld [vmem:[#allocation8 + $0x7a8] sm:$0xff]
    %v4414 = vld [vmem:[#allocation8 + $0x7b0] sm:$0xff]
    %v4415 = vld [vmem:[#allocation8 + $0x7b8] sm:$0xff]
    %v4416 = vld [vmem:[#allocation8 + $0x7c0] sm:$0xff]
    %v4417 = vld [vmem:[#allocation8 + $0x7c8] sm:$0xff]
    %v4418 = vld [vmem:[#allocation8 + $0x7d0] sm:$0xff]
    %v4419 = vld [vmem:[#allocation8 + $0x7d8] sm:$0xff]
    %v4420 = vld [vmem:[#allocation8 + $0x7e0] sm:$0xff]
    %v4421 = vld [vmem:[#allocation8 + $0x7e8] sm:$0xff]
    %v4422 = vld [vmem:[#allocation8 + $0x7f0] sm:$0xff]
    %v4423 = vld [vmem:[#allocation8 + $0x7f8] sm:$0xff]
    %v4424 = vld [vmem:[#allocation10] sm:$0xf]
    %v4426 = vperm.slane %v4424, 0
    %v4427 = vperm.slane %v4424, 1
    %v4428 = vperm.slane %v4424, 2
    %v4429 = vperm.slane %v4424, 3
    %v4690 = vunpack.c.l.b16 %v4168
    %v4691 = vunpack.c.h.b16 %v4168
    %v4692 = vunpack.c.l.b16 %v4169
    %v4693 = vunpack.c.h.b16 %v4169
    %v4694 = vunpack.c.l.b16 %v4170
    %v4695 = vunpack.c.h.b16 %v4170
    %v4696 = vunpack.c.l.b16 %v4171
    %v4697 = vunpack.c.h.b16 %v4171
    %v4698 = vunpack.c.l.b16 %v4172
    %v4699 = vunpack.c.h.b16 %v4172
    %v4700 = vunpack.c.l.b16 %v4173
    %v4701 = vunpack.c.h.b16 %v4173
    %v4702 = vunpack.c.l.b16 %v4174
    %v4703 = vunpack.c.h.b16 %v4174
    %v4704 = vunpack.c.l.b16 %v4175
    %v4705 = vunpack.c.h.b16 %v4175
    %v4706 = vunpack.c.l.b16 %v4176
    %v4707 = vunpack.c.h.b16 %v4176
    %v4708 = vunpack.c.l.b16 %v4177
    %v4709 = vunpack.c.h.b16 %v4177
    %v4710 = vunpack.c.l.b16 %v4178
    %v4711 = vunpack.c.h.b16 %v4178
    %v4712 = vunpack.c.l.b16 %v4179
    %v4713 = vunpack.c.h.b16 %v4179
    %v4714 = vunpack.c.l.b16 %v4180
    %v4715 = vunpack.c.h.b16 %v4180
    %v4716 = vunpack.c.l.b16 %v4181
    %v4717 = vunpack.c.h.b16 %v4181
    %v4718 = vunpack.c.l.b16 %v4182
    %v4719 = vunpack.c.h.b16 %v4182
    %v4720 = vunpack.c.l.b16 %v4183
    %v4721 = vunpack.c.h.b16 %v4183
    %v4722 = vunpack.c.l.b16 %v4184
    %v4723 = vunpack.c.h.b16 %v4184
    %v4724 = vunpack.c.l.b16 %v4185
    %v4725 = vunpack.c.h.b16 %v4185
    %v4726 = vunpack.c.l.b16 %v4186
    %v4727 = vunpack.c.h.b16 %v4186
    %v4728 = vunpack.c.l.b16 %v4187
    %v4729 = vunpack.c.h.b16 %v4187
    %v4730 = vunpack.c.l.b16 %v4188
    %v4731 = vunpack.c.h.b16 %v4188
    %v4732 = vunpack.c.l.b16 %v4189
    %v4733 = vunpack.c.h.b16 %v4189
    %v4734 = vunpack.c.l.b16 %v4190
    %v4735 = vunpack.c.h.b16 %v4190
    %v4736 = vunpack.c.l.b16 %v4191
    %v4737 = vunpack.c.h.b16 %v4191
    %v4738 = vunpack.c.l.b16 %v4192
    %v4739 = vunpack.c.h.b16 %v4192
    %v4740 = vunpack.c.l.b16 %v4193
    %v4741 = vunpack.c.h.b16 %v4193
    %v4742 = vunpack.c.l.b16 %v4194
    %v4743 = vunpack.c.h.b16 %v4194
    %v4744 = vunpack.c.l.b16 %v4195
    %v4745 = vunpack.c.h.b16 %v4195
    %v4746 = vunpack.c.l.b16 %v4196
    %v4747 = vunpack.c.h.b16 %v4196
    %v4748 = vunpack.c.l.b16 %v4197
    %v4749 = vunpack.c.h.b16 %v4197
    %v4750 = vunpack.c.l.b16 %v4198
    %v4751 = vunpack.c.h.b16 %v4198
    %v4752 = vunpack.c.l.b16 %v4199
    %v4753 = vunpack.c.h.b16 %v4199
    %v4754 = vunpack.c.l.b16 %v4200
    %v4755 = vunpack.c.h.b16 %v4200
    %v4756 = vunpack.c.l.b16 %v4201
    %v4757 = vunpack.c.h.b16 %v4201
    %v4758 = vunpack.c.l.b16 %v4202
    %v4759 = vunpack.c.h.b16 %v4202
    %v4760 = vunpack.c.l.b16 %v4203
    %v4761 = vunpack.c.h.b16 %v4203
    %v4762 = vunpack.c.l.b16 %v4204
    %v4763 = vunpack.c.h.b16 %v4204
    %v4764 = vunpack.c.l.b16 %v4205
    %v4765 = vunpack.c.h.b16 %v4205
    %v4766 = vunpack.c.l.b16 %v4206
    %v4767 = vunpack.c.h.b16 %v4206
    %v4768 = vunpack.c.l.b16 %v4207
    %v4769 = vunpack.c.h.b16 %v4207
    %v4770 = vunpack.c.l.b16 %v4208
    %v4771 = vunpack.c.h.b16 %v4208
    %v4772 = vunpack.c.l.b16 %v4209
    %v4773 = vunpack.c.h.b16 %v4209
    %v4774 = vunpack.c.l.b16 %v4210
    %v4775 = vunpack.c.h.b16 %v4210
    %v4776 = vunpack.c.l.b16 %v4211
    %v4777 = vunpack.c.h.b16 %v4211
    %v4778 = vunpack.c.l.b16 %v4212
    %v4779 = vunpack.c.h.b16 %v4212
    %v4780 = vunpack.c.l.b16 %v4213
    %v4781 = vunpack.c.h.b16 %v4213
    %v4782 = vunpack.c.l.b16 %v4214
    %v4783 = vunpack.c.h.b16 %v4214
    %v4784 = vunpack.c.l.b16 %v4215
    %v4785 = vunpack.c.h.b16 %v4215
    %v4786 = vunpack.c.l.b16 %v4216
    %v4787 = vunpack.c.h.b16 %v4216
    %v4788 = vunpack.c.l.b16 %v4217
    %v4789 = vunpack.c.h.b16 %v4217
    %v4790 = vunpack.c.l.b16 %v4218
    %v4791 = vunpack.c.h.b16 %v4218
    %v4792 = vunpack.c.l.b16 %v4219
    %v4793 = vunpack.c.h.b16 %v4219
    %v4794 = vunpack.c.l.b16 %v4220
    %v4795 = vunpack.c.h.b16 %v4220
    %v4796 = vunpack.c.l.b16 %v4221
    %v4797 = vunpack.c.h.b16 %v4221
    %v4798 = vunpack.c.l.b16 %v4222
    %v4799 = vunpack.c.h.b16 %v4222
    %v4800 = vunpack.c.l.b16 %v4223
    %v4801 = vunpack.c.h.b16 %v4223
    %v4802 = vunpack.c.l.b16 %v4224
    %v4803 = vunpack.c.h.b16 %v4224
    %v4804 = vunpack.c.l.b16 %v4225
    %v4805 = vunpack.c.h.b16 %v4225
    %v4806 = vunpack.c.l.b16 %v4226
    %v4807 = vunpack.c.h.b16 %v4226
    %v4808 = vunpack.c.l.b16 %v4227
    %v4809 = vunpack.c.h.b16 %v4227
    %v4810 = vunpack.c.l.b16 %v4228
    %v4811 = vunpack.c.h.b16 %v4228
    %v4812 = vunpack.c.l.b16 %v4229
    %v4813 = vunpack.c.h.b16 %v4229
    %v4814 = vunpack.c.l.b16 %v4230
    %v4815 = vunpack.c.h.b16 %v4230
    %v4816 = vunpack.c.l.b16 %v4231
    %v4817 = vunpack.c.h.b16 %v4231
    %v4818 = vunpack.c.l.b16 %v4232
    %v4819 = vunpack.c.h.b16 %v4232
    %v4820 = vunpack.c.l.b16 %v4233
    %v4821 = vunpack.c.h.b16 %v4233
    %v4822 = vunpack.c.l.b16 %v4234
    %v4823 = vunpack.c.h.b16 %v4234
    %v4824 = vunpack.c.l.b16 %v4235
    %v4825 = vunpack.c.h.b16 %v4235
    %v4826 = vunpack.c.l.b16 %v4236
    %v4827 = vunpack.c.h.b16 %v4236
    %v4828 = vunpack.c.l.b16 %v4237
    %v4829 = vunpack.c.h.b16 %v4237
    %v4830 = vunpack.c.l.b16 %v4238
    %v4831 = vunpack.c.h.b16 %v4238
    %v4832 = vunpack.c.l.b16 %v4239
    %v4833 = vunpack.c.h.b16 %v4239
    %v4834 = vunpack.c.l.b16 %v4240
    %v4835 = vunpack.c.h.b16 %v4240
    %v4836 = vunpack.c.l.b16 %v4241
    %v4837 = vunpack.c.h.b16 %v4241
    %v4838 = vunpack.c.l.b16 %v4242
    %v4839 = vunpack.c.h.b16 %v4242
    %v4840 = vunpack.c.l.b16 %v4243
    %v4841 = vunpack.c.h.b16 %v4243
    %v4842 = vunpack.c.l.b16 %v4244
    %v4843 = vunpack.c.h.b16 %v4244
    %v4844 = vunpack.c.l.b16 %v4245
    %v4845 = vunpack.c.h.b16 %v4245
    %v4846 = vunpack.c.l.b16 %v4246
    %v4847 = vunpack.c.h.b16 %v4246
    %v4848 = vunpack.c.l.b16 %v4247
    %v4849 = vunpack.c.h.b16 %v4247
    %v4850 = vunpack.c.l.b16 %v4248
    %v4851 = vunpack.c.h.b16 %v4248
    %v4852 = vunpack.c.l.b16 %v4249
    %v4853 = vunpack.c.h.b16 %v4249
    %v4854 = vunpack.c.l.b16 %v4250
    %v4855 = vunpack.c.h.b16 %v4250
    %v4856 = vunpack.c.l.b16 %v4251
    %v4857 = vunpack.c.h.b16 %v4251
    %v4858 = vunpack.c.l.b16 %v4252
    %v4859 = vunpack.c.h.b16 %v4252
    %v4860 = vunpack.c.l.b16 %v4253
    %v4861 = vunpack.c.h.b16 %v4253
    %v4862 = vunpack.c.l.b16 %v4254
    %v4863 = vunpack.c.h.b16 %v4254
    %v4864 = vunpack.c.l.b16 %v4255
    %v4865 = vunpack.c.h.b16 %v4255
    %v4866 = vunpack.c.l.b16 %v4256
    %v4867 = vunpack.c.h.b16 %v4256
    %v4868 = vunpack.c.l.b16 %v4257
    %v4869 = vunpack.c.h.b16 %v4257
    %v4870 = vunpack.c.l.b16 %v4258
    %v4871 = vunpack.c.h.b16 %v4258
    %v4872 = vunpack.c.l.b16 %v4259
    %v4873 = vunpack.c.h.b16 %v4259
    %v4874 = vunpack.c.l.b16 %v4260
    %v4875 = vunpack.c.h.b16 %v4260
    %v4876 = vunpack.c.l.b16 %v4261
    %v4877 = vunpack.c.h.b16 %v4261
    %v4878 = vunpack.c.l.b16 %v4262
    %v4879 = vunpack.c.h.b16 %v4262
    %v4880 = vunpack.c.l.b16 %v4263
    %v4881 = vunpack.c.h.b16 %v4263
    %v4882 = vunpack.c.l.b16 %v4264
    %v4883 = vunpack.c.h.b16 %v4264
    %v4884 = vunpack.c.l.b16 %v4265
    %v4885 = vunpack.c.h.b16 %v4265
    %v4886 = vunpack.c.l.b16 %v4266
    %v4887 = vunpack.c.h.b16 %v4266
    %v4888 = vunpack.c.l.b16 %v4267
    %v4889 = vunpack.c.h.b16 %v4267
    %v4890 = vunpack.c.l.b16 %v4268
    %v4891 = vunpack.c.h.b16 %v4268
    %v4892 = vunpack.c.l.b16 %v4269
    %v4893 = vunpack.c.h.b16 %v4269
    %v4894 = vunpack.c.l.b16 %v4270
    %v4895 = vunpack.c.h.b16 %v4270
    %v4896 = vunpack.c.l.b16 %v4271
    %v4897 = vunpack.c.h.b16 %v4271
    %v4898 = vunpack.c.l.b16 %v4272
    %v4899 = vunpack.c.h.b16 %v4272
    %v4900 = vunpack.c.l.b16 %v4273
    %v4901 = vunpack.c.h.b16 %v4273
    %v4902 = vunpack.c.l.b16 %v4274
    %v4903 = vunpack.c.h.b16 %v4274
    %v4904 = vunpack.c.l.b16 %v4275
    %v4905 = vunpack.c.h.b16 %v4275
    %v4906 = vunpack.c.l.b16 %v4276
    %v4907 = vunpack.c.h.b16 %v4276
    %v4908 = vunpack.c.l.b16 %v4277
    %v4909 = vunpack.c.h.b16 %v4277
    %v4910 = vunpack.c.l.b16 %v4278
    %v4911 = vunpack.c.h.b16 %v4278
    %v4912 = vunpack.c.l.b16 %v4279
    %v4913 = vunpack.c.h.b16 %v4279
    %v4914 = vunpack.c.l.b16 %v4280
    %v4915 = vunpack.c.h.b16 %v4280
    %v4916 = vunpack.c.l.b16 %v4281
    %v4917 = vunpack.c.h.b16 %v4281
    %v4918 = vunpack.c.l.b16 %v4282
    %v4919 = vunpack.c.h.b16 %v4282
    %v4920 = vunpack.c.l.b16 %v4283
    %v4921 = vunpack.c.h.b16 %v4283
    %v4922 = vunpack.c.l.b16 %v4284
    %v4923 = vunpack.c.h.b16 %v4284
    %v4924 = vunpack.c.l.b16 %v4285
    %v4925 = vunpack.c.h.b16 %v4285
    %v4926 = vunpack.c.l.b16 %v4286
    %v4927 = vunpack.c.h.b16 %v4286
    %v4928 = vunpack.c.l.b16 %v4287
    %v4929 = vunpack.c.h.b16 %v4287
    %v4930 = vunpack.c.l.b16 %v4288
    %v4931 = vunpack.c.h.b16 %v4288
    %v4932 = vunpack.c.l.b16 %v4289
    %v4933 = vunpack.c.h.b16 %v4289
    %v4934 = vunpack.c.l.b16 %v4290
    %v4935 = vunpack.c.h.b16 %v4290
    %v4936 = vunpack.c.l.b16 %v4291
    %v4937 = vunpack.c.h.b16 %v4291
    %v4938 = vunpack.c.l.b16 %v4292
    %v4939 = vunpack.c.h.b16 %v4292
    %v4940 = vunpack.c.l.b16 %v4293
    %v4941 = vunpack.c.h.b16 %v4293
    %v4942 = vunpack.c.l.b16 %v4294
    %v4943 = vunpack.c.h.b16 %v4294
    %v4944 = vunpack.c.l.b16 %v4295
    %v4945 = vunpack.c.h.b16 %v4295
    %v4946 = vunpack.c.l.b16 %v4296
    %v4947 = vunpack.c.h.b16 %v4296
    %v4948 = vunpack.c.l.b16 %v4297
    %v4949 = vunpack.c.h.b16 %v4297
    %v4950 = vunpack.c.l.b16 %v4298
    %v4951 = vunpack.c.h.b16 %v4298
    %v4952 = vunpack.c.l.b16 %v4299
    %v4953 = vunpack.c.h.b16 %v4299
    %v4954 = vunpack.c.l.b16 %v4300
    %v4955 = vunpack.c.h.b16 %v4300
    %v4956 = vunpack.c.l.b16 %v4301
    %v4957 = vunpack.c.h.b16 %v4301
    %v4958 = vunpack.c.l.b16 %v4302
    %v4959 = vunpack.c.h.b16 %v4302
    %v4960 = vunpack.c.l.b16 %v4303
    %v4961 = vunpack.c.h.b16 %v4303
    %v4962 = vunpack.c.l.b16 %v4304
    %v4963 = vunpack.c.h.b16 %v4304
    %v4964 = vunpack.c.l.b16 %v4305
    %v4965 = vunpack.c.h.b16 %v4305
    %v4966 = vunpack.c.l.b16 %v4306
    %v4967 = vunpack.c.h.b16 %v4306
    %v4968 = vunpack.c.l.b16 %v4307
    %v4969 = vunpack.c.h.b16 %v4307
    %v4970 = vunpack.c.l.b16 %v4308
    %v4971 = vunpack.c.h.b16 %v4308
    %v4972 = vunpack.c.l.b16 %v4309
    %v4973 = vunpack.c.h.b16 %v4309
    %v4974 = vunpack.c.l.b16 %v4310
    %v4975 = vunpack.c.h.b16 %v4310
    %v4976 = vunpack.c.l.b16 %v4311
    %v4977 = vunpack.c.h.b16 %v4311
    %v4978 = vunpack.c.l.b16 %v4312
    %v4979 = vunpack.c.h.b16 %v4312
    %v4980 = vunpack.c.l.b16 %v4313
    %v4981 = vunpack.c.h.b16 %v4313
    %v4982 = vunpack.c.l.b16 %v4314
    %v4983 = vunpack.c.h.b16 %v4314
    %v4984 = vunpack.c.l.b16 %v4315
    %v4985 = vunpack.c.h.b16 %v4315
    %v4986 = vunpack.c.l.b16 %v4316
    %v4987 = vunpack.c.h.b16 %v4316
    %v4988 = vunpack.c.l.b16 %v4317
    %v4989 = vunpack.c.h.b16 %v4317
    %v4990 = vunpack.c.l.b16 %v4318
    %v4991 = vunpack.c.h.b16 %v4318
    %v4992 = vunpack.c.l.b16 %v4319
    %v4993 = vunpack.c.h.b16 %v4319
    %v4994 = vunpack.c.l.b16 %v4320
    %v4995 = vunpack.c.h.b16 %v4320
    %v4996 = vunpack.c.l.b16 %v4321
    %v4997 = vunpack.c.h.b16 %v4321
    %v4998 = vunpack.c.l.b16 %v4322
    %v4999 = vunpack.c.h.b16 %v4322
    %v5000 = vunpack.c.l.b16 %v4323
    %v5001 = vunpack.c.h.b16 %v4323
    %v5002 = vunpack.c.l.b16 %v4324
    %v5003 = vunpack.c.h.b16 %v4324
    %v5004 = vunpack.c.l.b16 %v4325
    %v5005 = vunpack.c.h.b16 %v4325
    %v5006 = vunpack.c.l.b16 %v4326
    %v5007 = vunpack.c.h.b16 %v4326
    %v5008 = vunpack.c.l.b16 %v4327
    %v5009 = vunpack.c.h.b16 %v4327
    %v5010 = vunpack.c.l.b16 %v4328
    %v5011 = vunpack.c.h.b16 %v4328
    %v5012 = vunpack.c.l.b16 %v4329
    %v5013 = vunpack.c.h.b16 %v4329
    %v5014 = vunpack.c.l.b16 %v4330
    %v5015 = vunpack.c.h.b16 %v4330
    %v5016 = vunpack.c.l.b16 %v4331
    %v5017 = vunpack.c.h.b16 %v4331
    %v5018 = vunpack.c.l.b16 %v4332
    %v5019 = vunpack.c.h.b16 %v4332
    %v5020 = vunpack.c.l.b16 %v4333
    %v5021 = vunpack.c.h.b16 %v4333
    %v5022 = vunpack.c.l.b16 %v4334
    %v5023 = vunpack.c.h.b16 %v4334
    %v5024 = vunpack.c.l.b16 %v4335
    %v5025 = vunpack.c.h.b16 %v4335
    %v5026 = vunpack.c.l.b16 %v4336
    %v5027 = vunpack.c.h.b16 %v4336
    %v5028 = vunpack.c.l.b16 %v4337
    %v5029 = vunpack.c.h.b16 %v4337
    %v5030 = vunpack.c.l.b16 %v4338
    %v5031 = vunpack.c.h.b16 %v4338
    %v5032 = vunpack.c.l.b16 %v4339
    %v5033 = vunpack.c.h.b16 %v4339
    %v5034 = vunpack.c.l.b16 %v4340
    %v5035 = vunpack.c.h.b16 %v4340
    %v5036 = vunpack.c.l.b16 %v4341
    %v5037 = vunpack.c.h.b16 %v4341
    %v5038 = vunpack.c.l.b16 %v4342
    %v5039 = vunpack.c.h.b16 %v4342
    %v5040 = vunpack.c.l.b16 %v4343
    %v5041 = vunpack.c.h.b16 %v4343
    %v5042 = vunpack.c.l.b16 %v4344
    %v5043 = vunpack.c.h.b16 %v4344
    %v5044 = vunpack.c.l.b16 %v4345
    %v5045 = vunpack.c.h.b16 %v4345
    %v5046 = vunpack.c.l.b16 %v4346
    %v5047 = vunpack.c.h.b16 %v4346
    %v5048 = vunpack.c.l.b16 %v4347
    %v5049 = vunpack.c.h.b16 %v4347
    %v5050 = vunpack.c.l.b16 %v4348
    %v5051 = vunpack.c.h.b16 %v4348
    %v5052 = vunpack.c.l.b16 %v4349
    %v5053 = vunpack.c.h.b16 %v4349
    %v5054 = vunpack.c.l.b16 %v4350
    %v5055 = vunpack.c.h.b16 %v4350
    %v5056 = vunpack.c.l.b16 %v4351
    %v5057 = vunpack.c.h.b16 %v4351
    %v5058 = vunpack.c.l.b16 %v4352
    %v5059 = vunpack.c.h.b16 %v4352
    %v5060 = vunpack.c.l.b16 %v4353
    %v5061 = vunpack.c.h.b16 %v4353
    %v5062 = vunpack.c.l.b16 %v4354
    %v5063 = vunpack.c.h.b16 %v4354
    %v5064 = vunpack.c.l.b16 %v4355
    %v5065 = vunpack.c.h.b16 %v4355
    %v5066 = vunpack.c.l.b16 %v4356
    %v5067 = vunpack.c.h.b16 %v4356
    %v5068 = vunpack.c.l.b16 %v4357
    %v5069 = vunpack.c.h.b16 %v4357
    %v5070 = vunpack.c.l.b16 %v4358
    %v5071 = vunpack.c.h.b16 %v4358
    %v5072 = vunpack.c.l.b16 %v4359
    %v5073 = vunpack.c.h.b16 %v4359
    %v5074 = vunpack.c.l.b16 %v4360
    %v5075 = vunpack.c.h.b16 %v4360
    %v5076 = vunpack.c.l.b16 %v4361
    %v5077 = vunpack.c.h.b16 %v4361
    %v5078 = vunpack.c.l.b16 %v4362
    %v5079 = vunpack.c.h.b16 %v4362
    %v5080 = vunpack.c.l.b16 %v4363
    %v5081 = vunpack.c.h.b16 %v4363
    %v5082 = vunpack.c.l.b16 %v4364
    %v5083 = vunpack.c.h.b16 %v4364
    %v5084 = vunpack.c.l.b16 %v4365
    %v5085 = vunpack.c.h.b16 %v4365
    %v5086 = vunpack.c.l.b16 %v4366
    %v5087 = vunpack.c.h.b16 %v4366
    %v5088 = vunpack.c.l.b16 %v4367
    %v5089 = vunpack.c.h.b16 %v4367
    %v5090 = vunpack.c.l.b16 %v4368
    %v5091 = vunpack.c.h.b16 %v4368
    %v5092 = vunpack.c.l.b16 %v4369
    %v5093 = vunpack.c.h.b16 %v4369
    %v5094 = vunpack.c.l.b16 %v4370
    %v5095 = vunpack.c.h.b16 %v4370
    %v5096 = vunpack.c.l.b16 %v4371
    %v5097 = vunpack.c.h.b16 %v4371
    %v5098 = vunpack.c.l.b16 %v4372
    %v5099 = vunpack.c.h.b16 %v4372
    %v5100 = vunpack.c.l.b16 %v4373
    %v5101 = vunpack.c.h.b16 %v4373
    %v5102 = vunpack.c.l.b16 %v4374
    %v5103 = vunpack.c.h.b16 %v4374
    %v5104 = vunpack.c.l.b16 %v4375
    %v5105 = vunpack.c.h.b16 %v4375
    %v5106 = vunpack.c.l.b16 %v4376
    %v5107 = vunpack.c.h.b16 %v4376
    %v5108 = vunpack.c.l.b16 %v4377
    %v5109 = vunpack.c.h.b16 %v4377
    %v5110 = vunpack.c.l.b16 %v4378
    %v5111 = vunpack.c.h.b16 %v4378
    %v5112 = vunpack.c.l.b16 %v4379
    %v5113 = vunpack.c.h.b16 %v4379
    %v5114 = vunpack.c.l.b16 %v4380
    %v5115 = vunpack.c.h.b16 %v4380
    %v5116 = vunpack.c.l.b16 %v4381
    %v5117 = vunpack.c.h.b16 %v4381
    %v5118 = vunpack.c.l.b16 %v4382
    %v5119 = vunpack.c.h.b16 %v4382
    %v5120 = vunpack.c.l.b16 %v4383
    %v5121 = vunpack.c.h.b16 %v4383
    %v5122 = vunpack.c.l.b16 %v4384
    %v5123 = vunpack.c.h.b16 %v4384
    %v5124 = vunpack.c.l.b16 %v4385
    %v5125 = vunpack.c.h.b16 %v4385
    %v5126 = vunpack.c.l.b16 %v4386
    %v5127 = vunpack.c.h.b16 %v4386
    %v5128 = vunpack.c.l.b16 %v4387
    %v5129 = vunpack.c.h.b16 %v4387
    %v5130 = vunpack.c.l.b16 %v4388
    %v5131 = vunpack.c.h.b16 %v4388
    %v5132 = vunpack.c.l.b16 %v4389
    %v5133 = vunpack.c.h.b16 %v4389
    %v5134 = vunpack.c.l.b16 %v4390
    %v5135 = vunpack.c.h.b16 %v4390
    %v5136 = vunpack.c.l.b16 %v4391
    %v5137 = vunpack.c.h.b16 %v4391
    %v5138 = vunpack.c.l.b16 %v4392
    %v5139 = vunpack.c.h.b16 %v4392
    %v5140 = vunpack.c.l.b16 %v4393
    %v5141 = vunpack.c.h.b16 %v4393
    %v5142 = vunpack.c.l.b16 %v4394
    %v5143 = vunpack.c.h.b16 %v4394
    %v5144 = vunpack.c.l.b16 %v4395
    %v5145 = vunpack.c.h.b16 %v4395
    %v5146 = vunpack.c.l.b16 %v4396
    %v5147 = vunpack.c.h.b16 %v4396
    %v5148 = vunpack.c.l.b16 %v4397
    %v5149 = vunpack.c.h.b16 %v4397
    %v5150 = vunpack.c.l.b16 %v4398
    %v5151 = vunpack.c.h.b16 %v4398
    %v5152 = vunpack.c.l.b16 %v4399
    %v5153 = vunpack.c.h.b16 %v4399
    %v5154 = vunpack.c.l.b16 %v4400
    %v5155 = vunpack.c.h.b16 %v4400
    %v5156 = vunpack.c.l.b16 %v4401
    %v5157 = vunpack.c.h.b16 %v4401
    %v5158 = vunpack.c.l.b16 %v4402
    %v5159 = vunpack.c.h.b16 %v4402
    %v5160 = vunpack.c.l.b16 %v4403
    %v5161 = vunpack.c.h.b16 %v4403
    %v5162 = vunpack.c.l.b16 %v4404
    %v5163 = vunpack.c.h.b16 %v4404
    %v5164 = vunpack.c.l.b16 %v4405
    %v5165 = vunpack.c.h.b16 %v4405
    %v5166 = vunpack.c.l.b16 %v4406
    %v5167 = vunpack.c.h.b16 %v4406
    %v5168 = vunpack.c.l.b16 %v4407
    %v5169 = vunpack.c.h.b16 %v4407
    %v5170 = vunpack.c.l.b16 %v4408
    %v5171 = vunpack.c.h.b16 %v4408
    %v5172 = vunpack.c.l.b16 %v4409
    %v5173 = vunpack.c.h.b16 %v4409
    %v5174 = vunpack.c.l.b16 %v4410
    %v5175 = vunpack.c.h.b16 %v4410
    %v5176 = vunpack.c.l.b16 %v4411
    %v5177 = vunpack.c.h.b16 %v4411
    %v5178 = vunpack.c.l.b16 %v4412
    %v5179 = vunpack.c.h.b16 %v4412
    %v5180 = vunpack.c.l.b16 %v4413
    %v5181 = vunpack.c.h.b16 %v4413
    %v5182 = vunpack.c.l.b16 %v4414
    %v5183 = vunpack.c.h.b16 %v4414
    %v5184 = vunpack.c.l.b16 %v4415
    %v5185 = vunpack.c.h.b16 %v4415
    %v5186 = vunpack.c.l.b16 %v4416
    %v5187 = vunpack.c.h.b16 %v4416
    %v5188 = vunpack.c.l.b16 %v4417
    %v5189 = vunpack.c.h.b16 %v4417
    %v5190 = vunpack.c.l.b16 %v4418
    %v5191 = vunpack.c.h.b16 %v4418
    %v5192 = vunpack.c.l.b16 %v4419
    %v5193 = vunpack.c.h.b16 %v4419
    %v5194 = vunpack.c.l.b16 %v4420
    %v5195 = vunpack.c.h.b16 %v4420
    %v5196 = vunpack.c.l.b16 %v4421
    %v5197 = vunpack.c.h.b16 %v4421
    %v5198 = vunpack.c.l.b16 %v4422
    %v5199 = vunpack.c.h.b16 %v4422
    %v5200 = vunpack.c.l.b16 %v4423
    %v5201 = vunpack.c.h.b16 %v4423
    %v5202 = vpack.c.b16 %v4694, %v4690
    %v5203 = vpack.c.b16 %v4695, %v4691
    %v5204 = vpack.c.b16 %v4696, %v4692
    %v5205 = vpack.c.b16 %v4697, %v4693
    %v5206 = vpack.c.b16 %v4702, %v4698
    %v5207 = vpack.c.b16 %v4703, %v4699
    %v5208 = vpack.c.b16 %v4704, %v4700
    %v5209 = vpack.c.b16 %v4705, %v4701
    %v5210 = vpack.c.b16 %v4710, %v4706
    %v5211 = vpack.c.b16 %v4711, %v4707
    %v5212 = vpack.c.b16 %v4712, %v4708
    %v5213 = vpack.c.b16 %v4713, %v4709
    %v5214 = vpack.c.b16 %v4718, %v4714
    %v5215 = vpack.c.b16 %v4719, %v4715
    %v5216 = vpack.c.b16 %v4720, %v4716
    %v5217 = vpack.c.b16 %v4721, %v4717
    %v5218 = vpack.c.b16 %v4726, %v4722
    %v5219 = vpack.c.b16 %v4727, %v4723
    %v5220 = vpack.c.b16 %v4728, %v4724
    %v5221 = vpack.c.b16 %v4729, %v4725
    %v5222 = vpack.c.b16 %v4734, %v4730
    %v5223 = vpack.c.b16 %v4735, %v4731
    %v5224 = vpack.c.b16 %v4736, %v4732
    %v5225 = vpack.c.b16 %v4737, %v4733
    %v5226 = vpack.c.b16 %v4742, %v4738
    %v5227 = vpack.c.b16 %v4743, %v4739
    %v5228 = vpack.c.b16 %v4744, %v4740
    %v5229 = vpack.c.b16 %v4745, %v4741
    %v5230 = vpack.c.b16 %v4750, %v4746
    %v5231 = vpack.c.b16 %v4751, %v4747
    %v5232 = vpack.c.b16 %v4752, %v4748
    %v5233 = vpack.c.b16 %v4753, %v4749
    %v5234 = vpack.c.b16 %v4758, %v4754
    %v5235 = vpack.c.b16 %v4759, %v4755
    %v5236 = vpack.c.b16 %v4760, %v4756
    %v5237 = vpack.c.b16 %v4761, %v4757
    %v5238 = vpack.c.b16 %v4766, %v4762
    %v5239 = vpack.c.b16 %v4767, %v4763
    %v5240 = vpack.c.b16 %v4768, %v4764
    %v5241 = vpack.c.b16 %v4769, %v4765
    %v5242 = vpack.c.b16 %v4774, %v4770
    %v5243 = vpack.c.b16 %v4775, %v4771
    %v5244 = vpack.c.b16 %v4776, %v4772
    %v5245 = vpack.c.b16 %v4777, %v4773
    %v5246 = vpack.c.b16 %v4782, %v4778
    %v5247 = vpack.c.b16 %v4783, %v4779
    %v5248 = vpack.c.b16 %v4784, %v4780
    %v5249 = vpack.c.b16 %v4785, %v4781
    %v5250 = vpack.c.b16 %v4790, %v4786
    %v5251 = vpack.c.b16 %v4791, %v4787
    %v5252 = vpack.c.b16 %v4792, %v4788
    %v5253 = vpack.c.b16 %v4793, %v4789
    %v5254 = vpack.c.b16 %v4798, %v4794
    %v5255 = vpack.c.b16 %v4799, %v4795
    %v5256 = vpack.c.b16 %v4800, %v4796
    %v5257 = vpack.c.b16 %v4801, %v4797
    %v5258 = vpack.c.b16 %v4806, %v4802
    %v5259 = vpack.c.b16 %v4807, %v4803
    %v5260 = vpack.c.b16 %v4808, %v4804
    %v5261 = vpack.c.b16 %v4809, %v4805
    %v5262 = vpack.c.b16 %v4814, %v4810
    %v5263 = vpack.c.b16 %v4815, %v4811
    %v5264 = vpack.c.b16 %v4816, %v4812
    %v5265 = vpack.c.b16 %v4817, %v4813
    %v5266 = vpack.c.b16 %v4822, %v4818
    %v5267 = vpack.c.b16 %v4823, %v4819
    %v5268 = vpack.c.b16 %v4824, %v4820
    %v5269 = vpack.c.b16 %v4825, %v4821
    %v5270 = vpack.c.b16 %v4830, %v4826
    %v5271 = vpack.c.b16 %v4831, %v4827
    %v5272 = vpack.c.b16 %v4832, %v4828
    %v5273 = vpack.c.b16 %v4833, %v4829
    %v5274 = vpack.c.b16 %v4838, %v4834
    %v5275 = vpack.c.b16 %v4839, %v4835
    %v5276 = vpack.c.b16 %v4840, %v4836
    %v5277 = vpack.c.b16 %v4841, %v4837
    %v5278 = vpack.c.b16 %v4846, %v4842
    %v5279 = vpack.c.b16 %v4847, %v4843
    %v5280 = vpack.c.b16 %v4848, %v4844
    %v5281 = vpack.c.b16 %v4849, %v4845
    %v5282 = vpack.c.b16 %v4854, %v4850
    %v5283 = vpack.c.b16 %v4855, %v4851
    %v5284 = vpack.c.b16 %v4856, %v4852
    %v5285 = vpack.c.b16 %v4857, %v4853
    %v5286 = vpack.c.b16 %v4862, %v4858
    %v5287 = vpack.c.b16 %v4863, %v4859
    %v5288 = vpack.c.b16 %v4864, %v4860
    %v5289 = vpack.c.b16 %v4865, %v4861
    %v5290 = vpack.c.b16 %v4870, %v4866
    %v5291 = vpack.c.b16 %v4871, %v4867
    %v5292 = vpack.c.b16 %v4872, %v4868
    %v5293 = vpack.c.b16 %v4873, %v4869
    %v5294 = vpack.c.b16 %v4878, %v4874
    %v5295 = vpack.c.b16 %v4879, %v4875
    %v5296 = vpack.c.b16 %v4880, %v4876
    %v5297 = vpack.c.b16 %v4881, %v4877
    %v5298 = vpack.c.b16 %v4886, %v4882
    %v5299 = vpack.c.b16 %v4887, %v4883
    %v5300 = vpack.c.b16 %v4888, %v4884
    %v5301 = vpack.c.b16 %v4889, %v4885
    %v5302 = vpack.c.b16 %v4894, %v4890
    %v5303 = vpack.c.b16 %v4895, %v4891
    %v5304 = vpack.c.b16 %v4896, %v4892
    %v5305 = vpack.c.b16 %v4897, %v4893
    %v5306 = vpack.c.b16 %v4902, %v4898
    %v5307 = vpack.c.b16 %v4903, %v4899
    %v5308 = vpack.c.b16 %v4904, %v4900
    %v5309 = vpack.c.b16 %v4905, %v4901
    %v5310 = vpack.c.b16 %v4910, %v4906
    %v5311 = vpack.c.b16 %v4911, %v4907
    %v5312 = vpack.c.b16 %v4912, %v4908
    %v5313 = vpack.c.b16 %v4913, %v4909
    %v5314 = vpack.c.b16 %v4918, %v4914
    %v5315 = vpack.c.b16 %v4919, %v4915
    %v5316 = vpack.c.b16 %v4920, %v4916
    %v5317 = vpack.c.b16 %v4921, %v4917
    %v5318 = vpack.c.b16 %v4926, %v4922
    %v5319 = vpack.c.b16 %v4927, %v4923
    %v5320 = vpack.c.b16 %v4928, %v4924
    %v5321 = vpack.c.b16 %v4929, %v4925
    %v5322 = vpack.c.b16 %v4934, %v4930
    %v5323 = vpack.c.b16 %v4935, %v4931
    %v5324 = vpack.c.b16 %v4936, %v4932
    %v5325 = vpack.c.b16 %v4937, %v4933
    %v5326 = vpack.c.b16 %v4942, %v4938
    %v5327 = vpack.c.b16 %v4943, %v4939
    %v5328 = vpack.c.b16 %v4944, %v4940
    %v5329 = vpack.c.b16 %v4945, %v4941
    %v5330 = vpack.c.b16 %v4950, %v4946
    %v5331 = vpack.c.b16 %v4951, %v4947
    %v5332 = vpack.c.b16 %v4952, %v4948
    %v5333 = vpack.c.b16 %v4953, %v4949
    %v5334 = vpack.c.b16 %v4958, %v4954
    %v5335 = vpack.c.b16 %v4959, %v4955
    %v5336 = vpack.c.b16 %v4960, %v4956
    %v5337 = vpack.c.b16 %v4961, %v4957
    %v5338 = vpack.c.b16 %v4966, %v4962
    %v5339 = vpack.c.b16 %v4967, %v4963
    %v5340 = vpack.c.b16 %v4968, %v4964
    %v5341 = vpack.c.b16 %v4969, %v4965
    %v5342 = vpack.c.b16 %v4974, %v4970
    %v5343 = vpack.c.b16 %v4975, %v4971
    %v5344 = vpack.c.b16 %v4976, %v4972
    %v5345 = vpack.c.b16 %v4977, %v4973
    %v5346 = vpack.c.b16 %v4982, %v4978
    %v5347 = vpack.c.b16 %v4983, %v4979
    %v5348 = vpack.c.b16 %v4984, %v4980
    %v5349 = vpack.c.b16 %v4985, %v4981
    %v5350 = vpack.c.b16 %v4990, %v4986
    %v5351 = vpack.c.b16 %v4991, %v4987
    %v5352 = vpack.c.b16 %v4992, %v4988
    %v5353 = vpack.c.b16 %v4993, %v4989
    %v5354 = vpack.c.b16 %v4998, %v4994
    %v5355 = vpack.c.b16 %v4999, %v4995
    %v5356 = vpack.c.b16 %v5000, %v4996
    %v5357 = vpack.c.b16 %v5001, %v4997
    %v5358 = vpack.c.b16 %v5006, %v5002
    %v5359 = vpack.c.b16 %v5007, %v5003
    %v5360 = vpack.c.b16 %v5008, %v5004
    %v5361 = vpack.c.b16 %v5009, %v5005
    %v5362 = vpack.c.b16 %v5014, %v5010
    %v5363 = vpack.c.b16 %v5015, %v5011
    %v5364 = vpack.c.b16 %v5016, %v5012
    %v5365 = vpack.c.b16 %v5017, %v5013
    %v5366 = vpack.c.b16 %v5022, %v5018
    %v5367 = vpack.c.b16 %v5023, %v5019
    %v5368 = vpack.c.b16 %v5024, %v5020
    %v5369 = vpack.c.b16 %v5025, %v5021
    %v5370 = vpack.c.b16 %v5030, %v5026
    %v5371 = vpack.c.b16 %v5031, %v5027
    %v5372 = vpack.c.b16 %v5032, %v5028
    %v5373 = vpack.c.b16 %v5033, %v5029
    %v5374 = vpack.c.b16 %v5038, %v5034
    %v5375 = vpack.c.b16 %v5039, %v5035
    %v5376 = vpack.c.b16 %v5040, %v5036
    %v5377 = vpack.c.b16 %v5041, %v5037
    %v5378 = vpack.c.b16 %v5046, %v5042
    %v5379 = vpack.c.b16 %v5047, %v5043
    %v5380 = vpack.c.b16 %v5048, %v5044
    %v5381 = vpack.c.b16 %v5049, %v5045
    %v5382 = vpack.c.b16 %v5054, %v5050
    %v5383 = vpack.c.b16 %v5055, %v5051
    %v5384 = vpack.c.b16 %v5056, %v5052
    %v5385 = vpack.c.b16 %v5057, %v5053
    %v5386 = vpack.c.b16 %v5062, %v5058
    %v5387 = vpack.c.b16 %v5063, %v5059
    %v5388 = vpack.c.b16 %v5064, %v5060
    %v5389 = vpack.c.b16 %v5065, %v5061
    %v5390 = vpack.c.b16 %v5070, %v5066
    %v5391 = vpack.c.b16 %v5071, %v5067
    %v5392 = vpack.c.b16 %v5072, %v5068
    %v5393 = vpack.c.b16 %v5073, %v5069
    %v5394 = vpack.c.b16 %v5078, %v5074
    %v5395 = vpack.c.b16 %v5079, %v5075
    %v5396 = vpack.c.b16 %v5080, %v5076
    %v5397 = vpack.c.b16 %v5081, %v5077
    %v5398 = vpack.c.b16 %v5086, %v5082
    %v5399 = vpack.c.b16 %v5087, %v5083
    %v5400 = vpack.c.b16 %v5088, %v5084
    %v5401 = vpack.c.b16 %v5089, %v5085
    %v5402 = vpack.c.b16 %v5094, %v5090
    %v5403 = vpack.c.b16 %v5095, %v5091
    %v5404 = vpack.c.b16 %v5096, %v5092
    %v5405 = vpack.c.b16 %v5097, %v5093
    %v5406 = vpack.c.b16 %v5102, %v5098
    %v5407 = vpack.c.b16 %v5103, %v5099
    %v5408 = vpack.c.b16 %v5104, %v5100
    %v5409 = vpack.c.b16 %v5105, %v5101
    %v5410 = vpack.c.b16 %v5110, %v5106
    %v5411 = vpack.c.b16 %v5111, %v5107
    %v5412 = vpack.c.b16 %v5112, %v5108
    %v5413 = vpack.c.b16 %v5113, %v5109
    %v5414 = vpack.c.b16 %v5118, %v5114
    %v5415 = vpack.c.b16 %v5119, %v5115
    %v5416 = vpack.c.b16 %v5120, %v5116
    %v5417 = vpack.c.b16 %v5121, %v5117
    %v5418 = vpack.c.b16 %v5126, %v5122
    %v5419 = vpack.c.b16 %v5127, %v5123
    %v5420 = vpack.c.b16 %v5128, %v5124
    %v5421 = vpack.c.b16 %v5129, %v5125
    %v5422 = vpack.c.b16 %v5134, %v5130
    %v5423 = vpack.c.b16 %v5135, %v5131
    %v5424 = vpack.c.b16 %v5136, %v5132
    %v5425 = vpack.c.b16 %v5137, %v5133
    %v5426 = vpack.c.b16 %v5142, %v5138
    %v5427 = vpack.c.b16 %v5143, %v5139
    %v5428 = vpack.c.b16 %v5144, %v5140
    %v5429 = vpack.c.b16 %v5145, %v5141
    %v5430 = vpack.c.b16 %v5150, %v5146
    %v5431 = vpack.c.b16 %v5151, %v5147
    %v5432 = vpack.c.b16 %v5152, %v5148
    %v5433 = vpack.c.b16 %v5153, %v5149
    %v5434 = vpack.c.b16 %v5158, %v5154
    %v5435 = vpack.c.b16 %v5159, %v5155
    %v5436 = vpack.c.b16 %v5160, %v5156
    %v5437 = vpack.c.b16 %v5161, %v5157
    %v5438 = vpack.c.b16 %v5166, %v5162
    %v5439 = vpack.c.b16 %v5167, %v5163
    %v5440 = vpack.c.b16 %v5168, %v5164
    %v5441 = vpack.c.b16 %v5169, %v5165
    %v5442 = vpack.c.b16 %v5174, %v5170
    %v5443 = vpack.c.b16 %v5175, %v5171
    %v5444 = vpack.c.b16 %v5176, %v5172
    %v5445 = vpack.c.b16 %v5177, %v5173
    %v5446 = vpack.c.b16 %v5182, %v5178
    %v5447 = vpack.c.b16 %v5183, %v5179
    %v5448 = vpack.c.b16 %v5184, %v5180
    %v5449 = vpack.c.b16 %v5185, %v5181
    %v5450 = vpack.c.b16 %v5190, %v5186
    %v5451 = vpack.c.b16 %v5191, %v5187
    %v5452 = vpack.c.b16 %v5192, %v5188
    %v5453 = vpack.c.b16 %v5193, %v5189
    %v5454 = vpack.c.b16 %v5198, %v5194
    %v5455 = vpack.c.b16 %v5199, %v5195
    %v5456 = vpack.c.b16 %v5200, %v5196
    %v5457 = vpack.c.b16 %v5201, %v5197
    %5714 = vmatpush.bf16.msra.mxu0 %v5230
    %5715 = vmatpush.bf16.msra.mxu0 %v5226
    %5716 = vmatpush.bf16.msra.mxu0 %v5222
    %5717 = vmatpush.bf16.msra.mxu0 %v5218
    %5718 = vmatpush.bf16.msra.mxu0 %v5214
    %5719 = vmatpush.bf16.msra.mxu0 %v5210
    %5720 = vmatpush.bf16.msra.mxu0 %v5206
    %5721 = vmatpush.bf16.msra.mxu0 %v5202
    %5722 = vmatmul.bf16.gmra.mxu0 %v4160
    %v5723 = vpop.f32.mrf.mxu0
    %v5724 = vadd.f32 %v4426, %v5723
    %v5725 = vpop.f32.mrf.mxu0
    %5726 = vdwg.mxu0
    %5727 = vmatpush.bf16.msra.mxu0 %v5262
    %5728 = vmatpush.bf16.msra.mxu0 %v5258
    %5729 = vmatpush.bf16.msra.mxu0 %v5254
    %5730 = vmatpush.bf16.msra.mxu0 %v5250
    %5731 = vmatpush.bf16.msra.mxu0 %v5246
    %5732 = vmatpush.bf16.msra.mxu0 %v5242
    %5733 = vmatpush.bf16.msra.mxu0 %v5238
    %5734 = vmatpush.bf16.msra.mxu0 %v5234
    %5735 = vmatmul.bf16.gmra.mxu0 %v4161
    %v5736 = vpop.f32.mrf.mxu0
    %v5737 = vadd.f32 %v5724, %v5736
    %v5738 = vpop.f32.mrf.mxu0
    %5739 = vdwg.mxu0
    %5740 = vmatpush.bf16.msra.mxu0 %v5294
    %5741 = vmatpush.bf16.msra.mxu0 %v5290
    %5742 = vmatpush.bf16.msra.mxu0 %v5286
    %5743 = vmatpush.bf16.msra.mxu0 %v5282
    %5744 = vmatpush.bf16.msra.mxu0 %v5278
    %5745 = vmatpush.bf16.msra.mxu0 %v5274
    %5746 = vmatpush.bf16.msra.mxu0 %v5270
    %5747 = vmatpush.bf16.msra.mxu0 %v5266
    %5748 = vmatmul.bf16.gmra.mxu0 %v4162
    %v5749 = vpop.f32.mrf.mxu0
    %v5750 = vadd.f32 %v5737, %v5749
    %v5751 = vpop.f32.mrf.mxu0
    %5752 = vdwg.mxu0
    %5753 = vmatpush.bf16.msra.mxu0 %v5326
    %5754 = vmatpush.bf16.msra.mxu0 %v5322
    %5755 = vmatpush.bf16.msra.mxu0 %v5318
    %5756 = vmatpush.bf16.msra.mxu0 %v5314
    %5757 = vmatpush.bf16.msra.mxu0 %v5310
    %5758 = vmatpush.bf16.msra.mxu0 %v5306
    %5759 = vmatpush.bf16.msra.mxu0 %v5302
    %5760 = vmatpush.bf16.msra.mxu0 %v5298
    %5761 = vmatmul.bf16.gmra.mxu0 %v4163
    %v5762 = vpop.f32.mrf.mxu0
    %v5763 = vadd.f32 %v5750, %v5762
    %v5764 = vpop.f32.mrf.mxu0
    %5765 = vdwg.mxu0
    %5766 = vmatpush.bf16.msra.mxu0 %v5358
    %5767 = vmatpush.bf16.msra.mxu0 %v5354
    %5768 = vmatpush.bf16.msra.mxu0 %v5350
    %5769 = vmatpush.bf16.msra.mxu0 %v5346
    %5770 = vmatpush.bf16.msra.mxu0 %v5342
    %5771 = vmatpush.bf16.msra.mxu0 %v5338
    %5772 = vmatpush.bf16.msra.mxu0 %v5334
    %5773 = vmatpush.bf16.msra.mxu0 %v5330
    %5774 = vmatmul.bf16.gmra.mxu0 %v4164
    %v5775 = vpop.f32.mrf.mxu0
    %v5776 = vadd.f32 %v5763, %v5775
    %v5777 = vpop.f32.mrf.mxu0
    %5778 = vdwg.mxu0
    %5779 = vmatpush.bf16.msra.mxu0 %v5390
    %5780 = vmatpush.bf16.msra.mxu0 %v5386
    %5781 = vmatpush.bf16.msra.mxu0 %v5382
    %5782 = vmatpush.bf16.msra.mxu0 %v5378
    %5783 = vmatpush.bf16.msra.mxu0 %v5374
    %5784 = vmatpush.bf16.msra.mxu0 %v5370
    %5785 = vmatpush.bf16.msra.mxu0 %v5366
    %5786 = vmatpush.bf16.msra.mxu0 %v5362
    %5787 = vmatmul.bf16.gmra.mxu0 %v4165
    %v5788 = vpop.f32.mrf.mxu0
    %v5789 = vadd.f32 %v5776, %v5788
    %v5790 = vpop.f32.mrf.mxu0
    %5791 = vdwg.mxu0
    %5792 = vmatpush.bf16.msra.mxu0 %v5422
    %5793 = vmatpush.bf16.msra.mxu0 %v5418
    %5794 = vmatpush.bf16.msra.mxu0 %v5414
    %5795 = vmatpush.bf16.msra.mxu0 %v5410
    %5796 = vmatpush.bf16.msra.mxu0 %v5406
    %5797 = vmatpush.bf16.msra.mxu0 %v5402
    %5798 = vmatpush.bf16.msra.mxu0 %v5398
    %5799 = vmatpush.bf16.msra.mxu0 %v5394
    %5800 = vmatmul.bf16.gmra.mxu0 %v4166
    %v5801 = vpop.f32.mrf.mxu0
    %v5802 = vadd.f32 %v5789, %v5801
    %v5803 = vpop.f32.mrf.mxu0
    %5804 = vdwg.mxu0
    %5805 = vmatpush.bf16.msra.mxu0 %v5454
    %5806 = vmatpush.bf16.msra.mxu0 %v5450
    %5807 = vmatpush.bf16.msra.mxu0 %v5446
    %5808 = vmatpush.bf16.msra.mxu0 %v5442
    %5809 = vmatpush.bf16.msra.mxu0 %v5438
    %5810 = vmatpush.bf16.msra.mxu0 %v5434
    %5811 = vmatpush.bf16.msra.mxu0 %v5430
    %5812 = vmatpush.bf16.msra.mxu0 %v5426
    %5813 = vmatmul.bf16.gmra.mxu0 %v4167
    %v5814 = vpop.f32.mrf.mxu0
    %v5815 = vadd.f32 %v5802, %v5814
    %v5816 = vpop.f32.mrf.mxu0
    %5817 = vdwg.mxu0
    %5818 = vmatpush.bf16.msra.mxu0 %v5231
    %5819 = vmatpush.bf16.msra.mxu0 %v5227
    %5820 = vmatpush.bf16.msra.mxu0 %v5223
    %5821 = vmatpush.bf16.msra.mxu0 %v5219
    %5822 = vmatpush.bf16.msra.mxu0 %v5215
    %5823 = vmatpush.bf16.msra.mxu0 %v5211
    %5824 = vmatpush.bf16.msra.mxu0 %v5207
    %5825 = vmatpush.bf16.msra.mxu0 %v5203
    %5826 = vmatmul.bf16.gmra.mxu0 %v4160
    %v5827 = vpop.f32.mrf.mxu0
    %v5828 = vadd.f32 %v4427, %v5827
    %v5829 = vpop.f32.mrf.mxu0
    %5830 = vdwg.mxu0
    %5831 = vmatpush.bf16.msra.mxu0 %v5263
    %5832 = vmatpush.bf16.msra.mxu0 %v5259
    %5833 = vmatpush.bf16.msra.mxu0 %v5255
    %5834 = vmatpush.bf16.msra.mxu0 %v5251
    %5835 = vmatpush.bf16.msra.mxu0 %v5247
    %5836 = vmatpush.bf16.msra.mxu0 %v5243
    %5837 = vmatpush.bf16.msra.mxu0 %v5239
    %5838 = vmatpush.bf16.msra.mxu0 %v5235
    %5839 = vmatmul.bf16.gmra.mxu0 %v4161
    %v5840 = vpop.f32.mrf.mxu0
    %v5841 = vadd.f32 %v5828, %v5840
    %v5842 = vpop.f32.mrf.mxu0
    %5843 = vdwg.mxu0
    %5844 = vmatpush.bf16.msra.mxu0 %v5295
    %5845 = vmatpush.bf16.msra.mxu0 %v5291
    %5846 = vmatpush.bf16.msra.mxu0 %v5287
    %5847 = vmatpush.bf16.msra.mxu0 %v5283
    %5848 = vmatpush.bf16.msra.mxu0 %v5279
    %5849 = vmatpush.bf16.msra.mxu0 %v5275
    %5850 = vmatpush.bf16.msra.mxu0 %v5271
    %5851 = vmatpush.bf16.msra.mxu0 %v5267
    %5852 = vmatmul.bf16.gmra.mxu0 %v4162
    %v5853 = vpop.f32.mrf.mxu0
    %v5854 = vadd.f32 %v5841, %v5853
    %v5855 = vpop.f32.mrf.mxu0
    %5856 = vdwg.mxu0
    %5857 = vmatpush.bf16.msra.mxu0 %v5327
    %5858 = vmatpush.bf16.msra.mxu0 %v5323
    %5859 = vmatpush.bf16.msra.mxu0 %v5319
    %5860 = vmatpush.bf16.msra.mxu0 %v5315
    %5861 = vmatpush.bf16.msra.mxu0 %v5311
    %5862 = vmatpush.bf16.msra.mxu0 %v5307
    %5863 = vmatpush.bf16.msra.mxu0 %v5303
    %5864 = vmatpush.bf16.msra.mxu0 %v5299
    %5865 = vmatmul.bf16.gmra.mxu0 %v4163
    %v5866 = vpop.f32.mrf.mxu0
    %v5867 = vadd.f32 %v5854, %v5866
    %v5868 = vpop.f32.mrf.mxu0
    %5869 = vdwg.mxu0
    %5870 = vmatpush.bf16.msra.mxu0 %v5359
    %5871 = vmatpush.bf16.msra.mxu0 %v5355
    %5872 = vmatpush.bf16.msra.mxu0 %v5351
    %5873 = vmatpush.bf16.msra.mxu0 %v5347
    %5874 = vmatpush.bf16.msra.mxu0 %v5343
    %5875 = vmatpush.bf16.msra.mxu0 %v5339
    %5876 = vmatpush.bf16.msra.mxu0 %v5335
    %5877 = vmatpush.bf16.msra.mxu0 %v5331
    %5878 = vmatmul.bf16.gmra.mxu0 %v4164
    %v5879 = vpop.f32.mrf.mxu0
    %v5880 = vadd.f32 %v5867, %v5879
    %v5881 = vpop.f32.mrf.mxu0
    %5882 = vdwg.mxu0
    %5883 = vmatpush.bf16.msra.mxu0 %v5391
    %5884 = vmatpush.bf16.msra.mxu0 %v5387
    %5885 = vmatpush.bf16.msra.mxu0 %v5383
    %5886 = vmatpush.bf16.msra.mxu0 %v5379
    %5887 = vmatpush.bf16.msra.mxu0 %v5375
    %5888 = vmatpush.bf16.msra.mxu0 %v5371
    %5889 = vmatpush.bf16.msra.mxu0 %v5367
    %5890 = vmatpush.bf16.msra.mxu0 %v5363
    %5891 = vmatmul.bf16.gmra.mxu0 %v4165
    %v5892 = vpop.f32.mrf.mxu0
    %v5893 = vadd.f32 %v5880, %v5892
    %v5894 = vpop.f32.mrf.mxu0
    %5895 = vdwg.mxu0
    %5896 = vmatpush.bf16.msra.mxu0 %v5423
    %5897 = vmatpush.bf16.msra.mxu0 %v5419
    %5898 = vmatpush.bf16.msra.mxu0 %v5415
    %5899 = vmatpush.bf16.msra.mxu0 %v5411
    %5900 = vmatpush.bf16.msra.mxu0 %v5407
    %5901 = vmatpush.bf16.msra.mxu0 %v5403
    %5902 = vmatpush.bf16.msra.mxu0 %v5399
    %5903 = vmatpush.bf16.msra.mxu0 %v5395
    %5904 = vmatmul.bf16.gmra.mxu0 %v4166
    %v5905 = vpop.f32.mrf.mxu0
    %v5906 = vadd.f32 %v5893, %v5905
    %v5907 = vpop.f32.mrf.mxu0
    %5908 = vdwg.mxu0
    %5909 = vmatpush.bf16.msra.mxu0 %v5455
    %5910 = vmatpush.bf16.msra.mxu0 %v5451
    %5911 = vmatpush.bf16.msra.mxu0 %v5447
    %5912 = vmatpush.bf16.msra.mxu0 %v5443
    %5913 = vmatpush.bf16.msra.mxu0 %v5439
    %5914 = vmatpush.bf16.msra.mxu0 %v5435
    %5915 = vmatpush.bf16.msra.mxu0 %v5431
    %5916 = vmatpush.bf16.msra.mxu0 %v5427
    %5917 = vmatmul.bf16.gmra.mxu0 %v4167
    %v5918 = vpop.f32.mrf.mxu0
    %v5919 = vadd.f32 %v5906, %v5918
    %v5920 = vpop.f32.mrf.mxu0
    %5921 = vdwg.mxu0
    %5922 = vmatpush.bf16.msra.mxu0 %v5232
    %5923 = vmatpush.bf16.msra.mxu0 %v5228
    %5924 = vmatpush.bf16.msra.mxu0 %v5224
    %5925 = vmatpush.bf16.msra.mxu0 %v5220
    %5926 = vmatpush.bf16.msra.mxu0 %v5216
    %5927 = vmatpush.bf16.msra.mxu0 %v5212
    %5928 = vmatpush.bf16.msra.mxu0 %v5208
    %5929 = vmatpush.bf16.msra.mxu0 %v5204
    %5930 = vmatmul.bf16.gmra.mxu0 %v4160
    %v5931 = vpop.f32.mrf.mxu0
    %v5932 = vadd.f32 %v4428, %v5931
    %v5933 = vpop.f32.mrf.mxu0
    %5934 = vdwg.mxu0
    %5935 = vmatpush.bf16.msra.mxu0 %v5264
    %5936 = vmatpush.bf16.msra.mxu0 %v5260
    %5937 = vmatpush.bf16.msra.mxu0 %v5256
    %5938 = vmatpush.bf16.msra.mxu0 %v5252
    %5939 = vmatpush.bf16.msra.mxu0 %v5248
    %5940 = vmatpush.bf16.msra.mxu0 %v5244
    %5941 = vmatpush.bf16.msra.mxu0 %v5240
    %5942 = vmatpush.bf16.msra.mxu0 %v5236
    %5943 = vmatmul.bf16.gmra.mxu0 %v4161
    %v5944 = vpop.f32.mrf.mxu0
    %v5945 = vadd.f32 %v5932, %v5944
    %v5946 = vpop.f32.mrf.mxu0
    %5947 = vdwg.mxu0
    %5948 = vmatpush.bf16.msra.mxu0 %v5296
    %5949 = vmatpush.bf16.msra.mxu0 %v5292
    %5950 = vmatpush.bf16.msra.mxu0 %v5288
    %5951 = vmatpush.bf16.msra.mxu0 %v5284
    %5952 = vmatpush.bf16.msra.mxu0 %v5280
    %5953 = vmatpush.bf16.msra.mxu0 %v5276
    %5954 = vmatpush.bf16.msra.mxu0 %v5272
    %5955 = vmatpush.bf16.msra.mxu0 %v5268
    %5956 = vmatmul.bf16.gmra.mxu0 %v4162
    %v5957 = vpop.f32.mrf.mxu0
    %v5958 = vadd.f32 %v5945, %v5957
    %v5959 = vpop.f32.mrf.mxu0
    %5960 = vdwg.mxu0
    %5961 = vmatpush.bf16.msra.mxu0 %v5328
    %5962 = vmatpush.bf16.msra.mxu0 %v5324
    %5963 = vmatpush.bf16.msra.mxu0 %v5320
    %5964 = vmatpush.bf16.msra.mxu0 %v5316
    %5965 = vmatpush.bf16.msra.mxu0 %v5312
    %5966 = vmatpush.bf16.msra.mxu0 %v5308
    %5967 = vmatpush.bf16.msra.mxu0 %v5304
    %5968 = vmatpush.bf16.msra.mxu0 %v5300
    %5969 = vmatmul.bf16.gmra.mxu0 %v4163
    %v5970 = vpop.f32.mrf.mxu0
    %v5971 = vadd.f32 %v5958, %v5970
    %v5972 = vpop.f32.mrf.mxu0
    %5973 = vdwg.mxu0
    %5974 = vmatpush.bf16.msra.mxu0 %v5360
    %5975 = vmatpush.bf16.msra.mxu0 %v5356
    %5976 = vmatpush.bf16.msra.mxu0 %v5352
    %5977 = vmatpush.bf16.msra.mxu0 %v5348
    %5978 = vmatpush.bf16.msra.mxu0 %v5344
    %5979 = vmatpush.bf16.msra.mxu0 %v5340
    %5980 = vmatpush.bf16.msra.mxu0 %v5336
    %5981 = vmatpush.bf16.msra.mxu0 %v5332
    %5982 = vmatmul.bf16.gmra.mxu0 %v4164
    %v5983 = vpop.f32.mrf.mxu0
    %v5984 = vadd.f32 %v5971, %v5983
    %v5985 = vpop.f32.mrf.mxu0
    %5986 = vdwg.mxu0
    %5987 = vmatpush.bf16.msra.mxu0 %v5392
    %5988 = vmatpush.bf16.msra.mxu0 %v5388
    %5989 = vmatpush.bf16.msra.mxu0 %v5384
    %5990 = vmatpush.bf16.msra.mxu0 %v5380
    %5991 = vmatpush.bf16.msra.mxu0 %v5376
    %5992 = vmatpush.bf16.msra.mxu0 %v5372
    %5993 = vmatpush.bf16.msra.mxu0 %v5368
    %5994 = vmatpush.bf16.msra.mxu0 %v5364
    %5995 = vmatmul.bf16.gmra.mxu0 %v4165
    %v5996 = vpop.f32.mrf.mxu0
    %v5997 = vadd.f32 %v5984, %v5996
    %v5998 = vpop.f32.mrf.mxu0
    %5999 = vdwg.mxu0
    %6000 = vmatpush.bf16.msra.mxu0 %v5424
    %6001 = vmatpush.bf16.msra.mxu0 %v5420
    %6002 = vmatpush.bf16.msra.mxu0 %v5416
    %6003 = vmatpush.bf16.msra.mxu0 %v5412
    %6004 = vmatpush.bf16.msra.mxu0 %v5408
    %6005 = vmatpush.bf16.msra.mxu0 %v5404
    %6006 = vmatpush.bf16.msra.mxu0 %v5400
    %6007 = vmatpush.bf16.msra.mxu0 %v5396
    %6008 = vmatmul.bf16.gmra.mxu0 %v4166
    %v6009 = vpop.f32.mrf.mxu0
    %v6010 = vadd.f32 %v5997, %v6009
    %v6011 = vpop.f32.mrf.mxu0
    %6012 = vdwg.mxu0
    %6013 = vmatpush.bf16.msra.mxu0 %v5456
    %6014 = vmatpush.bf16.msra.mxu0 %v5452
    %6015 = vmatpush.bf16.msra.mxu0 %v5448
    %6016 = vmatpush.bf16.msra.mxu0 %v5444
    %6017 = vmatpush.bf16.msra.mxu0 %v5440
    %6018 = vmatpush.bf16.msra.mxu0 %v5436
    %6019 = vmatpush.bf16.msra.mxu0 %v5432
    %6020 = vmatpush.bf16.msra.mxu0 %v5428
    %6021 = vmatmul.bf16.gmra.mxu0 %v4167
    %v6022 = vpop.f32.mrf.mxu0
    %v6023 = vadd.f32 %v6010, %v6022
    %v6024 = vpop.f32.mrf.mxu0
    %6025 = vdwg.mxu0
    %6026 = vmatpush.bf16.msra.mxu0 %v5233
    %6027 = vmatpush.bf16.msra.mxu0 %v5229
    %6028 = vmatpush.bf16.msra.mxu0 %v5225
    %6029 = vmatpush.bf16.msra.mxu0 %v5221
    %6030 = vmatpush.bf16.msra.mxu0 %v5217
    %6031 = vmatpush.bf16.msra.mxu0 %v5213
    %6032 = vmatpush.bf16.msra.mxu0 %v5209
    %6033 = vmatpush.bf16.msra.mxu0 %v5205
    %6034 = vmatmul.bf16.gmra.mxu0 %v4160
    %v6035 = vpop.f32.mrf.mxu0
    %v6036 = vadd.f32 %v4429, %v6035
    %v6037 = vpop.f32.mrf.mxu0
    %6038 = vdwg.mxu0
    %6039 = vmatpush.bf16.msra.mxu0 %v5265
    %6040 = vmatpush.bf16.msra.mxu0 %v5261
    %6041 = vmatpush.bf16.msra.mxu0 %v5257
    %6042 = vmatpush.bf16.msra.mxu0 %v5253
    %6043 = vmatpush.bf16.msra.mxu0 %v5249
    %6044 = vmatpush.bf16.msra.mxu0 %v5245
    %6045 = vmatpush.bf16.msra.mxu0 %v5241
    %6046 = vmatpush.bf16.msra.mxu0 %v5237
    %6047 = vmatmul.bf16.gmra.mxu0 %v4161
    %v6048 = vpop.f32.mrf.mxu0
    %v6049 = vadd.f32 %v6036, %v6048
    %v6050 = vpop.f32.mrf.mxu0
    %6051 = vdwg.mxu0
    %6052 = vmatpush.bf16.msra.mxu0 %v5297
    %6053 = vmatpush.bf16.msra.mxu0 %v5293
    %6054 = vmatpush.bf16.msra.mxu0 %v5289
    %6055 = vmatpush.bf16.msra.mxu0 %v5285
    %6056 = vmatpush.bf16.msra.mxu0 %v5281
    %6057 = vmatpush.bf16.msra.mxu0 %v5277
    %6058 = vmatpush.bf16.msra.mxu0 %v5273
    %6059 = vmatpush.bf16.msra.mxu0 %v5269
    %6060 = vmatmul.bf16.gmra.mxu0 %v4162
    %v6061 = vpop.f32.mrf.mxu0
    %v6062 = vadd.f32 %v6049, %v6061
    %v6063 = vpop.f32.mrf.mxu0
    %6064 = vdwg.mxu0
    %6065 = vmatpush.bf16.msra.mxu0 %v5329
    %6066 = vmatpush.bf16.msra.mxu0 %v5325
    %6067 = vmatpush.bf16.msra.mxu0 %v5321
    %6068 = vmatpush.bf16.msra.mxu0 %v5317
    %6069 = vmatpush.bf16.msra.mxu0 %v5313
    %6070 = vmatpush.bf16.msra.mxu0 %v5309
    %6071 = vmatpush.bf16.msra.mxu0 %v5305
    %6072 = vmatpush.bf16.msra.mxu0 %v5301
    %6073 = vmatmul.bf16.gmra.mxu0 %v4163
    %v6074 = vpop.f32.mrf.mxu0
    %v6075 = vadd.f32 %v6062, %v6074
    %v6076 = vpop.f32.mrf.mxu0
    %6077 = vdwg.mxu0
    %6078 = vmatpush.bf16.msra.mxu0 %v5361
    %6079 = vmatpush.bf16.msra.mxu0 %v5357
    %6080 = vmatpush.bf16.msra.mxu0 %v5353
    %6081 = vmatpush.bf16.msra.mxu0 %v5349
    %6082 = vmatpush.bf16.msra.mxu0 %v5345
    %6083 = vmatpush.bf16.msra.mxu0 %v5341
    %6084 = vmatpush.bf16.msra.mxu0 %v5337
    %6085 = vmatpush.bf16.msra.mxu0 %v5333
    %6086 = vmatmul.bf16.gmra.mxu0 %v4164
    %v6087 = vpop.f32.mrf.mxu0
    %v6088 = vadd.f32 %v6075, %v6087
    %v6089 = vpop.f32.mrf.mxu0
    %6090 = vdwg.mxu0
    %6091 = vmatpush.bf16.msra.mxu0 %v5393
    %6092 = vmatpush.bf16.msra.mxu0 %v5389
    %6093 = vmatpush.bf16.msra.mxu0 %v5385
    %6094 = vmatpush.bf16.msra.mxu0 %v5381
    %6095 = vmatpush.bf16.msra.mxu0 %v5377
    %6096 = vmatpush.bf16.msra.mxu0 %v5373
    %6097 = vmatpush.bf16.msra.mxu0 %v5369
    %6098 = vmatpush.bf16.msra.mxu0 %v5365
    %6099 = vmatmul.bf16.gmra.mxu0 %v4165
    %v6100 = vpop.f32.mrf.mxu0
    %v6101 = vadd.f32 %v6088, %v6100
    %v6102 = vpop.f32.mrf.mxu0
    %6103 = vdwg.mxu0
    %6104 = vmatpush.bf16.msra.mxu0 %v5425
    %6105 = vmatpush.bf16.msra.mxu0 %v5421
    %6106 = vmatpush.bf16.msra.mxu0 %v5417
    %6107 = vmatpush.bf16.msra.mxu0 %v5413
    %6108 = vmatpush.bf16.msra.mxu0 %v5409
    %6109 = vmatpush.bf16.msra.mxu0 %v5405
    %6110 = vmatpush.bf16.msra.mxu0 %v5401
    %6111 = vmatpush.bf16.msra.mxu0 %v5397
    %6112 = vmatmul.bf16.gmra.mxu0 %v4166
    %v6113 = vpop.f32.mrf.mxu0
    %v6114 = vadd.f32 %v6101, %v6113
    %v6115 = vpop.f32.mrf.mxu0
    %6116 = vdwg.mxu0
    %6117 = vmatpush.bf16.msra.mxu0 %v5457
    %6118 = vmatpush.bf16.msra.mxu0 %v5453
    %6119 = vmatpush.bf16.msra.mxu0 %v5449
    %6120 = vmatpush.bf16.msra.mxu0 %v5445
    %6121 = vmatpush.bf16.msra.mxu0 %v5441
    %6122 = vmatpush.bf16.msra.mxu0 %v5437
    %6123 = vmatpush.bf16.msra.mxu0 %v5433
    %6124 = vmatpush.bf16.msra.mxu0 %v5429
    %6125 = vmatmul.bf16.gmra.mxu0 %v4167
    %v6126 = vpop.f32.mrf.mxu0
    %v6127 = vadd.f32 %v6114, %v6126
    %v6128 = vpop.f32.mrf.mxu0
    %6129 = vdwg.mxu0
    %v6130 = vmax.f32 %v5815, 0.0
    %v6131 = vmax.f32 %v5919, 0.0
    %v6132 = vmax.f32 %v6023, 0.0
    %v6133 = vmax.f32 %v6127, 0.0
    %v6134 = vpack.c.bf16 %v6130, %v6130
    %v6135 = vpack.c.bf16 %v6131, %v6131
    %v6136 = vpack.c.bf16 %v6132, %v6132
    %v6137 = vpack.c.bf16 %v6133, %v6133
    %v6138 = vld [vmem:[#allocation11] sm:$0xff]
    %v6139 = vld [vmem:[#allocation11 + $0x8] sm:$0xff]
    %v6140 = vld [vmem:[#allocation11 + $0x10] sm:$0xff]
    %v6141 = vld [vmem:[#allocation11 + $0x18] sm:$0xff]
    %v6142 = vld [vmem:[#allocation11 + $0x20] sm:$0xff]
    %v6143 = vld [vmem:[#allocation11 + $0x28] sm:$0xff]
    %v6144 = vld [vmem:[#allocation11 + $0x30] sm:$0xff]
    %v6145 = vld [vmem:[#allocation11 + $0x38] sm:$0xff]
    %v6146 = vld [vmem:[#allocation11 + $0x40] sm:$0xff]
    %v6147 = vld [vmem:[#allocation11 + $0x48] sm:$0xff]
    %v6148 = vld [vmem:[#allocation11 + $0x50] sm:$0xff]
    %v6149 = vld [vmem:[#allocation11 + $0x58] sm:$0xff]
    %v6150 = vld [vmem:[#allocation11 + $0x60] sm:$0xff]
    %v6151 = vld [vmem:[#allocation11 + $0x68] sm:$0xff]
    %v6152 = vld [vmem:[#allocation11 + $0x70] sm:$0xff]
    %v6153 = vld [vmem:[#allocation11 + $0x78] sm:$0xff]
    %v6154 = vld [vmem:[#allocation11 + $0x80] sm:$0xff]
    %v6155 = vld [vmem:[#allocation11 + $0x88] sm:$0xff]
    %v6156 = vld [vmem:[#allocation11 + $0x90] sm:$0xff]
    %v6157 = vld [vmem:[#allocation11 + $0x98] sm:$0xff]
    %v6158 = vld [vmem:[#allocation11 + $0xa0] sm:$0xff]
    %v6159 = vld [vmem:[#allocation11 + $0xa8] sm:$0xff]
    %v6160 = vld [vmem:[#allocation11 + $0xb0] sm:$0xff]
    %v6161 = vld [vmem:[#allocation11 + $0xb8] sm:$0xff]
    %v6162 = vld [vmem:[#allocation11 + $0xc0] sm:$0xff]
    %v6163 = vld [vmem:[#allocation11 + $0xc8] sm:$0xff]
    %v6164 = vld [vmem:[#allocation11 + $0xd0] sm:$0xff]
    %v6165 = vld [vmem:[#allocation11 + $0xd8] sm:$0xff]
    %v6166 = vld [vmem:[#allocation11 + $0xe0] sm:$0xff]
    %v6167 = vld [vmem:[#allocation11 + $0xe8] sm:$0xff]
    %v6168 = vld [vmem:[#allocation11 + $0xf0] sm:$0xff]
    %v6169 = vld [vmem:[#allocation11 + $0xf8] sm:$0xff]
    %v6170 = vld [vmem:[#allocation11 + $0x100] sm:$0xff]
    %v6171 = vld [vmem:[#allocation11 + $0x108] sm:$0xff]
    %v6172 = vld [vmem:[#allocation11 + $0x110] sm:$0xff]
    %v6173 = vld [vmem:[#allocation11 + $0x118] sm:$0xff]
    %v6174 = vld [vmem:[#allocation11 + $0x120] sm:$0xff]
    %v6175 = vld [vmem:[#allocation11 + $0x128] sm:$0xff]
    %v6176 = vld [vmem:[#allocation11 + $0x130] sm:$0xff]
    %v6177 = vld [vmem:[#allocation11 + $0x138] sm:$0xff]
    %v6178 = vld [vmem:[#allocation11 + $0x140] sm:$0xff]
    %v6179 = vld [vmem:[#allocation11 + $0x148] sm:$0xff]
    %v6180 = vld [vmem:[#allocation11 + $0x150] sm:$0xff]
    %v6181 = vld [vmem:[#allocation11 + $0x158] sm:$0xff]
    %v6182 = vld [vmem:[#allocation11 + $0x160] sm:$0xff]
    %v6183 = vld [vmem:[#allocation11 + $0x168] sm:$0xff]
    %v6184 = vld [vmem:[#allocation11 + $0x170] sm:$0xff]
    %v6185 = vld [vmem:[#allocation11 + $0x178] sm:$0xff]
    %v6186 = vld [vmem:[#allocation11 + $0x180] sm:$0xff]
    %v6187 = vld [vmem:[#allocation11 + $0x188] sm:$0xff]
    %v6188 = vld [vmem:[#allocation11 + $0x190] sm:$0xff]
    %v6189 = vld [vmem:[#allocation11 + $0x198] sm:$0xff]
    %v6190 = vld [vmem:[#allocation11 + $0x1a0] sm:$0xff]
    %v6191 = vld [vmem:[#allocation11 + $0x1a8] sm:$0xff]
    %v6192 = vld [vmem:[#allocation11 + $0x1b0] sm:$0xff]
    %v6193 = vld [vmem:[#allocation11 + $0x1b8] sm:$0xff]
    %v6194 = vld [vmem:[#allocation11 + $0x1c0] sm:$0xff]
    %v6195 = vld [vmem:[#allocation11 + $0x1c8] sm:$0xff]
    %v6196 = vld [vmem:[#allocation11 + $0x1d0] sm:$0xff]
    %v6197 = vld [vmem:[#allocation11 + $0x1d8] sm:$0xff]
    %v6198 = vld [vmem:[#allocation11 + $0x1e0] sm:$0xff]
    %v6199 = vld [vmem:[#allocation11 + $0x1e8] sm:$0xff]
    %v6200 = vld [vmem:[#allocation11 + $0x1f0] sm:$0xff]
    %v6201 = vld [vmem:[#allocation11 + $0x1f8] sm:$0xff]
    %v6202 = vld [vmem:[#allocation13] sm:$0x3]
    %v6204 = vperm.slane %v6202, 0
    %v6205 = vperm.slane %v6202, 1
    %v6272 = vunpack.c.l.b16 %v6138
    %v6273 = vunpack.c.h.b16 %v6138
    %v6274 = vunpack.c.l.b16 %v6139
    %v6275 = vunpack.c.h.b16 %v6139
    %v6276 = vunpack.c.l.b16 %v6140
    %v6277 = vunpack.c.h.b16 %v6140
    %v6278 = vunpack.c.l.b16 %v6141
    %v6279 = vunpack.c.h.b16 %v6141
    %v6280 = vunpack.c.l.b16 %v6142
    %v6281 = vunpack.c.h.b16 %v6142
    %v6282 = vunpack.c.l.b16 %v6143
    %v6283 = vunpack.c.h.b16 %v6143
    %v6284 = vunpack.c.l.b16 %v6144
    %v6285 = vunpack.c.h.b16 %v6144
    %v6286 = vunpack.c.l.b16 %v6145
    %v6287 = vunpack.c.h.b16 %v6145
    %v6288 = vunpack.c.l.b16 %v6146
    %v6289 = vunpack.c.h.b16 %v6146
    %v6290 = vunpack.c.l.b16 %v6147
    %v6291 = vunpack.c.h.b16 %v6147
    %v6292 = vunpack.c.l.b16 %v6148
    %v6293 = vunpack.c.h.b16 %v6148
    %v6294 = vunpack.c.l.b16 %v6149
    %v6295 = vunpack.c.h.b16 %v6149
    %v6296 = vunpack.c.l.b16 %v6150
    %v6297 = vunpack.c.h.b16 %v6150
    %v6298 = vunpack.c.l.b16 %v6151
    %v6299 = vunpack.c.h.b16 %v6151
    %v6300 = vunpack.c.l.b16 %v6152
    %v6301 = vunpack.c.h.b16 %v6152
    %v6302 = vunpack.c.l.b16 %v6153
    %v6303 = vunpack.c.h.b16 %v6153
    %v6304 = vunpack.c.l.b16 %v6154
    %v6305 = vunpack.c.h.b16 %v6154
    %v6306 = vunpack.c.l.b16 %v6155
    %v6307 = vunpack.c.h.b16 %v6155
    %v6308 = vunpack.c.l.b16 %v6156
    %v6309 = vunpack.c.h.b16 %v6156
    %v6310 = vunpack.c.l.b16 %v6157
    %v6311 = vunpack.c.h.b16 %v6157
    %v6312 = vunpack.c.l.b16 %v6158
    %v6313 = vunpack.c.h.b16 %v6158
    %v6314 = vunpack.c.l.b16 %v6159
    %v6315 = vunpack.c.h.b16 %v6159
    %v6316 = vunpack.c.l.b16 %v6160
    %v6317 = vunpack.c.h.b16 %v6160
    %v6318 = vunpack.c.l.b16 %v6161
    %v6319 = vunpack.c.h.b16 %v6161
    %v6320 = vunpack.c.l.b16 %v6162
    %v6321 = vunpack.c.h.b16 %v6162
    %v6322 = vunpack.c.l.b16 %v6163
    %v6323 = vunpack.c.h.b16 %v6163
    %v6324 = vunpack.c.l.b16 %v6164
    %v6325 = vunpack.c.h.b16 %v6164
    %v6326 = vunpack.c.l.b16 %v6165
    %v6327 = vunpack.c.h.b16 %v6165
    %v6328 = vunpack.c.l.b16 %v6166
    %v6329 = vunpack.c.h.b16 %v6166
    %v6330 = vunpack.c.l.b16 %v6167
    %v6331 = vunpack.c.h.b16 %v6167
    %v6332 = vunpack.c.l.b16 %v6168
    %v6333 = vunpack.c.h.b16 %v6168
    %v6334 = vunpack.c.l.b16 %v6169
    %v6335 = vunpack.c.h.b16 %v6169
    %v6336 = vunpack.c.l.b16 %v6170
    %v6337 = vunpack.c.h.b16 %v6170
    %v6338 = vunpack.c.l.b16 %v6171
    %v6339 = vunpack.c.h.b16 %v6171
    %v6340 = vunpack.c.l.b16 %v6172
    %v6341 = vunpack.c.h.b16 %v6172
    %v6342 = vunpack.c.l.b16 %v6173
    %v6343 = vunpack.c.h.b16 %v6173
    %v6344 = vunpack.c.l.b16 %v6174
    %v6345 = vunpack.c.h.b16 %v6174
    %v6346 = vunpack.c.l.b16 %v6175
    %v6347 = vunpack.c.h.b16 %v6175
    %v6348 = vunpack.c.l.b16 %v6176
    %v6349 = vunpack.c.h.b16 %v6176
    %v6350 = vunpack.c.l.b16 %v6177
    %v6351 = vunpack.c.h.b16 %v6177
    %v6352 = vunpack.c.l.b16 %v6178
    %v6353 = vunpack.c.h.b16 %v6178
    %v6354 = vunpack.c.l.b16 %v6179
    %v6355 = vunpack.c.h.b16 %v6179
    %v6356 = vunpack.c.l.b16 %v6180
    %v6357 = vunpack.c.h.b16 %v6180
    %v6358 = vunpack.c.l.b16 %v6181
    %v6359 = vunpack.c.h.b16 %v6181
    %v6360 = vunpack.c.l.b16 %v6182
    %v6361 = vunpack.c.h.b16 %v6182
    %v6362 = vunpack.c.l.b16 %v6183
    %v6363 = vunpack.c.h.b16 %v6183
    %v6364 = vunpack.c.l.b16 %v6184
    %v6365 = vunpack.c.h.b16 %v6184
    %v6366 = vunpack.c.l.b16 %v6185
    %v6367 = vunpack.c.h.b16 %v6185
    %v6368 = vunpack.c.l.b16 %v6186
    %v6369 = vunpack.c.h.b16 %v6186
    %v6370 = vunpack.c.l.b16 %v6187
    %v6371 = vunpack.c.h.b16 %v6187
    %v6372 = vunpack.c.l.b16 %v6188
    %v6373 = vunpack.c.h.b16 %v6188
    %v6374 = vunpack.c.l.b16 %v6189
    %v6375 = vunpack.c.h.b16 %v6189
    %v6376 = vunpack.c.l.b16 %v6190
    %v6377 = vunpack.c.h.b16 %v6190
    %v6378 = vunpack.c.l.b16 %v6191
    %v6379 = vunpack.c.h.b16 %v6191
    %v6380 = vunpack.c.l.b16 %v6192
    %v6381 = vunpack.c.h.b16 %v6192
    %v6382 = vunpack.c.l.b16 %v6193
    %v6383 = vunpack.c.h.b16 %v6193
    %v6384 = vunpack.c.l.b16 %v6194
    %v6385 = vunpack.c.h.b16 %v6194
    %v6386 = vunpack.c.l.b16 %v6195
    %v6387 = vunpack.c.h.b16 %v6195
    %v6388 = vunpack.c.l.b16 %v6196
    %v6389 = vunpack.c.h.b16 %v6196
    %v6390 = vunpack.c.l.b16 %v6197
    %v6391 = vunpack.c.h.b16 %v6197
    %v6392 = vunpack.c.l.b16 %v6198
    %v6393 = vunpack.c.h.b16 %v6198
    %v6394 = vunpack.c.l.b16 %v6199
    %v6395 = vunpack.c.h.b16 %v6199
    %v6396 = vunpack.c.l.b16 %v6200
    %v6397 = vunpack.c.h.b16 %v6200
    %v6398 = vunpack.c.l.b16 %v6201
    %v6399 = vunpack.c.h.b16 %v6201
    %v6400 = vpack.c.b16 %v6274, %v6272
    %v6401 = vpack.c.b16 %v6275, %v6273
    %v6402 = vpack.c.b16 %v6278, %v6276
    %v6403 = vpack.c.b16 %v6279, %v6277
    %v6404 = vpack.c.b16 %v6282, %v6280
    %v6405 = vpack.c.b16 %v6283, %v6281
    %v6406 = vpack.c.b16 %v6286, %v6284
    %v6407 = vpack.c.b16 %v6287, %v6285
    %v6408 = vpack.c.b16 %v6290, %v6288
    %v6409 = vpack.c.b16 %v6291, %v6289
    %v6410 = vpack.c.b16 %v6294, %v6292
    %v6411 = vpack.c.b16 %v6295, %v6293
    %v6412 = vpack.c.b16 %v6298, %v6296
    %v6413 = vpack.c.b16 %v6299, %v6297
    %v6414 = vpack.c.b16 %v6302, %v6300
    %v6415 = vpack.c.b16 %v6303, %v6301
    %v6416 = vpack.c.b16 %v6306, %v6304
    %v6417 = vpack.c.b16 %v6307, %v6305
    %v6418 = vpack.c.b16 %v6310, %v6308
    %v6419 = vpack.c.b16 %v6311, %v6309
    %v6420 = vpack.c.b16 %v6314, %v6312
    %v6421 = vpack.c.b16 %v6315, %v6313
    %v6422 = vpack.c.b16 %v6318, %v6316
    %v6423 = vpack.c.b16 %v6319, %v6317
    %v6424 = vpack.c.b16 %v6322, %v6320
    %v6425 = vpack.c.b16 %v6323, %v6321
    %v6426 = vpack.c.b16 %v6326, %v6324
    %v6427 = vpack.c.b16 %v6327, %v6325
    %v6428 = vpack.c.b16 %v6330, %v6328
    %v6429 = vpack.c.b16 %v6331, %v6329
    %v6430 = vpack.c.b16 %v6334, %v6332
    %v6431 = vpack.c.b16 %v6335, %v6333
    %v6432 = vpack.c.b16 %v6338, %v6336
    %v6433 = vpack.c.b16 %v6339, %v6337
    %v6434 = vpack.c.b16 %v6342, %v6340
    %v6435 = vpack.c.b16 %v6343, %v6341
    %v6436 = vpack.c.b16 %v6346, %v6344
    %v6437 = vpack.c.b16 %v6347, %v6345
    %v6438 = vpack.c.b16 %v6350, %v6348
    %v6439 = vpack.c.b16 %v6351, %v6349
    %v6440 = vpack.c.b16 %v6354, %v6352
    %v6441 = vpack.c.b16 %v6355, %v6353
    %v6442 = vpack.c.b16 %v6358, %v6356
    %v6443 = vpack.c.b16 %v6359, %v6357
    %v6444 = vpack.c.b16 %v6362, %v6360
    %v6445 = vpack.c.b16 %v6363, %v6361
    %v6446 = vpack.c.b16 %v6366, %v6364
    %v6447 = vpack.c.b16 %v6367, %v6365
    %v6448 = vpack.c.b16 %v6370, %v6368
    %v6449 = vpack.c.b16 %v6371, %v6369
    %v6450 = vpack.c.b16 %v6374, %v6372
    %v6451 = vpack.c.b16 %v6375, %v6373
    %v6452 = vpack.c.b16 %v6378, %v6376
    %v6453 = vpack.c.b16 %v6379, %v6377
    %v6454 = vpack.c.b16 %v6382, %v6380
    %v6455 = vpack.c.b16 %v6383, %v6381
    %v6456 = vpack.c.b16 %v6386, %v6384
    %v6457 = vpack.c.b16 %v6387, %v6385
    %v6458 = vpack.c.b16 %v6390, %v6388
    %v6459 = vpack.c.b16 %v6391, %v6389
    %v6460 = vpack.c.b16 %v6394, %v6392
    %v6461 = vpack.c.b16 %v6395, %v6393
    %v6462 = vpack.c.b16 %v6398, %v6396
    %v6463 = vpack.c.b16 %v6399, %v6397
    %6528 = vmatpush.bf16.msra.mxu0 %v6414
    %6529 = vmatpush.bf16.msra.mxu0 %v6412
    %6530 = vmatpush.bf16.msra.mxu0 %v6410
    %6531 = vmatpush.bf16.msra.mxu0 %v6408
    %6532 = vmatpush.bf16.msra.mxu0 %v6406
    %6533 = vmatpush.bf16.msra.mxu0 %v6404
    %6534 = vmatpush.bf16.msra.mxu0 %v6402
    %6535 = vmatpush.bf16.msra.mxu0 %v6400
    %6536 = vmatmul.bf16.gmra.mxu0 %v6134
    %v6537 = vpop.f32.mrf.mxu0
    %v6538 = vadd.f32 %v6204, %v6537
    %v6539 = vpop.f32.mrf.mxu0
    %6540 = vdwg.mxu0
    %6541 = vmatpush.bf16.msra.mxu0 %v6430
    %6542 = vmatpush.bf16.msra.mxu0 %v6428
    %6543 = vmatpush.bf16.msra.mxu0 %v6426
    %6544 = vmatpush.bf16.msra.mxu0 %v6424
    %6545 = vmatpush.bf16.msra.mxu0 %v6422
    %6546 = vmatpush.bf16.msra.mxu0 %v6420
    %6547 = vmatpush.bf16.msra.mxu0 %v6418
    %6548 = vmatpush.bf16.msra.mxu0 %v6416
    %6549 = vmatmul.bf16.gmra.mxu0 %v6135
    %v6550 = vpop.f32.mrf.mxu0
    %v6551 = vadd.f32 %v6538, %v6550
    %v6552 = vpop.f32.mrf.mxu0
    %6553 = vdwg.mxu0
    %6554 = vmatpush.bf16.msra.mxu0 %v6446
    %6555 = vmatpush.bf16.msra.mxu0 %v6444
    %6556 = vmatpush.bf16.msra.mxu0 %v6442
    %6557 = vmatpush.bf16.msra.mxu0 %v6440
    %6558 = vmatpush.bf16.msra.mxu0 %v6438
    %6559 = vmatpush.bf16.msra.mxu0 %v6436
    %6560 = vmatpush.bf16.msra.mxu0 %v6434
    %6561 = vmatpush.bf16.msra.mxu0 %v6432
    %6562 = vmatmul.bf16.gmra.mxu0 %v6136
    %v6563 = vpop.f32.mrf.mxu0
    %v6564 = vadd.f32 %v6551, %v6563
    %v6565 = vpop.f32.mrf.mxu0
    %6566 = vdwg.mxu0
    %6567 = vmatpush.bf16.msra.mxu0 %v6462
    %6568 = vmatpush.bf16.msra.mxu0 %v6460
    %6569 = vmatpush.bf16.msra.mxu0 %v6458
    %6570 = vmatpush.bf16.msra.mxu0 %v6456
    %6571 = vmatpush.bf16.msra.mxu0 %v6454
    %6572 = vmatpush.bf16.msra.mxu0 %v6452
    %6573 = vmatpush.bf16.msra.mxu0 %v6450
    %6574 = vmatpush.bf16.msra.mxu0 %v6448
    %6575 = vmatmul.bf16.gmra.mxu0 %v6137
    %v6576 = vpop.f32.mrf.mxu0
    %v6577 = vadd.f32 %v6564, %v6576
    %v6578 = vpop.f32.mrf.mxu0
    %6579 = vdwg.mxu0
    %6580 = vmatpush.bf16.msra.mxu0 %v6415
    %6581 = vmatpush.bf16.msra.mxu0 %v6413
    %6582 = vmatpush.bf16.msra.mxu0 %v6411
    %6583 = vmatpush.bf16.msra.mxu0 %v6409
    %6584 = vmatpush.bf16.msra.mxu0 %v6407
    %6585 = vmatpush.bf16.msra.mxu0 %v6405
    %6586 = vmatpush.bf16.msra.mxu0 %v6403
    %6587 = vmatpush.bf16.msra.mxu0 %v6401
    %6588 = vmatmul.bf16.gmra.mxu0 %v6134
    %v6589 = vpop.f32.mrf.mxu0
    %v6590 = vadd.f32 %v6205, %v6589
    %v6591 = vpop.f32.mrf.mxu0
    %6592 = vdwg.mxu0
    %6593 = vmatpush.bf16.msra.mxu0 %v6431
    %6594 = vmatpush.bf16.msra.mxu0 %v6429
    %6595 = vmatpush.bf16.msra.mxu0 %v6427
    %6596 = vmatpush.bf16.msra.mxu0 %v6425
    %6597 = vmatpush.bf16.msra.mxu0 %v6423
    %6598 = vmatpush.bf16.msra.mxu0 %v6421
    %6599 = vmatpush.bf16.msra.mxu0 %v6419
    %6600 = vmatpush.bf16.msra.mxu0 %v6417
    %6601 = vmatmul.bf16.gmra.mxu0 %v6135
    %v6602 = vpop.f32.mrf.mxu0
    %v6603 = vadd.f32 %v6590, %v6602
    %v6604 = vpop.f32.mrf.mxu0
    %6605 = vdwg.mxu0
    %6606 = vmatpush.bf16.msra.mxu0 %v6447
    %6607 = vmatpush.bf16.msra.mxu0 %v6445
    %6608 = vmatpush.bf16.msra.mxu0 %v6443
    %6609 = vmatpush.bf16.msra.mxu0 %v6441
    %6610 = vmatpush.bf16.msra.mxu0 %v6439
    %6611 = vmatpush.bf16.msra.mxu0 %v6437
    %6612 = vmatpush.bf16.msra.mxu0 %v6435
    %6613 = vmatpush.bf16.msra.mxu0 %v6433
    %6614 = vmatmul.bf16.gmra.mxu0 %v6136
    %v6615 = vpop.f32.mrf.mxu0
    %v6616 = vadd.f32 %v6603, %v6615
    %v6617 = vpop.f32.mrf.mxu0
    %6618 = vdwg.mxu0
    %6619 = vmatpush.bf16.msra.mxu0 %v6463
    %6620 = vmatpush.bf16.msra.mxu0 %v6461
    %6621 = vmatpush.bf16.msra.mxu0 %v6459
    %6622 = vmatpush.bf16.msra.mxu0 %v6457
    %6623 = vmatpush.bf16.msra.mxu0 %v6455
    %6624 = vmatpush.bf16.msra.mxu0 %v6453
    %6625 = vmatpush.bf16.msra.mxu0 %v6451
    %6626 = vmatpush.bf16.msra.mxu0 %v6449
    %6627 = vmatmul.bf16.gmra.mxu0 %v6137
    %v6628 = vpop.f32.mrf.mxu0
    %v6629 = vadd.f32 %v6616, %v6628
    %v6630 = vpop.f32.mrf.mxu0
    %6631 = vdwg.mxu0
    %v6632 = vmax.f32 %v6577, 0.0
    %v6633 = vmax.f32 %v6629, 0.0
    %v6634 = vpack.c.bf16 %v6632, %v6632
    %v6635 = vpack.c.bf16 %v6633, %v6633
    %v6636 = vld [vmem:[#allocation14] sm:$0xff]
    %v6637 = vld [vmem:[#allocation14 + $0x8] sm:$0xff]
    %v6638 = vld [vmem:[#allocation14 + $0x10] sm:$0xff]
    %v6639 = vld [vmem:[#allocation14 + $0x18] sm:$0xff]
    %v6640 = vld [vmem:[#allocation14 + $0x20] sm:$0xff]
    %v6641 = vld [vmem:[#allocation14 + $0x28] sm:$0xff]
    %v6642 = vld [vmem:[#allocation14 + $0x30] sm:$0xff]
    %v6643 = vld [vmem:[#allocation14 + $0x38] sm:$0xff]
    %v6644 = vld [vmem:[#allocation14 + $0x40] sm:$0xff]
    %v6645 = vld [vmem:[#allocation14 + $0x48] sm:$0xff]
    %v6646 = vld [vmem:[#allocation14 + $0x50] sm:$0xff]
    %v6647 = vld [vmem:[#allocation14 + $0x58] sm:$0xff]
    %v6648 = vld [vmem:[#allocation14 + $0x60] sm:$0xff]
    %v6649 = vld [vmem:[#allocation14 + $0x68] sm:$0xff]
    %v6650 = vld [vmem:[#allocation14 + $0x70] sm:$0xff]
    %v6651 = vld [vmem:[#allocation14 + $0x78] sm:$0xff]
    %v6652 = vld [vmem:[#allocation14 + $0x80] sm:$0xff]
    %v6653 = vld [vmem:[#allocation14 + $0x88] sm:$0xff]
    %v6654 = vld [vmem:[#allocation14 + $0x90] sm:$0xff]
    %v6655 = vld [vmem:[#allocation14 + $0x98] sm:$0xff]
    %v6656 = vld [vmem:[#allocation14 + $0xa0] sm:$0xff]
    %v6657 = vld [vmem:[#allocation14 + $0xa8] sm:$0xff]
    %v6658 = vld [vmem:[#allocation14 + $0xb0] sm:$0xff]
    %v6659 = vld [vmem:[#allocation14 + $0xb8] sm:$0xff]
    %v6660 = vld [vmem:[#allocation14 + $0xc0] sm:$0xff]
    %v6661 = vld [vmem:[#allocation14 + $0xc8] sm:$0xff]
    %v6662 = vld [vmem:[#allocation14 + $0xd0] sm:$0xff]
    %v6663 = vld [vmem:[#allocation14 + $0xd8] sm:$0xff]
    %v6664 = vld [vmem:[#allocation14 + $0xe0] sm:$0xff]
    %v6665 = vld [vmem:[#allocation14 + $0xe8] sm:$0xff]
    %v6666 = vld [vmem:[#allocation14 + $0xf0] sm:$0xff]
    %v6667 = vld [vmem:[#allocation14 + $0xf8] sm:$0xff]
    %v6668 = vld [vmem:[#allocation16] sm:$0x3]
    %v6670 = vperm.slane %v6668, 0
    %v6671 = vperm.slane %v6668, 1
    %v6706 = vunpack.c.l.b16 %v6636
    %v6707 = vunpack.c.h.b16 %v6636
    %v6708 = vunpack.c.l.b16 %v6637
    %v6709 = vunpack.c.h.b16 %v6637
    %v6710 = vunpack.c.l.b16 %v6638
    %v6711 = vunpack.c.h.b16 %v6638
    %v6712 = vunpack.c.l.b16 %v6639
    %v6713 = vunpack.c.h.b16 %v6639
    %v6714 = vunpack.c.l.b16 %v6640
    %v6715 = vunpack.c.h.b16 %v6640
    %v6716 = vunpack.c.l.b16 %v6641
    %v6717 = vunpack.c.h.b16 %v6641
    %v6718 = vunpack.c.l.b16 %v6642
    %v6719 = vunpack.c.h.b16 %v6642
    %v6720 = vunpack.c.l.b16 %v6643
    %v6721 = vunpack.c.h.b16 %v6643
    %v6722 = vunpack.c.l.b16 %v6644
    %v6723 = vunpack.c.h.b16 %v6644
    %v6724 = vunpack.c.l.b16 %v6645
    %v6725 = vunpack.c.h.b16 %v6645
    %v6726 = vunpack.c.l.b16 %v6646
    %v6727 = vunpack.c.h.b16 %v6646
    %v6728 = vunpack.c.l.b16 %v6647
    %v6729 = vunpack.c.h.b16 %v6647
    %v6730 = vunpack.c.l.b16 %v6648
    %v6731 = vunpack.c.h.b16 %v6648
    %v6732 = vunpack.c.l.b16 %v6649
    %v6733 = vunpack.c.h.b16 %v6649
    %v6734 = vunpack.c.l.b16 %v6650
    %v6735 = vunpack.c.h.b16 %v6650
    %v6736 = vunpack.c.l.b16 %v6651
    %v6737 = vunpack.c.h.b16 %v6651
    %v6738 = vunpack.c.l.b16 %v6652
    %v6739 = vunpack.c.h.b16 %v6652
    %v6740 = vunpack.c.l.b16 %v6653
    %v6741 = vunpack.c.h.b16 %v6653
    %v6742 = vunpack.c.l.b16 %v6654
    %v6743 = vunpack.c.h.b16 %v6654
    %v6744 = vunpack.c.l.b16 %v6655
    %v6745 = vunpack.c.h.b16 %v6655
    %v6746 = vunpack.c.l.b16 %v6656
    %v6747 = vunpack.c.h.b16 %v6656
    %v6748 = vunpack.c.l.b16 %v6657
    %v6749 = vunpack.c.h.b16 %v6657
    %v6750 = vunpack.c.l.b16 %v6658
    %v6751 = vunpack.c.h.b16 %v6658
    %v6752 = vunpack.c.l.b16 %v6659
    %v6753 = vunpack.c.h.b16 %v6659
    %v6754 = vunpack.c.l.b16 %v6660
    %v6755 = vunpack.c.h.b16 %v6660
    %v6756 = vunpack.c.l.b16 %v6661
    %v6757 = vunpack.c.h.b16 %v6661
    %v6758 = vunpack.c.l.b16 %v6662
    %v6759 = vunpack.c.h.b16 %v6662
    %v6760 = vunpack.c.l.b16 %v6663
    %v6761 = vunpack.c.h.b16 %v6663
    %v6762 = vunpack.c.l.b16 %v6664
    %v6763 = vunpack.c.h.b16 %v6664
    %v6764 = vunpack.c.l.b16 %v6665
    %v6765 = vunpack.c.h.b16 %v6665
    %v6766 = vunpack.c.l.b16 %v6666
    %v6767 = vunpack.c.h.b16 %v6666
    %v6768 = vunpack.c.l.b16 %v6667
    %v6769 = vunpack.c.h.b16 %v6667
    %v6770 = vpack.c.b16 %v6708, %v6706
    %v6771 = vpack.c.b16 %v6709, %v6707
    %v6772 = vpack.c.b16 %v6712, %v6710
    %v6773 = vpack.c.b16 %v6713, %v6711
    %v6774 = vpack.c.b16 %v6716, %v6714
    %v6775 = vpack.c.b16 %v6717, %v6715
    %v6776 = vpack.c.b16 %v6720, %v6718
    %v6777 = vpack.c.b16 %v6721, %v6719
    %v6778 = vpack.c.b16 %v6724, %v6722
    %v6779 = vpack.c.b16 %v6725, %v6723
    %v6780 = vpack.c.b16 %v6728, %v6726
    %v6781 = vpack.c.b16 %v6729, %v6727
    %v6782 = vpack.c.b16 %v6732, %v6730
    %v6783 = vpack.c.b16 %v6733, %v6731
    %v6784 = vpack.c.b16 %v6736, %v6734
    %v6785 = vpack.c.b16 %v6737, %v6735
    %v6786 = vpack.c.b16 %v6740, %v6738
    %v6787 = vpack.c.b16 %v6741, %v6739
    %v6788 = vpack.c.b16 %v6744, %v6742
    %v6789 = vpack.c.b16 %v6745, %v6743
    %v6790 = vpack.c.b16 %v6748, %v6746
    %v6791 = vpack.c.b16 %v6749, %v6747
    %v6792 = vpack.c.b16 %v6752, %v6750
    %v6793 = vpack.c.b16 %v6753, %v6751
    %v6794 = vpack.c.b16 %v6756, %v6754
    %v6795 = vpack.c.b16 %v6757, %v6755
    %v6796 = vpack.c.b16 %v6760, %v6758
    %v6797 = vpack.c.b16 %v6761, %v6759
    %v6798 = vpack.c.b16 %v6764, %v6762
    %v6799 = vpack.c.b16 %v6765, %v6763
    %v6800 = vpack.c.b16 %v6768, %v6766
    %v6801 = vpack.c.b16 %v6769, %v6767
    %6834 = vmatpush.bf16.msra.mxu0 %v6784
    %6835 = vmatpush.bf16.msra.mxu0 %v6782
    %6836 = vmatpush.bf16.msra.mxu0 %v6780
    %6837 = vmatpush.bf16.msra.mxu0 %v6778
    %6838 = vmatpush.bf16.msra.mxu0 %v6776
    %6839 = vmatpush.bf16.msra.mxu0 %v6774
    %6840 = vmatpush.bf16.msra.mxu0 %v6772
    %6841 = vmatpush.bf16.msra.mxu0 %v6770
    %6842 = vmatmul.bf16.gmra.mxu0 %v6634
    %v6843 = vpop.f32.mrf.mxu0
    %v6844 = vadd.f32 %v6670, %v6843
    %v6845 = vpop.f32.mrf.mxu0
    %6846 = vdwg.mxu0
    %6847 = vmatpush.bf16.msra.mxu0 %v6800
    %6848 = vmatpush.bf16.msra.mxu0 %v6798
    %6849 = vmatpush.bf16.msra.mxu0 %v6796
    %6850 = vmatpush.bf16.msra.mxu0 %v6794
    %6851 = vmatpush.bf16.msra.mxu0 %v6792
    %6852 = vmatpush.bf16.msra.mxu0 %v6790
    %6853 = vmatpush.bf16.msra.mxu0 %v6788
    %6854 = vmatpush.bf16.msra.mxu0 %v6786
    %6855 = vmatmul.bf16.gmra.mxu0 %v6635
    %v6856 = vpop.f32.mrf.mxu0
    %v6857 = vadd.f32 %v6844, %v6856
    %v6858 = vpop.f32.mrf.mxu0
    %6859 = vdwg.mxu0
    %6860 = vmatpush.bf16.msra.mxu0 %v6785
    %6861 = vmatpush.bf16.msra.mxu0 %v6783
    %6862 = vmatpush.bf16.msra.mxu0 %v6781
    %6863 = vmatpush.bf16.msra.mxu0 %v6779
    %6864 = vmatpush.bf16.msra.mxu0 %v6777
    %6865 = vmatpush.bf16.msra.mxu0 %v6775
    %6866 = vmatpush.bf16.msra.mxu0 %v6773
    %6867 = vmatpush.bf16.msra.mxu0 %v6771
    %6868 = vmatmul.bf16.gmra.mxu0 %v6634
    %v6869 = vpop.f32.mrf.mxu0
    %v6870 = vadd.f32 %v6671, %v6869
    %v6871 = vpop.f32.mrf.mxu0
    %6872 = vdwg.mxu0
    %6873 = vmatpush.bf16.msra.mxu0 %v6801
    %6874 = vmatpush.bf16.msra.mxu0 %v6799
    %6875 = vmatpush.bf16.msra.mxu0 %v6797
    %6876 = vmatpush.bf16.msra.mxu0 %v6795
    %6877 = vmatpush.bf16.msra.mxu0 %v6793
    %6878 = vmatpush.bf16.msra.mxu0 %v6791
    %6879 = vmatpush.bf16.msra.mxu0 %v6789
    %6880 = vmatpush.bf16.msra.mxu0 %v6787
    %6881 = vmatmul.bf16.gmra.mxu0 %v6635
    %v6882 = vpop.f32.mrf.mxu0
    %v6883 = vadd.f32 %v6870, %v6882
    %v6884 = vpop.f32.mrf.mxu0
    %6885 = vdwg.mxu0
    %v6886 = vmax.f32 %v6857, 0.0
    %v6887 = vmax.f32 %v6883, 0.0
    %v6888 = vpack.c.bf16 %v6886, %v6886
    %v6889 = vpack.c.bf16 %v6887, %v6887
    %v6890 = vld [vmem:[#allocation17] sm:$0xf]
    %v6891 = vld [vmem:[#allocation17 + $0x4] sm:$0xf]
    %v6892 = vld [vmem:[#allocation17 + $0x8] sm:$0xf]
    %v6893 = vld [vmem:[#allocation17 + $0xc] sm:$0xf]
    %v6894 = vld [vmem:[#allocation17 + $0x10] sm:$0xf]
    %v6895 = vld [vmem:[#allocation17 + $0x14] sm:$0xf]
    %v6896 = vld [vmem:[#allocation17 + $0x18] sm:$0xf]
    %v6897 = vld [vmem:[#allocation17 + $0x1c] sm:$0xf]
    %v6898 = vld [vmem:[#allocation17 + $0x20] sm:$0xf]
    %v6899 = vld [vmem:[#allocation17 + $0x24] sm:$0xf]
    %v6900 = vld [vmem:[#allocation17 + $0x28] sm:$0xf]
    %v6901 = vld [vmem:[#allocation17 + $0x2c] sm:$0xf]
    %v6902 = vld [vmem:[#allocation17 + $0x30] sm:$0xf]
    %v6903 = vld [vmem:[#allocation17 + $0x34] sm:$0xf]
    %v6904 = vld [vmem:[#allocation17 + $0x38] sm:$0xf]
    %v6905 = vld [vmem:[#allocation17 + $0x3c] sm:$0xf]
    %v6906 = vld [vmem:[#allocation17 + $0x40] sm:$0xf]
    %v6907 = vld [vmem:[#allocation17 + $0x44] sm:$0xf]
    %v6908 = vld [vmem:[#allocation17 + $0x48] sm:$0xf]
    %v6909 = vld [vmem:[#allocation17 + $0x4c] sm:$0xf]
    %v6910 = vld [vmem:[#allocation17 + $0x50] sm:$0xf]
    %v6911 = vld [vmem:[#allocation17 + $0x54] sm:$0xf]
    %v6912 = vld [vmem:[#allocation17 + $0x58] sm:$0xf]
    %v6913 = vld [vmem:[#allocation17 + $0x5c] sm:$0xf]
    %v6914 = vld [vmem:[#allocation17 + $0x60] sm:$0xf]
    %v6915 = vld [vmem:[#allocation17 + $0x64] sm:$0xf]
    %v6916 = vld [vmem:[#allocation17 + $0x68] sm:$0xf]
    %v6917 = vld [vmem:[#allocation17 + $0x6c] sm:$0xf]
    %v6918 = vld [vmem:[#allocation17 + $0x70] sm:$0xf]
    %v6919 = vld [vmem:[#allocation17 + $0x74] sm:$0xf]
    %v6920 = vld [vmem:[#allocation17 + $0x78] sm:$0xf]
    %v6921 = vld [vmem:[#allocation17 + $0x7c] sm:$0xf]
    %v6922 = vld [vmem:[#allocation19] sm:$0x1]
    %v6924 = vperm.slane %v6922, 0
    %v6958 = vunpack.c.l.b16 %v6890
    %v6959 = vunpack.c.l.b16 %v6891
    %v6960 = vunpack.c.l.b16 %v6892
    %v6961 = vunpack.c.l.b16 %v6893
    %v6962 = vunpack.c.l.b16 %v6894
    %v6963 = vunpack.c.l.b16 %v6895
    %v6964 = vunpack.c.l.b16 %v6896
    %v6965 = vunpack.c.l.b16 %v6897
    %v6966 = vunpack.c.l.b16 %v6898
    %v6967 = vunpack.c.l.b16 %v6899
    %v6968 = vunpack.c.l.b16 %v6900
    %v6969 = vunpack.c.l.b16 %v6901
    %v6970 = vunpack.c.l.b16 %v6902
    %v6971 = vunpack.c.l.b16 %v6903
    %v6972 = vunpack.c.l.b16 %v6904
    %v6973 = vunpack.c.l.b16 %v6905
    %v6974 = vunpack.c.l.b16 %v6906
    %v6975 = vunpack.c.l.b16 %v6907
    %v6976 = vunpack.c.l.b16 %v6908
    %v6977 = vunpack.c.l.b16 %v6909
    %v6978 = vunpack.c.l.b16 %v6910
    %v6979 = vunpack.c.l.b16 %v6911
    %v6980 = vunpack.c.l.b16 %v6912
    %v6981 = vunpack.c.l.b16 %v6913
    %v6982 = vunpack.c.l.b16 %v6914
    %v6983 = vunpack.c.l.b16 %v6915
    %v6984 = vunpack.c.l.b16 %v6916
    %v6985 = vunpack.c.l.b16 %v6917
    %v6986 = vunpack.c.l.b16 %v6918
    %v6987 = vunpack.c.l.b16 %v6919
    %v6988 = vunpack.c.l.b16 %v6920
    %v6989 = vunpack.c.l.b16 %v6921
    %v6990 = vpack.c.b16 %v6959, %v6958
    %v6991 = vpack.c.b16 %v6961, %v6960
    %v6992 = vpack.c.b16 %v6963, %v6962
    %v6993 = vpack.c.b16 %v6965, %v6964
    %v6994 = vpack.c.b16 %v6967, %v6966
    %v6995 = vpack.c.b16 %v6969, %v6968
    %v6996 = vpack.c.b16 %v6971, %v6970
    %v6997 = vpack.c.b16 %v6973, %v6972
    %v6998 = vpack.c.b16 %v6975, %v6974
    %v6999 = vpack.c.b16 %v6977, %v6976
    %v7000 = vpack.c.b16 %v6979, %v6978
    %v7001 = vpack.c.b16 %v6981, %v6980
    %v7002 = vpack.c.b16 %v6983, %v6982
    %v7003 = vpack.c.b16 %v6985, %v6984
    %v7004 = vpack.c.b16 %v6987, %v6986
    %v7005 = vpack.c.b16 %v6989, %v6988
    %7022 = vmatpush.bf16.msra.mxu0 %v6997
    %7023 = vmatpush.bf16.msra.mxu0 %v6996
    %7024 = vmatpush.bf16.msra.mxu0 %v6995
    %7025 = vmatpush.bf16.msra.mxu0 %v6994
    %7026 = vmatpush.bf16.msra.mxu0 %v6993
    %7027 = vmatpush.bf16.msra.mxu0 %v6992
    %7028 = vmatpush.bf16.msra.mxu0 %v6991
    %7029 = vmatpush.bf16.msra.mxu0 %v6990
    %7030 = vmatmul.bf16.gmra.mxu0 %v6888
    %v7031 = vpop.f32.mrf.mxu0
    %v7032 = vadd.f32 %v6924, %v7031
    %v7033 = vpop.f32.mrf.mxu0
    %7034 = vdwg.mxu0
    %7035 = vmatpush.bf16.msra.mxu0 %v7005
    %7036 = vmatpush.bf16.msra.mxu0 %v7004
    %7037 = vmatpush.bf16.msra.mxu0 %v7003
    %7038 = vmatpush.bf16.msra.mxu0 %v7002
    %7039 = vmatpush.bf16.msra.mxu0 %v7001
    %7040 = vmatpush.bf16.msra.mxu0 %v7000
    %7041 = vmatpush.bf16.msra.mxu0 %v6999
    %7042 = vmatpush.bf16.msra.mxu0 %v6998
    %7043 = vmatmul.bf16.gmra.mxu0 %v6889
    %v7044 = vpop.f32.mrf.mxu0
    %v7045 = vadd.f32 %v7032, %v7044
    %v7046 = vpop.f32.mrf.mxu0
    %7047 = vdwg.mxu0
    %7048 = vmax.xlane.f32.xlu0 %v7045
    %v7049 = vpop.xlane.xlu0 %7048
    %v7050 = vsub.f32 %v7045, %v7049
    %v7051 = vmul.f32 %v7050, 1.442695
    %v7052 = vpow.pop %v7051
    %7053 = vadd.xlane.f32.xlu0 %v7052
    %v7054 = vpop.xlane.xlu0 %7053
    %v7055 = vrcp.pop %v7054
    %v7056 = vmul.f32 %v7052, %v7055
    %7057 = vst [vmem:[#allocation20] sm:$0xff] %v7056
    // Predicated region
    $region90: #{tpu_custom_call.1} parent=1 // pred_check
      _
    $region91: #{tpu_custom_call.1} parent=1 // pred_check_branch
      %7059 = sbr.rel (0) target = $region93
    $region92: #{tpu_custom_call.1} parent=1 // pred_region
      %7061 = vsyncadd [#allocation4], 0
      %s7063 = sshll.u32 [#allocation20], 4
      %s7064 = int_to_ptr.vmem [resolvable:$true] %s7063
      %s7065 = sshll.u32 %s11, 4
      %s7066 = int_to_ptr.hbm [resolvable:$true] %s7065
      %7068 = dma.vmem_to_hbm [thread:$0]  %s7064, 128, %s7066, [#allocation4]
    $region93: #{tpu_custom_call.1} parent=1 // pred_fallthru
      _
    // Predicated region
    $region94: #{tpu_custom_call.1} parent=1 // pred_check
      _
    $region95: #{tpu_custom_call.1} parent=1 // pred_check_branch
      %7070 = sbr.rel (0) target = $region97
    $region96: #{tpu_custom_call.1} parent=1 // pred_region
      %7072 = dma.done [#allocation4], 128
    $region97: #{tpu_custom_call.1} parent=1 // pred_fallthru
      _
    %7073 = vsyncpa [#allocation3], 1
    %7074 = vsyncpa [#allocation6], 1
    %7075 = vsyncpa [#allocation9], 1
    %7076 = vsyncpa [#allocation12], 1
    %7077 = vsyncpa [#allocation15], 1
    %7078 = vsyncpa [#allocation18], 1
    %7079 = vsyncpa [#allocation4], 1

</llo_original>
